<compile_context>
chip_gen: v7x
topology: tpu7x:2x2x1
jax: 0.10.0
libtpu: 0.0.40
codegen_flags: <defaults>
</compile_context>

<pallas_src>
import jax
import jax.numpy as jnp
from jax.experimental import pallas as pl
from jax.experimental.pallas import tpu as pltpu


# ----------------------------------------------------------------------------
# Tiling helpers
# ----------------------------------------------------------------------------
def _round_up(x, m):
    return (x + m - 1) // m * m


def _m_tiles(M, block_m, min_blocks=2):
    """Pick an M tile (multiple of 8) and padded M extent (multiple of the tile).

    Prefers a tile that divides the 8-padded extent exactly (no dead rows), and
    caps the tile so reasonably sized problems expose at least `min_blocks`
    grid steps (DMA/compute pipelining, v7x megacore sharding).
    """
    M8 = _round_up(max(M, 1), 8)
    cap = max(8, block_m - block_m % 8)
    if M8 >= 128 * min_blocks:
        cap = min(cap, _round_up(-(-M8 // min_blocks), 8))
    if M8 <= cap:
        return M8, M8
    for tm in range(cap, 63, -8):          # exact divisor: no padded rows
        if M8 % tm == 0:
            return tm, M8
    return cap, _round_up(M8, cap)         # fallback: small tail padding only


# ----------------------------------------------------------------------------
# Pallas kernels
# ----------------------------------------------------------------------------
def _conv_relu_pool_kernel(x_ref, w_ref, b_ref, o_ref):
    """Fused conv(im2col) + 2x2 max-pool + bias + ReLU, lane-dense output.

    x_ref: (4, tg, Kg)  im2col patches; axis 0 = the 4 taps of each 2x2 pool
                        window; each row packs `group` consecutive pooled
                        positions (Kg = group * 9 * Cin).
    w_ref: (Kg, Ng)     block-diagonal conv weights (Ng = group * Cout = 128).
    b_ref: (1, Ng)      conv bias tiled `group` times (f32).
    o_ref: (tg, Ng)     pooled + activated rows (lane-dense, 128-wide stores).
    """
    taps, tg, kg = x_ref.shape
    n = w_ref.shape[1]
    # One long-M MXU stream over all 4 pooling taps (f32 accumulation).
    x = x_ref[...].reshape(taps * tg, kg)
    acc = jnp.dot(x, w_ref[...], preferred_element_type=jnp.float32)
    # 2x2 max-pool = max over taps; bias + ReLU once afterwards (both commute
    # with the max since the bias is tap-independent and ReLU is monotone).
    pooled = jnp.max(acc.reshape(taps, tg, n), axis=0)
    o_ref[...] = jnp.maximum(pooled + b_ref[...], 0.0).astype(o_ref.dtype)


def _mlp_head_kernel(x_ref, w1_ref, b1_ref, w2_ref, b2_ref, o_ref):
    """Fused fc1 + ReLU + fc2: the hidden activation never leaves VMEM."""
    h = jnp.dot(x_ref[...], w1_ref[...], preferred_element_type=jnp.float32)
    h = jnp.maximum(h + b1_ref[...], 0.0)
    logits = jnp.dot(h.astype(w2_ref.dtype), w2_ref[...],
                     preferred_element_type=jnp.float32)
    o_ref[...] = (logits + b2_ref[...]).astype(o_ref.dtype)


# ----------------------------------------------------------------------------
# Pallas wrappers
# ----------------------------------------------------------------------------
def _im2col_pool_taps(x_nhwc):
    """3x3 / pad-1 im2col with rows grouped by 2x2 pooling tap.

    Returns (4, B*(H//2)*(W//2), 9*C):
      axis 0: pooling tap t = py*2 + px (position inside the 2x2 window)
      axis 1: pooled output position, (b, i, j) row-major
      axis 2: patch features in (ky, kx, cin) order (matches the weight K order)
    Built once per conv stage as XLA glue, in bf16 (half the HBM bytes).
    """
    B, H, W, C = x_nhwc.shape
    xp = jnp.pad(x_nhwc, ((0, 0), (1, 1), (1, 1), (0, 0)))
    cols = [xp[:, ky:ky + H, kx:kx + W, :] for ky in range(3) for kx in range(3)]
    p = jnp.stack(cols, axis=3)                        # (B, H, W, 9, C)
    p = p.reshape(B, H // 2, 2, W // 2, 2, 9 * C)      # split row/col parity
    p = p.transpose(2, 4, 0, 1, 3, 5)                  # (py, px, B, H/2, W/2, 9C)
    return p.reshape(4, B * (H // 2) * (W // 2), 9 * C)


def conv3x3_relu_pool(x_nhwc, w_blk, b_row, *, block_m=512):
    """Fused 3x3 conv (stride 1, pad 1) + bias + ReLU + 2x2/stride-2 max pool.

    w_blk / b_row come from prepare_params(): block-diagonal (group*9*Cin,
    group*Cout) weights and `group`-tiled bias, where group = 128 // Cout, so
    the kernel's output rows are lane-dense (last dim == 128).
    """
    B, H, W, Cin = x_nhwc.shape
    Ho, Wo = H // 2, W // 2
    M = B * Ho * Wo                                    # pooled output positions
    Kg, Ng = w_blk.shape
    K = 9 * Cin
    group = Kg // K
    Cout = Ng // group

    Mg = pl.cdiv(M, group)                             # grouped output rows
    tg, Mgp = _m_tiles(Mg, block_m)
    Mp = Mgp * group

    patches = _im2col_pool_taps(x_nhwc)                # (4, M, K)
    if Mp != M:
        patches = jnp.pad(patches, ((0, 0), (0, Mp - M), (0, 0)))
    # Pack `group` consecutive pooled positions per row (pure reshape).
    patches = patches.reshape(4, Mgp, group * K)

    out = pl.pallas_call(
        _conv_relu_pool_kernel,
        out_shape=jax.ShapeDtypeStruct((Mgp, Ng), x_nhwc.dtype),
        grid=(Mgp // tg,),
        in_specs=[
            pl.BlockSpec((4, tg, group * K), lambda i: (0, i, 0)),  # patches: M-tiled
            pl.BlockSpec((Kg, Ng), lambda i: (0, 0)),               # weights: resident
            pl.BlockSpec((1, Ng), lambda i: (0, 0)),                # bias: resident
        ],
        out_specs=pl.BlockSpec((tg, Ng), lambda i: (i, 0)),
        compiler_params=pltpu.CompilerParams(
            dimension_semantics=("parallel",)),
    )(patches, w_blk, b_row)

    # Un-group: pure reshape back to (pooled position, channel) row-major.
    out = out.reshape(Mp, Cout)
    if Mp != M:
        out = out[:M]
    return out.reshape(B, Ho, Wo, Cout)


def mlp_head(x, w1, b1, w2, b2, *, block_m=256):
    """Fused fc1 + ReLU + fc2 in one pallas_call; only the logits hit HBM.

    block_m=256 keeps the (tm, 3136) activation tile + resident weights well
    under v5e's 16 MiB default scoped VMEM even at large batch.
    """
    M, K1 = x.shape
    N1 = w1.shape[1]
    N2 = w2.shape[1]
    tm, Mp = _m_tiles(M, block_m)
    if Mp != M:
        x = jnp.pad(x, ((0, Mp - M), (0, 0)))

    out = pl.pallas_call(
        _mlp_head_kernel,
        out_shape=jax.ShapeDtypeStruct((Mp, N2), jnp.float32),
        grid=(Mp // tm,),
        in_specs=[
            pl.BlockSpec((tm, K1), lambda i: (i, 0)),   # activations: M-tiled
            pl.BlockSpec((K1, N1), lambda i: (0, 0)),   # fc1 weights: resident
            pl.BlockSpec((1, N1), lambda i: (0, 0)),
            pl.BlockSpec((N1, N2), lambda i: (0, 0)),   # fc2 weights: resident
            pl.BlockSpec((1, N2), lambda i: (0, 0)),
        ],
        out_specs=pl.BlockSpec((tm, N2), lambda i: (i, 0)),
        compiler_params=pltpu.CompilerParams(
            dimension_semantics=("parallel",)),
    )(x, w1, b1, w2, b2)
    return out[:M] if Mp != M else out


# ----------------------------------------------------------------------------
# Parameters (PyTorch layout) + one-time layout/dtype prep for the kernels
# ----------------------------------------------------------------------------
def init_params(key):
    ks = jax.random.split(key, 8)
    s = 0.05
    return {
        "conv1_w": s * jax.random.normal(ks[0], (32, 1, 3, 3), jnp.float32),
        "conv1_b": s * jax.random.normal(ks[1], (32,), jnp.float32),
        "conv2_w": s * jax.random.normal(ks[2], (64, 32, 3, 3), jnp.float32),
        "conv2_b": s * jax.random.normal(ks[3], (64,), jnp.float32),
        "fc1_w": s * jax.random.normal(ks[4], (128, 64 * 7 * 7), jnp.float32),
        "fc1_b": s * jax.random.normal(ks[5], (128,), jnp.float32),
        "fc2_w": s * jax.random.normal(ks[6], (10, 128), jnp.float32),
        "fc2_b": s * jax.random.normal(ks[7], (10,), jnp.float32),
    }


def prepare_params(params, compute_dtype=jnp.bfloat16):
    """One-time (outside jit) weight layout / dtype preparation.

    * Conv weights -> block-diagonal (group*9*Cin, group*Cout) matrices with
      `group`-tiled biases so the conv kernels produce lane-dense (128-wide)
      output rows directly from the MXU.
    * fc1's K axis is permuted from PyTorch's (c, h, w) flatten order to the
      NHWC (h, w, c) order the conv stages produce, then transposed to (K, N).
    * MXU operands are stored in `compute_dtype` (bf16 by default: ~2x MXU
      throughput and half the weight/activation traffic on v6e/v7x); biases
      stay f32 and every kernel accumulates / applies the epilogue in f32.
    """
    def conv_pack(w_oihw, b):
        cout, cin, kh, kw = w_oihw.shape
        w = (jnp.asarray(w_oihw, jnp.float32)
             .transpose(2, 3, 1, 0)                        # (ky, kx, cin, cout)
             .reshape(kh * kw * cin, cout))                # K ordered (ky, kx, cin)
        group = 128 // cout if (cout < 128 and 128 % cout == 0) else 1
        k = w.shape[0]
        blk = jnp.zeros((group * k, group * cout), jnp.float32)
        for g in range(group):
            blk = blk.at[g * k:(g + 1) * k, g * cout:(g + 1) * cout].set(w)
        b_t = jnp.tile(jnp.asarray(b, jnp.float32).reshape(1, cout), (1, group))
        return blk.astype(compute_dtype), b_t

    conv1_w, conv1_b = conv_pack(params["conv1_w"], params["conv1_b"])
    conv2_w, conv2_b = conv_pack(params["conv2_w"], params["conv2_b"])

    # fc1_w is (128, 64*7*7) with K in PyTorch's (c, h, w) flatten order.
    # Permute K to (h, w, c) so the NHWC-flattened conv activations feed it
    # directly (no per-call activation transpose), then transpose to (K, N).
    fc1_w = jnp.asarray(params["fc1_w"], jnp.float32)
    fc1_w = fc1_w.reshape(128, 64, 7, 7).transpose(0, 2, 3, 1).reshape(128, -1)

    return {
        "conv1_w": conv1_w, "conv1_b": conv1_b,
        "conv2_w": conv2_w, "conv2_b": conv2_b,
        "fc1_w": fc1_w.T.astype(compute_dtype),                               # (3136, 128)
        "fc1_b": jnp.asarray(params["fc1_b"], jnp.float32).reshape(1, -1),
        "fc2_w": jnp.asarray(params["fc2_w"], jnp.float32).T.astype(compute_dtype),  # (128, 10)
        "fc2_b": jnp.asarray(params["fc2_b"], jnp.float32).reshape(1, -1),
    }


# ----------------------------------------------------------------------------
# Full forward pass (mirrors CNN.forward)
# ----------------------------------------------------------------------------
def cnn_forward(x_nchw, p):
    B = x_nchw.shape[0]
    dt = p["conv1_w"].dtype
    x = jnp.transpose(x_nchw, (0, 2, 3, 1)).astype(dt)        # NCHW->NHWC (Cin=1: free)

    y = conv3x3_relu_pool(x, p["conv1_w"], p["conv1_b"])       # (B, 14, 14, 32)
    y = conv3x3_relu_pool(y, p["conv2_w"], p["conv2_b"])       # (B, 7, 7, 64)

    # NHWC flatten; fc1's K was permuted at prep time to match this order,
    # so it is exactly x.view(-1, 64*7*7) of the PyTorch module.
    flat = y.reshape(B, 7 * 7 * 64)
    return mlp_head(flat, p["fc1_w"], p["fc1_b"], p["fc2_w"], p["fc2_b"])  # (B, 10)


# ----------------------------------------------------------------------------
# Pure-JAX f32 reference (PyTorch semantics) for a sanity check
# ----------------------------------------------------------------------------
def _cnn_reference(x_nchw, params):
    x = jnp.asarray(x_nchw, jnp.float32)

    def conv_relu_pool(x, w, b):
        y = jax.lax.conv_general_dilated(
            x, jnp.asarray(w, jnp.float32), (1, 1), ((1, 1), (1, 1)),
            dimension_numbers=("NCHW", "OIHW", "NCHW"))
        y = jax.nn.relu(y + jnp.asarray(b, jnp.float32)[None, :, None, None])
        B, C, H, W = y.shape
        return y.reshape(B, C, H // 2, 2, W // 2, 2).max(axis=(3, 5))

    x = conv_relu_pool(x, params["conv1_w"], params["conv1_b"])
    x = conv_relu_pool(x, params["conv2_w"], params["conv2_b"])
    x = x.reshape(x.shape[0], -1)                                # (c, h, w) flatten
    x = jax.nn.relu(x @ params["fc1_w"].T + params["fc1_b"])
    return x @ params["fc2_w"].T + params["fc2_b"]


if __name__ == "__main__":
    key = jax.random.PRNGKey(0)
    pkey, xkey = jax.random.split(key)
    params = init_params(pkey)
    prepped = prepare_params(params)   # one-time weight layout/dtype prep, outside jit

    # fc1 expects 64*7*7 features, which pins the input spatial size to 28x28.
    x = jax.random.normal(xkey, (4, 1, 28, 28), jnp.float32)

    fwd = jax.jit(cnn_forward)
    logits = fwd(x, prepped)
    jax.block_until_ready(logits)

    assert logits.shape == (4, 10), logits.shape
    assert logits.dtype == jnp.float32
    assert bool(jnp.all(jnp.isfinite(logits)))

    # Sanity check vs. the f32 reference (kernels use bf16 MXU operands with
    # f32 accumulation, so allow a small drift; structural bugs would be O(0.1)).
    ref = _cnn_reference(x, params)
    err = float(jnp.max(jnp.abs(logits - ref)))
    assert err < 5e-2, f"max |logits - reference| = {err}"

    print("KERNEL_OK")
</pallas_src>

<mosaic_0001>
module attributes {stable_mosaic.version = 11 : i64} {
  func.func @_conv_relu_pool_kernel(%arg0: i32, %arg1: memref<4x200x36xbf16, #tpu.memory_space<vmem>>, %arg2: memref<36x128xbf16, #tpu.memory_space<vmem>>, %arg3: memref<1x128xf32, #tpu.memory_space<vmem>>, %arg4: memref<200x128xbf16, #tpu.memory_space<vmem>>) attributes {dimension_semantics = [#tpu.dimension_semantics<parallel>], iteration_bounds = array<i64: 1>, scalar_prefetch = 0 : i64, scratch_operands = 0 : i64, tpu.core_type = #tpu.core_type<tc>, window_params = [{transform_indices = @transform_0, window_bounds = array<i64: 4, 200, 36>}, {pipeline_mode = #tpu.pipeline_mode<synchronous>, transform_indices = @transform_1, window_bounds = array<i64: 36, 128>}, {pipeline_mode = #tpu.pipeline_mode<synchronous>, transform_indices = @transform_2, window_bounds = array<i64: 1, 128>}, {transform_indices = @transform_3, window_bounds = array<i64: 200, 128>}]} {
    %c0 = arith.constant 0 : index
    %c0_0 = arith.constant 0 : index
    %c0_1 = arith.constant 0 : index
    %0 = vector.load %arg1[%c0, %c0_0, %c0_1] : memref<4x200x36xbf16, #tpu.memory_space<vmem>>, vector<4x200x36xbf16>
    %1 = vector.shape_cast %0 : vector<4x200x36xbf16> to vector<800x36xbf16>
    %c0_2 = arith.constant 0 : index
    %c0_3 = arith.constant 0 : index
    %2 = vector.load %arg2[%c0_2, %c0_3] : memref<36x128xbf16, #tpu.memory_space<vmem>>, vector<36x128xbf16>
    %cst = arith.constant dense<0.000000e+00> : vector<800x128xf32>
    %3 = tpu.matmul %1, %2, %cst {dimension_numbers = #tpu.dot_dimension_numbers<[1], [0], [0], [1], [0, 0, 1, 1], [], []>} : vector<800x36xbf16>, vector<36x128xbf16>, vector<800x128xf32> -> vector<800x128xf32>
    %4 = vector.shape_cast %3 : vector<800x128xf32> to vector<4x200x128xf32>
    %cst_4 = arith.constant dense<0xFF800000> : vector<200x128xf32>
    %5 = vector.multi_reduction <maximumf>, %4, %cst_4 [0] : vector<4x200x128xf32> to vector<200x128xf32>
    %c0_5 = arith.constant 0 : index
    %c0_6 = arith.constant 0 : index
    %6 = vector.load %arg3[%c0_5, %c0_6] : memref<1x128xf32, #tpu.memory_space<vmem>>, vector<1x128xf32>
    %7 = vector.broadcast %6 : vector<1x128xf32> to vector<200x128xf32>
    %8 = arith.addf %5, %7 : vector<200x128xf32>
    %cst_7 = arith.constant 0.000000e+00 : f32
    %9 = vector.broadcast %cst_7 : f32 to vector<200x128xf32>
    %10 = arith.maximumf %8, %9 : vector<200x128xf32>
    %11 = arith.truncf %10 : vector<200x128xf32> to vector<200x128xbf16>
    %c0_8 = arith.constant 0 : index
    %c0_9 = arith.constant 0 : index
    %12 = vector.load %arg4[%c0_8, %c0_9] : memref<200x128xbf16, #tpu.memory_space<vmem>>, vector<200x128xbf16>
    tpu.vector_store %arg4[%c0_8, %c0_9], %11 {strides = array<i32>} : memref<200x128xbf16, #tpu.memory_space<vmem>>, vector<200x128xbf16>,
    return
  }
  func.func @transform_0(%arg0: i32) -> (i32, i32, i32) {
    %c0_i32 = arith.constant 0 : i32
    %c0_i32_0 = arith.constant 0 : i32
    %c0_i32_1 = arith.constant 0 : i32
    return %c0_i32, %arg0, %c0_i32_0 : i32, i32, i32
  }
  func.func @transform_1(%arg0: i32) -> (i32, i32) {
    %c0_i32 = arith.constant 0 : i32
    %c0_i32_0 = arith.constant 0 : i32
    %c0_i32_1 = arith.constant 0 : i32
    return %c0_i32, %c0_i32_0 : i32, i32
  }
  func.func @transform_2(%arg0: i32) -> (i32, i32) {
    %c0_i32 = arith.constant 0 : i32
    %c0_i32_0 = arith.constant 0 : i32
    %c0_i32_1 = arith.constant 0 : i32
    return %c0_i32, %c0_i32_0 : i32, i32
  }
  func.func @transform_3(%arg0: i32) -> (i32, i32) {
    %c0_i32 = arith.constant 0 : i32
    %c0_i32_0 = arith.constant 0 : i32
    return %arg0, %c0_i32 : i32, i32
  }
}

module attributes {stable_mosaic.version = 11 : i64} {
  func.func @_conv_relu_pool_kernel(%arg0: i32, %arg1: memref<4x104x576xbf16, #tpu.memory_space<vmem>>, %arg2: memref<576x128xbf16, #tpu.memory_space<vmem>>, %arg3: memref<1x128xf32, #tpu.memory_space<vmem>>, %arg4: memref<104x128xbf16, #tpu.memory_space<vmem>>) attributes {dimension_semantics = [#tpu.dimension_semantics<parallel>], iteration_bounds = array<i64: 1>, scalar_prefetch = 0 : i64, scratch_operands = 0 : i64, tpu.core_type = #tpu.core_type<tc>, window_params = [{transform_indices = @transform_0, window_bounds = array<i64: 4, 104, 576>}, {pipeline_mode = #tpu.pipeline_mode<synchronous>, transform_indices = @transform_1, window_bounds = array<i64: 576, 128>}, {pipeline_mode = #tpu.pipeline_mode<synchronous>, transform_indices = @transform_2, window_bounds = array<i64: 1, 128>}, {transform_indices = @transform_3, window_bounds = array<i64: 104, 128>}]} {
    %c0 = arith.constant 0 : index
    %c0_0 = arith.constant 0 : index
    %c0_1 = arith.constant 0 : index
    %0 = vector.load %arg1[%c0, %c0_0, %c0_1] : memref<4x104x576xbf16, #tpu.memory_space<vmem>>, vector<4x104x576xbf16>
    %1 = vector.shape_cast %0 : vector<4x104x576xbf16> to vector<416x576xbf16>
    %c0_2 = arith.constant 0 : index
    %c0_3 = arith.constant 0 : index
    %2 = vector.load %arg2[%c0_2, %c0_3] : memref<576x128xbf16, #tpu.memory_space<vmem>>, vector<576x128xbf16>
    %cst = arith.constant dense<0.000000e+00> : vector<416x128xf32>
    %3 = tpu.matmul %1, %2, %cst {dimension_numbers = #tpu.dot_dimension_numbers<[1], [0], [0], [1], [0, 0, 1, 1], [], []>} : vector<416x576xbf16>, vector<576x128xbf16>, vector<416x128xf32> -> vector<416x128xf32>
    %4 = vector.shape_cast %3 : vector<416x128xf32> to vector<4x104x128xf32>
    %cst_4 = arith.constant dense<0xFF800000> : vector<104x128xf32>
    %5 = vector.multi_reduction <maximumf>, %4, %cst_4 [0] : vector<4x104x128xf32> to vector<104x128xf32>
    %c0_5 = arith.constant 0 : index
    %c0_6 = arith.constant 0 : index
    %6 = vector.load %arg3[%c0_5, %c0_6] : memref<1x128xf32, #tpu.memory_space<vmem>>, vector<1x128xf32>
    %7 = vector.broadcast %6 : vector<1x128xf32> to vector<104x128xf32>
    %8 = arith.addf %5, %7 : vector<104x128xf32>
    %cst_7 = arith.constant 0.000000e+00 : f32
    %9 = vector.broadcast %cst_7 : f32 to vector<104x128xf32>
    %10 = arith.maximumf %8, %9 : vector<104x128xf32>
    %11 = arith.truncf %10 : vector<104x128xf32> to vector<104x128xbf16>
    %c0_8 = arith.constant 0 : index
    %c0_9 = arith.constant 0 : index
    %12 = vector.load %arg4[%c0_8, %c0_9] : memref<104x128xbf16, #tpu.memory_space<vmem>>, vector<104x128xbf16>
    tpu.vector_store %arg4[%c0_8, %c0_9], %11 {strides = array<i32>} : memref<104x128xbf16, #tpu.memory_space<vmem>>, vector<104x128xbf16>,
    return
  }
  func.func @transform_0(%arg0: i32) -> (i32, i32, i32) {
    %c0_i32 = arith.constant 0 : i32
    %c0_i32_0 = arith.constant 0 : i32
    %c0_i32_1 = arith.constant 0 : i32
    return %c0_i32, %arg0, %c0_i32_0 : i32, i32, i32
  }
  func.func @transform_1(%arg0: i32) -> (i32, i32) {
    %c0_i32 = arith.constant 0 : i32
    %c0_i32_0 = arith.constant 0 : i32
    %c0_i32_1 = arith.constant 0 : i32
    return %c0_i32, %c0_i32_0 : i32, i32
  }
  func.func @transform_2(%arg0: i32) -> (i32, i32) {
    %c0_i32 = arith.constant 0 : i32
    %c0_i32_0 = arith.constant 0 : i32
    %c0_i32_1 = arith.constant 0 : i32
    return %c0_i32, %c0_i32_0 : i32, i32
  }
  func.func @transform_3(%arg0: i32) -> (i32, i32) {
    %c0_i32 = arith.constant 0 : i32
    %c0_i32_0 = arith.constant 0 : i32
    return %arg0, %c0_i32 : i32, i32
  }
}

module attributes {stable_mosaic.version = 11 : i64} {
  func.func @_mlp_head_kernel(%arg0: i32, %arg1: memref<8x3136xbf16, #tpu.memory_space<vmem>>, %arg2: memref<3136x128xbf16, #tpu.memory_space<vmem>>, %arg3: memref<1x128xf32, #tpu.memory_space<vmem>>, %arg4: memref<128x10xbf16, #tpu.memory_space<vmem>>, %arg5: memref<1x10xf32, #tpu.memory_space<vmem>>, %arg6: memref<8x10xf32, #tpu.memory_space<vmem>>) attributes {dimension_semantics = [#tpu.dimension_semantics<parallel>], iteration_bounds = array<i64: 1>, scalar_prefetch = 0 : i64, scratch_operands = 0 : i64, tpu.core_type = #tpu.core_type<tc>, window_params = [{transform_indices = @transform_0, window_bounds = array<i64: 8, 3136>}, {pipeline_mode = #tpu.pipeline_mode<synchronous>, transform_indices = @transform_1, window_bounds = array<i64: 3136, 128>}, {pipeline_mode = #tpu.pipeline_mode<synchronous>, transform_indices = @transform_2, window_bounds = array<i64: 1, 128>}, {pipeline_mode = #tpu.pipeline_mode<synchronous>, transform_indices = @transform_3, window_bounds = array<i64: 128, 10>}, {pipeline_mode = #tpu.pipeline_mode<synchronous>, transform_indices = @transform_4, window_bounds = array<i64: 1, 10>}, {transform_indices = @transform_5, window_bounds = array<i64: 8, 10>}]} {
    %c0 = arith.constant 0 : index
    %c0_0 = arith.constant 0 : index
    %0 = vector.load %arg1[%c0, %c0_0] : memref<8x3136xbf16, #tpu.memory_space<vmem>>, vector<8x3136xbf16>
    %c0_1 = arith.constant 0 : index
    %c0_2 = arith.constant 0 : index
    %1 = vector.load %arg2[%c0_1, %c0_2] : memref<3136x128xbf16, #tpu.memory_space<vmem>>, vector<3136x128xbf16>
    %cst = arith.constant dense<0.000000e+00> : vector<8x128xf32>
    %2 = tpu.matmul %0, %1, %cst {dimension_numbers = #tpu.dot_dimension_numbers<[1], [0], [0], [1], [0, 0, 1, 1], [], []>} : vector<8x3136xbf16>, vector<3136x128xbf16>, vector<8x128xf32> -> vector<8x128xf32>
    %c0_3 = arith.constant 0 : index
    %c0_4 = arith.constant 0 : index
    %3 = vector.load %arg3[%c0_3, %c0_4] : memref<1x128xf32, #tpu.memory_space<vmem>>, vector<1x128xf32>
    %4 = vector.broadcast %3 : vector<1x128xf32> to vector<8x128xf32>
    %5 = arith.addf %2, %4 : vector<8x128xf32>
    %cst_5 = arith.constant 0.000000e+00 : f32
    %6 = vector.broadcast %cst_5 : f32 to vector<8x128xf32>
    %7 = arith.maximumf %5, %6 : vector<8x128xf32>
    %8 = arith.truncf %7 : vector<8x128xf32> to vector<8x128xbf16>
    %c0_6 = arith.constant 0 : index
    %c0_7 = arith.constant 0 : index
    %9 = vector.load %arg4[%c0_6, %c0_7] : memref<128x10xbf16, #tpu.memory_space<vmem>>, vector<128x10xbf16>
    %cst_8 = arith.constant dense<0.000000e+00> : vector<8x10xf32>
    %10 = tpu.matmul %8, %9, %cst_8 {dimension_numbers = #tpu.dot_dimension_numbers<[1], [0], [0], [1], [0, 0, 1, 1], [], []>} : vector<8x128xbf16>, vector<128x10xbf16>, vector<8x10xf32> -> vector<8x10xf32>
    %c0_9 = arith.constant 0 : index
    %c0_10 = arith.constant 0 : index
    %11 = vector.load %arg5[%c0_9, %c0_10] : memref<1x10xf32, #tpu.memory_space<vmem>>, vector<1x10xf32>
    %12 = vector.broadcast %11 : vector<1x10xf32> to vector<8x10xf32>
    %13 = arith.addf %10, %12 : vector<8x10xf32>
    %c0_11 = arith.constant 0 : index
    %c0_12 = arith.constant 0 : index
    %14 = vector.load %arg6[%c0_11, %c0_12] : memref<8x10xf32, #tpu.memory_space<vmem>>, vector<8x10xf32>
    tpu.vector_store %arg6[%c0_11, %c0_12], %13 {strides = array<i32>} : memref<8x10xf32, #tpu.memory_space<vmem>>, vector<8x10xf32>,
    return
  }
  func.func @transform_0(%arg0: i32) -> (i32, i32) {
    %c0_i32 = arith.constant 0 : i32
    %c0_i32_0 = arith.constant 0 : i32
    return %arg0, %c0_i32 : i32, i32
  }
  func.func @transform_1(%arg0: i32) -> (i32, i32) {
    %c0_i32 = arith.constant 0 : i32
    %c0_i32_0 = arith.constant 0 : i32
    %c0_i32_1 = arith.constant 0 : i32
    return %c0_i32, %c0_i32_0 : i32, i32
  }
  func.func @transform_2(%arg0: i32) -> (i32, i32) {
    %c0_i32 = arith.constant 0 : i32
    %c0_i32_0 = arith.constant 0 : i32
    %c0_i32_1 = arith.constant 0 : i32
    return %c0_i32, %c0_i32_0 : i32, i32
  }
  func.func @transform_3(%arg0: i32) -> (i32, i32) {
    %c0_i32 = arith.constant 0 : i32
    %c0_i32_0 = arith.constant 0 : i32
    %c0_i32_1 = arith.constant 0 : i32
    return %c0_i32, %c0_i32_0 : i32, i32
  }
  func.func @transform_4(%arg0: i32) -> (i32, i32) {
    %c0_i32 = arith.constant 0 : i32
    %c0_i32_0 = arith.constant 0 : i32
    %c0_i32_1 = arith.constant 0 : i32
    return %c0_i32, %c0_i32_0 : i32, i32
  }
  func.func @transform_5(%arg0: i32) -> (i32, i32) {
    %c0_i32 = arith.constant 0 : i32
    %c0_i32_0 = arith.constant 0 : i32
    return %arg0, %c0_i32 : i32, i32
  }
}

</mosaic_0001>

<llo_original>
// kernel: cnn_forward.3
$region0: #{cnn_forward.3}
  #allocation0 [shape = 'u32[]', space=smem, size = 0x4, offset = 0x4, fixed_abs, tag = 'smem constant byte address 0x4 - core index']
  #allocation1 [shape = 'u32[144,128]{1,0:T(1,128)}', space=vmem, size = 0x12000, scoped, tag = 'internal scratch']
  %s0 = inlined_call_operand.vmem [shape: bf16[4,200,36], index: 0, kind: input, shape index: {}]
  %s1 = inlined_call_operand.vmem [shape: bf16[36,128], index: 1, kind: input, shape index: {}]
  %s2 = inlined_call_operand.vmem [shape: f32[1,128], index: 2, kind: input, shape index: {}]
  %s3 = inlined_call_operand.vmem [shape: bf16[200,128], index: 3, kind: output, shape index: {}]
  %s4 = sld [smem:[#allocation0]]
  $region22: #{cnn_forward.3} parent=0
    _
  %s6 = ssub.s32 1, %s4
  %s7 = scalar_select 0, %s6, %s4
  // Predicated region
  $region2: #{cnn_forward.3} parent=0 // pred_check
    _
  $region3: #{cnn_forward.3} parent=0 // pred_check_branch
    %9 = sbr.rel (0) target = $region5
  $region4: #{cnn_forward.3} parent=0 // pred_region
    _
  $region5: #{cnn_forward.3} parent=0 // pred_fallthru
    _
  // Predicated region
  $region6: #{cnn_forward.3} parent=0 // pred_check
    _
  $region7: #{cnn_forward.3} parent=0 // pred_check_branch
    %11 = sbr.rel (0) target = $region9
  $region8: #{cnn_forward.3} parent=0 // pred_region
    _
  $region9: #{cnn_forward.3} parent=0 // pred_fallthru
    _
  // Predicated region
  $region10: #{cnn_forward.3} parent=0 // pred_check
    _
  $region11: #{cnn_forward.3} parent=0 // pred_check_branch
    %13 = sbr.rel (0) target = $region13
  $region12: #{cnn_forward.3} parent=0 // pred_region
    _
  $region13: #{cnn_forward.3} parent=0 // pred_fallthru
    _
  %v15 = vld [vmem:[%s0] sm:$0xf]
  %v16 = vld [vmem:[%s0 + $0x4] sm:$0xf]
  %v17 = vld [vmem:[%s0 + $0x8] sm:$0xf]
  %v18 = vld [vmem:[%s0 + $0xc] sm:$0xf]
  %v19 = vld [vmem:[%s0 + $0x10] sm:$0xf]
  %v20 = vld [vmem:[%s0 + $0x14] sm:$0xf]
  %v21 = vld [vmem:[%s0 + $0x18] sm:$0xf]
  %v22 = vld [vmem:[%s0 + $0x1c] sm:$0xf]
  %v23 = vld [vmem:[%s0 + $0x20] sm:$0xf]
  %v24 = vld [vmem:[%s0 + $0x24] sm:$0xf]
  %v25 = vld [vmem:[%s0 + $0x28] sm:$0xf]
  %v26 = vld [vmem:[%s0 + $0x2c] sm:$0xf]
  %v27 = vld [vmem:[%s0 + $0x30] sm:$0xf]
  %v28 = vld [vmem:[%s0 + $0x34] sm:$0xf]
  %v29 = vld [vmem:[%s0 + $0x38] sm:$0xf]
  %v30 = vld [vmem:[%s0 + $0x3c] sm:$0xf]
  %v31 = vld [vmem:[%s0 + $0x40] sm:$0xf]
  %v32 = vld [vmem:[%s0 + $0x44] sm:$0xf]
  %v33 = vld [vmem:[%s0 + $0x48] sm:$0xf]
  %v34 = vld [vmem:[%s0 + $0x4c] sm:$0xf]
  %v35 = vld [vmem:[%s0 + $0x50] sm:$0xf]
  %v36 = vld [vmem:[%s0 + $0x54] sm:$0xf]
  %v37 = vld [vmem:[%s0 + $0x58] sm:$0xf]
  %v38 = vld [vmem:[%s0 + $0x5c] sm:$0xf]
  %v39 = vld [vmem:[%s0 + $0x60] sm:$0xf]
  %v40 = vld [vmem:[%s0 + $0x64] sm:$0xf]
  %v41 = vld [vmem:[%s0 + $0x68] sm:$0xf]
  %v42 = vld [vmem:[%s0 + $0x6c] sm:$0xf]
  %v43 = vld [vmem:[%s0 + $0x70] sm:$0xf]
  %v44 = vld [vmem:[%s0 + $0x74] sm:$0xf]
  %v45 = vld [vmem:[%s0 + $0x78] sm:$0xf]
  %v46 = vld [vmem:[%s0 + $0x7c] sm:$0xf]
  %v47 = vld [vmem:[%s0 + $0x80] sm:$0xf]
  %v48 = vld [vmem:[%s0 + $0x84] sm:$0xf]
  %v49 = vld [vmem:[%s0 + $0x88] sm:$0xf]
  %v50 = vld [vmem:[%s0 + $0x8c] sm:$0xf]
  %v51 = vld [vmem:[%s0 + $0x90] sm:$0xf]
  %v52 = vld [vmem:[%s0 + $0x94] sm:$0xf]
  %v53 = vld [vmem:[%s0 + $0x98] sm:$0xf]
  %v54 = vld [vmem:[%s0 + $0x9c] sm:$0xf]
  %v55 = vld [vmem:[%s0 + $0xa0] sm:$0xf]
  %v56 = vld [vmem:[%s0 + $0xa4] sm:$0xf]
  %v57 = vld [vmem:[%s0 + $0xa8] sm:$0xf]
  %v58 = vld [vmem:[%s0 + $0xac] sm:$0xf]
  %v59 = vld [vmem:[%s0 + $0xb0] sm:$0xf]
  %v60 = vld [vmem:[%s0 + $0xb4] sm:$0xf]
  %v61 = vld [vmem:[%s0 + $0xb8] sm:$0xf]
  %v62 = vld [vmem:[%s0 + $0xbc] sm:$0xf]
  %v63 = vld [vmem:[%s0 + $0xc0] sm:$0xf]
  %v64 = vld [vmem:[%s0 + $0xc4] sm:$0xf]
  %v65 = vld [vmem:[%s0 + $0xc8] sm:$0xf]
  %v66 = vld [vmem:[%s0 + $0xcc] sm:$0xf]
  %v67 = vld [vmem:[%s0 + $0xd0] sm:$0xf]
  %v68 = vld [vmem:[%s0 + $0xd4] sm:$0xf]
  %v69 = vld [vmem:[%s0 + $0xd8] sm:$0xf]
  %v70 = vld [vmem:[%s0 + $0xdc] sm:$0xf]
  %v71 = vld [vmem:[%s0 + $0xe0] sm:$0xf]
  %v72 = vld [vmem:[%s0 + $0xe4] sm:$0xf]
  %v73 = vld [vmem:[%s0 + $0xe8] sm:$0xf]
  %v74 = vld [vmem:[%s0 + $0xec] sm:$0xf]
  %v75 = vld [vmem:[%s0 + $0xf0] sm:$0xf]
  %v76 = vld [vmem:[%s0 + $0xf4] sm:$0xf]
  %v77 = vld [vmem:[%s0 + $0xf8] sm:$0xf]
  %v78 = vld [vmem:[%s0 + $0xfc] sm:$0xf]
  %v79 = vld [vmem:[%s0 + $0x100] sm:$0xf]
  %v80 = vld [vmem:[%s0 + $0x104] sm:$0xf]
  %v81 = vld [vmem:[%s0 + $0x108] sm:$0xf]
  %v82 = vld [vmem:[%s0 + $0x10c] sm:$0xf]
  %v83 = vld [vmem:[%s0 + $0x110] sm:$0xf]
  %v84 = vld [vmem:[%s0 + $0x114] sm:$0xf]
  %v85 = vld [vmem:[%s0 + $0x118] sm:$0xf]
  %v86 = vld [vmem:[%s0 + $0x11c] sm:$0xf]
  %v87 = vld [vmem:[%s0 + $0x120] sm:$0xf]
  %v88 = vld [vmem:[%s0 + $0x124] sm:$0xf]
  %v89 = vld [vmem:[%s0 + $0x128] sm:$0xf]
  %v90 = vld [vmem:[%s0 + $0x12c] sm:$0xf]
  %v91 = vld [vmem:[%s0 + $0x130] sm:$0xf]
  %v92 = vld [vmem:[%s0 + $0x134] sm:$0xf]
  %v93 = vld [vmem:[%s0 + $0x138] sm:$0xf]
  %v94 = vld [vmem:[%s0 + $0x13c] sm:$0xf]
  %v95 = vld [vmem:[%s0 + $0x140] sm:$0xf]
  %v96 = vld [vmem:[%s0 + $0x144] sm:$0xf]
  %v97 = vld [vmem:[%s0 + $0x148] sm:$0xf]
  %v98 = vld [vmem:[%s0 + $0x14c] sm:$0xf]
  %v99 = vld [vmem:[%s0 + $0x150] sm:$0xf]
  %v100 = vld [vmem:[%s0 + $0x154] sm:$0xf]
  %v101 = vld [vmem:[%s0 + $0x158] sm:$0xf]
  %v102 = vld [vmem:[%s0 + $0x15c] sm:$0xf]
  %v103 = vld [vmem:[%s0 + $0x160] sm:$0xf]
  %v104 = vld [vmem:[%s0 + $0x164] sm:$0xf]
  %v105 = vld [vmem:[%s0 + $0x168] sm:$0xf]
  %v106 = vld [vmem:[%s0 + $0x16c] sm:$0xf]
  %v107 = vld [vmem:[%s0 + $0x170] sm:$0xf]
  %v108 = vld [vmem:[%s0 + $0x174] sm:$0xf]
  %v109 = vld [vmem:[%s0 + $0x178] sm:$0xf]
  %v110 = vld [vmem:[%s0 + $0x17c] sm:$0xf]
  %v111 = vld [vmem:[%s0 + $0x180] sm:$0xf]
  %v112 = vld [vmem:[%s0 + $0x184] sm:$0xf]
  %v113 = vld [vmem:[%s0 + $0x188] sm:$0xf]
  %v114 = vld [vmem:[%s0 + $0x18c] sm:$0xf]
  %v115 = vld [vmem:[%s1] sm:$0xf]
  %v116 = vld [vmem:[%s1 + $0x4] sm:$0xf]
  %v117 = vld [vmem:[%s1 + $0x8] sm:$0xf]
  %v118 = vld [vmem:[%s1 + $0xc] sm:$0xf]
  %v119 = vld [vmem:[%s1 + $0x10] sm:$0x3]
  %v220 = vunpack.c.l.b16 %v15
  %v221 = vunpack.c.l.b16 %v16
  %v222 = vunpack.c.l.b16 %v17
  %v223 = vunpack.c.l.b16 %v18
  %v224 = vunpack.c.l.b16 %v19
  %v225 = vunpack.c.l.b16 %v20
  %v226 = vunpack.c.l.b16 %v21
  %v227 = vunpack.c.l.b16 %v22
  %v228 = vunpack.c.l.b16 %v23
  %v229 = vunpack.c.l.b16 %v24
  %v230 = vunpack.c.l.b16 %v25
  %v231 = vunpack.c.l.b16 %v26
  %v232 = vunpack.c.l.b16 %v27
  %v233 = vunpack.c.l.b16 %v28
  %v234 = vunpack.c.l.b16 %v29
  %v235 = vunpack.c.l.b16 %v30
  %v236 = vunpack.c.l.b16 %v31
  %v237 = vunpack.c.l.b16 %v32
  %v238 = vunpack.c.l.b16 %v33
  %v239 = vunpack.c.l.b16 %v34
  %v240 = vunpack.c.l.b16 %v35
  %v241 = vunpack.c.l.b16 %v36
  %v242 = vunpack.c.l.b16 %v37
  %v243 = vunpack.c.l.b16 %v38
  %v244 = vunpack.c.l.b16 %v39
  %v245 = vunpack.c.l.b16 %v40
  %v246 = vunpack.c.l.b16 %v41
  %v247 = vunpack.c.l.b16 %v42
  %v248 = vunpack.c.l.b16 %v43
  %v249 = vunpack.c.l.b16 %v44
  %v250 = vunpack.c.l.b16 %v45
  %v251 = vunpack.c.l.b16 %v46
  %v252 = vunpack.c.l.b16 %v47
  %v253 = vunpack.c.l.b16 %v48
  %v254 = vunpack.c.l.b16 %v49
  %v255 = vunpack.c.l.b16 %v50
  %v256 = vunpack.c.l.b16 %v51
  %v257 = vunpack.c.l.b16 %v52
  %v258 = vunpack.c.l.b16 %v53
  %v259 = vunpack.c.l.b16 %v54
  %v260 = vunpack.c.l.b16 %v55
  %v261 = vunpack.c.l.b16 %v56
  %v262 = vunpack.c.l.b16 %v57
  %v263 = vunpack.c.l.b16 %v58
  %v264 = vunpack.c.l.b16 %v59
  %v265 = vunpack.c.l.b16 %v60
  %v266 = vunpack.c.l.b16 %v61
  %v267 = vunpack.c.l.b16 %v62
  %v268 = vunpack.c.l.b16 %v63
  %v269 = vunpack.c.l.b16 %v64
  %v270 = vunpack.c.l.b16 %v65
  %v271 = vunpack.c.l.b16 %v66
  %v272 = vunpack.c.l.b16 %v67
  %v273 = vunpack.c.l.b16 %v68
  %v274 = vunpack.c.l.b16 %v69
  %v275 = vunpack.c.l.b16 %v70
  %v276 = vunpack.c.l.b16 %v71
  %v277 = vunpack.c.l.b16 %v72
  %v278 = vunpack.c.l.b16 %v73
  %v279 = vunpack.c.l.b16 %v74
  %v280 = vunpack.c.l.b16 %v75
  %v281 = vunpack.c.l.b16 %v76
  %v282 = vunpack.c.l.b16 %v77
  %v283 = vunpack.c.l.b16 %v78
  %v284 = vunpack.c.l.b16 %v79
  %v285 = vunpack.c.l.b16 %v80
  %v286 = vunpack.c.l.b16 %v81
  %v287 = vunpack.c.l.b16 %v82
  %v288 = vunpack.c.l.b16 %v83
  %v289 = vunpack.c.l.b16 %v84
  %v290 = vunpack.c.l.b16 %v85
  %v291 = vunpack.c.l.b16 %v86
  %v292 = vunpack.c.l.b16 %v87
  %v293 = vunpack.c.l.b16 %v88
  %v294 = vunpack.c.l.b16 %v89
  %v295 = vunpack.c.l.b16 %v90
  %v296 = vunpack.c.l.b16 %v91
  %v297 = vunpack.c.l.b16 %v92
  %v298 = vunpack.c.l.b16 %v93
  %v299 = vunpack.c.l.b16 %v94
  %v300 = vunpack.c.l.b16 %v95
  %v301 = vunpack.c.l.b16 %v96
  %v302 = vunpack.c.l.b16 %v97
  %v303 = vunpack.c.l.b16 %v98
  %v304 = vunpack.c.l.b16 %v99
  %v305 = vunpack.c.l.b16 %v100
  %v306 = vunpack.c.l.b16 %v101
  %v307 = vunpack.c.l.b16 %v102
  %v308 = vunpack.c.l.b16 %v103
  %v309 = vunpack.c.l.b16 %v104
  %v310 = vunpack.c.l.b16 %v105
  %v311 = vunpack.c.l.b16 %v106
  %v312 = vunpack.c.l.b16 %v107
  %v313 = vunpack.c.l.b16 %v108
  %v314 = vunpack.c.l.b16 %v109
  %v315 = vunpack.c.l.b16 %v110
  %v316 = vunpack.c.l.b16 %v111
  %v317 = vunpack.c.l.b16 %v112
  %v318 = vunpack.c.l.b16 %v113
  %v319 = vunpack.c.l.b16 %v114
  %v320 = vpack.c.b16 %v221, %v220
  %v321 = vpack.c.b16 %v223, %v222
  %v322 = vpack.c.b16 %v225, %v224
  %v323 = vpack.c.b16 %v227, %v226
  %v324 = vpack.c.b16 %v229, %v228
  %v325 = vpack.c.b16 %v231, %v230
  %v326 = vpack.c.b16 %v233, %v232
  %v327 = vpack.c.b16 %v235, %v234
  %v328 = vpack.c.b16 %v237, %v236
  %v329 = vpack.c.b16 %v239, %v238
  %v330 = vpack.c.b16 %v241, %v240
  %v331 = vpack.c.b16 %v243, %v242
  %v332 = vpack.c.b16 %v245, %v244
  %v333 = vpack.c.b16 %v247, %v246
  %v334 = vpack.c.b16 %v249, %v248
  %v335 = vpack.c.b16 %v251, %v250
  %v336 = vpack.c.b16 %v253, %v252
  %v337 = vpack.c.b16 %v255, %v254
  %v338 = vpack.c.b16 %v257, %v256
  %v339 = vpack.c.b16 %v259, %v258
  %v340 = vpack.c.b16 %v261, %v260
  %v341 = vpack.c.b16 %v263, %v262
  %v342 = vpack.c.b16 %v265, %v264
  %v343 = vpack.c.b16 %v267, %v266
  %v344 = vpack.c.b16 %v269, %v268
  %v345 = vpack.c.b16 %v271, %v270
  %v346 = vpack.c.b16 %v273, %v272
  %v347 = vpack.c.b16 %v275, %v274
  %v348 = vpack.c.b16 %v277, %v276
  %v349 = vpack.c.b16 %v279, %v278
  %v350 = vpack.c.b16 %v281, %v280
  %v351 = vpack.c.b16 %v283, %v282
  %v352 = vpack.c.b16 %v285, %v284
  %v353 = vpack.c.b16 %v287, %v286
  %v354 = vpack.c.b16 %v289, %v288
  %v355 = vpack.c.b16 %v291, %v290
  %v356 = vpack.c.b16 %v293, %v292
  %v357 = vpack.c.b16 %v295, %v294
  %v358 = vpack.c.b16 %v297, %v296
  %v359 = vpack.c.b16 %v299, %v298
  %v360 = vpack.c.b16 %v301, %v300
  %v361 = vpack.c.b16 %v303, %v302
  %v362 = vpack.c.b16 %v305, %v304
  %v363 = vpack.c.b16 %v307, %v306
  %v364 = vpack.c.b16 %v309, %v308
  %v365 = vpack.c.b16 %v311, %v310
  %v366 = vpack.c.b16 %v313, %v312
  %v367 = vpack.c.b16 %v315, %v314
  %v368 = vpack.c.b16 %v317, %v316
  %v369 = vpack.c.b16 %v319, %v318
  %v375 = vunpack.c.l.b16 %v115
  %v376 = vunpack.c.l.b16 %v116
  %v377 = vunpack.c.l.b16 %v117
  %v378 = vunpack.c.l.b16 %v118
  %v379 = vunpack.c.l.b16 %v119
  %v380 = vpack.c.b16 %v376, %v375
  %v381 = vpack.c.b16 %v378, %v377
  %v382 = vpack.c.b16 %v379, %v379
  %vm385 = vcmask 293888
  %v387 = vsel %vm385, %v320, 0
  %v390 = vsel %vm385, %v321, 0
  %v393 = vsel %vm385, %v322, 0
  %v396 = vsel %vm385, %v323, 0
  %v399 = vsel %vm385, %v324, 0
  %v402 = vsel %vm385, %v325, 0
  %v405 = vsel %vm385, %v326, 0
  %v408 = vsel %vm385, %v327, 0
  %v411 = vsel %vm385, %v328, 0
  %v414 = vsel %vm385, %v329, 0
  %v417 = vsel %vm385, %v330, 0
  %v420 = vsel %vm385, %v331, 0
  %v423 = vsel %vm385, %v332, 0
  %v426 = vsel %vm385, %v333, 0
  %v429 = vsel %vm385, %v334, 0
  %v432 = vsel %vm385, %v335, 0
  %v435 = vsel %vm385, %v336, 0
  %v438 = vsel %vm385, %v337, 0
  %v441 = vsel %vm385, %v338, 0
  %v444 = vsel %vm385, %v339, 0
  %v447 = vsel %vm385, %v340, 0
  %v450 = vsel %vm385, %v341, 0
  %v453 = vsel %vm385, %v342, 0
  %v456 = vsel %vm385, %v343, 0
  %v459 = vsel %vm385, %v344, 0
  %v462 = vsel %vm385, %v345, 0
  %v465 = vsel %vm385, %v346, 0
  %v468 = vsel %vm385, %v347, 0
  %v471 = vsel %vm385, %v348, 0
  %v474 = vsel %vm385, %v349, 0
  %v477 = vsel %vm385, %v350, 0
  %v480 = vsel %vm385, %v351, 0
  %v483 = vsel %vm385, %v352, 0
  %v486 = vsel %vm385, %v353, 0
  %v489 = vsel %vm385, %v354, 0
  %v492 = vsel %vm385, %v355, 0
  %v495 = vsel %vm385, %v356, 0
  %v498 = vsel %vm385, %v357, 0
  %v501 = vsel %vm385, %v358, 0
  %v504 = vsel %vm385, %v359, 0
  %v507 = vsel %vm385, %v360, 0
  %v510 = vsel %vm385, %v361, 0
  %v513 = vsel %vm385, %v362, 0
  %v516 = vsel %vm385, %v363, 0
  %v519 = vsel %vm385, %v364, 0
  %v522 = vsel %vm385, %v365, 0
  %v525 = vsel %vm385, %v366, 0
  %v528 = vsel %vm385, %v367, 0
  %v531 = vsel %vm385, %v368, 0
  %v534 = vsel %vm385, %v369, 0
  %vm536 = vcmask 1041408
  %v538 = vsel %vm536, %v382, 0
  %540 = vmatprep.subr.bf16.mxu0 0
  %541 = vmatpush1.bf16.msra.mxu0 %v380
  %542 = vmatprep.subr.bf16.mxu0 0
  %543 = vmatpush1.bf16.msra.mxu0 %v381
  %544 = vmatprep.subr.bf16.mxu0 0
  %545 = vmatpush1.bf16.msra.mxu0 %v538
  %546 = vmatprep.subr.bf16.mxu0 0
  %547 = vmatpush1.bf16.msra.mxu0 0
  %548 = vmatprep.subr.bf16.mxu0 0
  %549 = vmatpush1.bf16.msra.mxu0 0
  %550 = vmatprep.subr.bf16.mxu0 0
  %551 = vmatpush1.bf16.msra.mxu0 0
  %552 = vmatprep.subr.bf16.mxu0 0
  %553 = vmatpush1.bf16.msra.mxu0 0
  %554 = vmatprep.subr.bf16.mxu0 0
  %555 = vmatpush1.bf16.msra.mxu0 0
  %556 = vmatprep.subr.bf16.mxu0 0
  %557 = vmatpush1.bf16.msra.mxu0 0
  %558 = vmatprep.subr.bf16.mxu0 0
  %559 = vmatpush1.bf16.msra.mxu0 0
  %560 = vmatprep.subr.bf16.mxu0 0
  %561 = vmatpush1.bf16.msra.mxu0 0
  %562 = vmatprep.subr.bf16.mxu0 0
  %563 = vmatpush1.bf16.msra.mxu0 0
  %564 = vmatprep.subr.bf16.mxu0 0
  %565 = vmatpush1.bf16.msra.mxu0 0
  %566 = vmatprep.subr.bf16.mxu0 0
  %567 = vmatpush1.bf16.msra.mxu0 0
  %568 = vmatprep.subr.bf16.mxu0 0
  %569 = vmatpush1.bf16.msra.mxu0 0
  %570 = vmatprep.subr.bf16.mxu0 0
  %571 = vmatpush1.bf16.msra.mxu0 0
  %572 = vmatprep.mubr.bf16.mxu0 0
  %573 = vmatmul.mubr.bf16.gmra.mrb[0].mxu0 %v387
  %v574 = vpop.f32.mrb[0].mxu0
  %v575 = vadd.f32 0.0, %v574
  %v576 = vpop.f32.mrb[0].mxu0
  %v577 = vpop.f32.mrb[0].mxu0
  %v578 = vadd.f32 0.0, %v577
  %v579 = vpop.f32.mrb[0].mxu0
  %580 = vmatprep.mubr.bf16.mxu0 0
  %581 = vmatmul.mubr.bf16.gmra.mrb[0].mxu0 %v390
  %v582 = vpop.f32.mrb[0].mxu0
  %v583 = vadd.f32 0.0, %v582
  %v584 = vpop.f32.mrb[0].mxu0
  %v585 = vpop.f32.mrb[0].mxu0
  %v586 = vadd.f32 0.0, %v585
  %v587 = vpop.f32.mrb[0].mxu0
  %588 = vmatprep.mubr.bf16.mxu0 0
  %589 = vmatmul.mubr.bf16.gmra.mrb[0].mxu0 %v393
  %v590 = vpop.f32.mrb[0].mxu0
  %v591 = vadd.f32 0.0, %v590
  %v592 = vpop.f32.mrb[0].mxu0
  %v593 = vpop.f32.mrb[0].mxu0
  %v594 = vadd.f32 0.0, %v593
  %v595 = vpop.f32.mrb[0].mxu0
  %596 = vmatprep.mubr.bf16.mxu0 0
  %597 = vmatmul.mubr.bf16.gmra.mrb[0].mxu0 %v396
  %v598 = vpop.f32.mrb[0].mxu0
  %v599 = vadd.f32 0.0, %v598
  %v600 = vpop.f32.mrb[0].mxu0
  %v601 = vpop.f32.mrb[0].mxu0
  %v602 = vadd.f32 0.0, %v601
  %v603 = vpop.f32.mrb[0].mxu0
  %604 = vmatprep.mubr.bf16.mxu0 0
  %605 = vmatmul.mubr.bf16.gmra.mrb[0].mxu0 %v399
  %v606 = vpop.f32.mrb[0].mxu0
  %v607 = vadd.f32 0.0, %v606
  %v608 = vpop.f32.mrb[0].mxu0
  %v609 = vpop.f32.mrb[0].mxu0
  %v610 = vadd.f32 0.0, %v609
  %v611 = vpop.f32.mrb[0].mxu0
  %612 = vmatprep.mubr.bf16.mxu0 0
  %613 = vmatmul.mubr.bf16.gmra.mrb[0].mxu0 %v402
  %v614 = vpop.f32.mrb[0].mxu0
  %v615 = vadd.f32 0.0, %v614
  %v616 = vpop.f32.mrb[0].mxu0
  %v617 = vpop.f32.mrb[0].mxu0
  %v618 = vadd.f32 0.0, %v617
  %v619 = vpop.f32.mrb[0].mxu0
  %620 = vmatprep.mubr.bf16.mxu0 0
  %621 = vmatmul.mubr.bf16.gmra.mrb[0].mxu0 %v405
  %v622 = vpop.f32.mrb[0].mxu0
  %v623 = vadd.f32 0.0, %v622
  %v624 = vpop.f32.mrb[0].mxu0
  %v625 = vpop.f32.mrb[0].mxu0
  %v626 = vadd.f32 0.0, %v625
  %v627 = vpop.f32.mrb[0].mxu0
  %628 = vmatprep.mubr.bf16.mxu0 0
  %629 = vmatmul.mubr.bf16.gmra.mrb[0].mxu0 %v408
  %v630 = vpop.f32.mrb[0].mxu0
  %v631 = vadd.f32 0.0, %v630
  %v632 = vpop.f32.mrb[0].mxu0
  %v633 = vpop.f32.mrb[0].mxu0
  %v634 = vadd.f32 0.0, %v633
  %v635 = vpop.f32.mrb[0].mxu0
  %636 = vmatprep.mubr.bf16.mxu0 0
  %637 = vmatmul.mubr.bf16.gmra.mrb[0].mxu0 %v411
  %v638 = vpop.f32.mrb[0].mxu0
  %v639 = vadd.f32 0.0, %v638
  %v640 = vpop.f32.mrb[0].mxu0
  %v641 = vpop.f32.mrb[0].mxu0
  %v642 = vadd.f32 0.0, %v641
  %v643 = vpop.f32.mrb[0].mxu0
  %644 = vmatprep.mubr.bf16.mxu0 0
  %645 = vmatmul.mubr.bf16.gmra.mrb[0].mxu0 %v414
  %v646 = vpop.f32.mrb[0].mxu0
  %v647 = vadd.f32 0.0, %v646
  %v648 = vpop.f32.mrb[0].mxu0
  %v649 = vpop.f32.mrb[0].mxu0
  %v650 = vadd.f32 0.0, %v649
  %v651 = vpop.f32.mrb[0].mxu0
  %652 = vmatprep.mubr.bf16.mxu0 0
  %653 = vmatmul.mubr.bf16.gmra.mrb[0].mxu0 %v417
  %v654 = vpop.f32.mrb[0].mxu0
  %v655 = vadd.f32 0.0, %v654
  %v656 = vpop.f32.mrb[0].mxu0
  %v657 = vpop.f32.mrb[0].mxu0
  %v658 = vadd.f32 0.0, %v657
  %v659 = vpop.f32.mrb[0].mxu0
  %660 = vmatprep.mubr.bf16.mxu0 0
  %661 = vmatmul.mubr.bf16.gmra.mrb[0].mxu0 %v420
  %v662 = vpop.f32.mrb[0].mxu0
  %v663 = vadd.f32 0.0, %v662
  %v664 = vpop.f32.mrb[0].mxu0
  %v665 = vpop.f32.mrb[0].mxu0
  %v666 = vadd.f32 0.0, %v665
  %v667 = vpop.f32.mrb[0].mxu0
  %668 = vmatprep.mubr.bf16.mxu0 0
  %669 = vmatmul.mubr.bf16.gmra.mrb[0].mxu0 %v423
  %v670 = vpop.f32.mrb[0].mxu0
  %v671 = vadd.f32 0.0, %v670
  %v672 = vpop.f32.mrb[0].mxu0
  %v673 = vpop.f32.mrb[0].mxu0
  %v674 = vadd.f32 0.0, %v673
  %v675 = vpop.f32.mrb[0].mxu0
  %676 = vmatprep.mubr.bf16.mxu0 0
  %677 = vmatmul.mubr.bf16.gmra.mrb[0].mxu0 %v426
  %v678 = vpop.f32.mrb[0].mxu0
  %v679 = vadd.f32 0.0, %v678
  %v680 = vpop.f32.mrb[0].mxu0
  %v681 = vpop.f32.mrb[0].mxu0
  %v682 = vadd.f32 0.0, %v681
  %v683 = vpop.f32.mrb[0].mxu0
  %684 = vmatprep.mubr.bf16.mxu0 0
  %685 = vmatmul.mubr.bf16.gmra.mrb[0].mxu0 %v429
  %v686 = vpop.f32.mrb[0].mxu0
  %v687 = vadd.f32 0.0, %v686
  %v688 = vpop.f32.mrb[0].mxu0
  %v689 = vpop.f32.mrb[0].mxu0
  %v690 = vadd.f32 0.0, %v689
  %v691 = vpop.f32.mrb[0].mxu0
  %692 = vmatprep.mubr.bf16.mxu0 0
  %693 = vmatmul.mubr.bf16.gmra.mrb[0].mxu0 %v432
  %v694 = vpop.f32.mrb[0].mxu0
  %v695 = vadd.f32 0.0, %v694
  %v696 = vpop.f32.mrb[0].mxu0
  %v697 = vpop.f32.mrb[0].mxu0
  %v698 = vadd.f32 0.0, %v697
  %v699 = vpop.f32.mrb[0].mxu0
  %700 = vmatprep.mubr.bf16.mxu0 0
  %701 = vmatmul.mubr.bf16.gmra.mrb[0].mxu0 %v435
  %v702 = vpop.f32.mrb[0].mxu0
  %v703 = vadd.f32 0.0, %v702
  %v704 = vpop.f32.mrb[0].mxu0
  %v705 = vpop.f32.mrb[0].mxu0
  %v706 = vadd.f32 0.0, %v705
  %v707 = vpop.f32.mrb[0].mxu0
  %708 = vmatprep.mubr.bf16.mxu0 0
  %709 = vmatmul.mubr.bf16.gmra.mrb[0].mxu0 %v438
  %v710 = vpop.f32.mrb[0].mxu0
  %v711 = vadd.f32 0.0, %v710
  %v712 = vpop.f32.mrb[0].mxu0
  %v713 = vpop.f32.mrb[0].mxu0
  %v714 = vadd.f32 0.0, %v713
  %v715 = vpop.f32.mrb[0].mxu0
  %716 = vmatprep.mubr.bf16.mxu0 0
  %717 = vmatmul.mubr.bf16.gmra.mrb[0].mxu0 %v441
  %v718 = vpop.f32.mrb[0].mxu0
  %v719 = vadd.f32 0.0, %v718
  %v720 = vpop.f32.mrb[0].mxu0
  %v721 = vpop.f32.mrb[0].mxu0
  %v722 = vadd.f32 0.0, %v721
  %v723 = vpop.f32.mrb[0].mxu0
  %724 = vmatprep.mubr.bf16.mxu0 0
  %725 = vmatmul.mubr.bf16.gmra.mrb[0].mxu0 %v444
  %v726 = vpop.f32.mrb[0].mxu0
  %v727 = vadd.f32 0.0, %v726
  %v728 = vpop.f32.mrb[0].mxu0
  %v729 = vpop.f32.mrb[0].mxu0
  %v730 = vadd.f32 0.0, %v729
  %v731 = vpop.f32.mrb[0].mxu0
  %732 = vmatprep.mubr.bf16.mxu0 0
  %733 = vmatmul.mubr.bf16.gmra.mrb[0].mxu0 %v447
  %v734 = vpop.f32.mrb[0].mxu0
  %v735 = vadd.f32 0.0, %v734
  %v736 = vpop.f32.mrb[0].mxu0
  %v737 = vpop.f32.mrb[0].mxu0
  %v738 = vadd.f32 0.0, %v737
  %v739 = vpop.f32.mrb[0].mxu0
  %740 = vmatprep.mubr.bf16.mxu0 0
  %741 = vmatmul.mubr.bf16.gmra.mrb[0].mxu0 %v450
  %v742 = vpop.f32.mrb[0].mxu0
  %v743 = vadd.f32 0.0, %v742
  %v744 = vpop.f32.mrb[0].mxu0
  %v745 = vpop.f32.mrb[0].mxu0
  %v746 = vadd.f32 0.0, %v745
  %v747 = vpop.f32.mrb[0].mxu0
  %748 = vmatprep.mubr.bf16.mxu0 0
  %749 = vmatmul.mubr.bf16.gmra.mrb[0].mxu0 %v453
  %v750 = vpop.f32.mrb[0].mxu0
  %v751 = vadd.f32 0.0, %v750
  %v752 = vpop.f32.mrb[0].mxu0
  %v753 = vpop.f32.mrb[0].mxu0
  %v754 = vadd.f32 0.0, %v753
  %v755 = vpop.f32.mrb[0].mxu0
  %756 = vmatprep.mubr.bf16.mxu0 0
  %757 = vmatmul.mubr.bf16.gmra.mrb[0].mxu0 %v456
  %v758 = vpop.f32.mrb[0].mxu0
  %v759 = vadd.f32 0.0, %v758
  %v760 = vpop.f32.mrb[0].mxu0
  %v761 = vpop.f32.mrb[0].mxu0
  %v762 = vadd.f32 0.0, %v761
  %v763 = vpop.f32.mrb[0].mxu0
  %764 = vmatprep.mubr.bf16.mxu0 0
  %765 = vmatmul.mubr.bf16.gmra.mrb[0].mxu0 %v459
  %v766 = vpop.f32.mrb[0].mxu0
  %v767 = vadd.f32 0.0, %v766
  %v768 = vpop.f32.mrb[0].mxu0
  %v769 = vpop.f32.mrb[0].mxu0
  %v770 = vadd.f32 0.0, %v769
  %v771 = vpop.f32.mrb[0].mxu0
  %772 = vmatprep.mubr.bf16.mxu0 0
  %773 = vmatmul.mubr.bf16.gmra.mrb[0].mxu0 %v462
  %v774 = vpop.f32.mrb[0].mxu0
  %v775 = vadd.f32 0.0, %v774
  %v776 = vpop.f32.mrb[0].mxu0
  %v777 = vpop.f32.mrb[0].mxu0
  %v778 = vadd.f32 0.0, %v777
  %v779 = vpop.f32.mrb[0].mxu0
  %780 = vmatprep.mubr.bf16.mxu0 0
  %781 = vmatmul.mubr.bf16.gmra.mrb[0].mxu0 %v465
  %v782 = vpop.f32.mrb[0].mxu0
  %v783 = vadd.f32 0.0, %v782
  %v784 = vpop.f32.mrb[0].mxu0
  %v785 = vpop.f32.mrb[0].mxu0
  %v786 = vadd.f32 0.0, %v785
  %v787 = vpop.f32.mrb[0].mxu0
  %788 = vmatprep.mubr.bf16.mxu0 0
  %789 = vmatmul.mubr.bf16.gmra.mrb[0].mxu0 %v468
  %v790 = vpop.f32.mrb[0].mxu0
  %v791 = vadd.f32 0.0, %v790
  %v792 = vpop.f32.mrb[0].mxu0
  %v793 = vpop.f32.mrb[0].mxu0
  %v794 = vadd.f32 0.0, %v793
  %v795 = vpop.f32.mrb[0].mxu0
  %796 = vmatprep.mubr.bf16.mxu0 0
  %797 = vmatmul.mubr.bf16.gmra.mrb[0].mxu0 %v471
  %v798 = vpop.f32.mrb[0].mxu0
  %v799 = vadd.f32 0.0, %v798
  %v800 = vpop.f32.mrb[0].mxu0
  %v801 = vpop.f32.mrb[0].mxu0
  %v802 = vadd.f32 0.0, %v801
  %v803 = vpop.f32.mrb[0].mxu0
  %804 = vmatprep.mubr.bf16.mxu0 0
  %805 = vmatmul.mubr.bf16.gmra.mrb[0].mxu0 %v474
  %v806 = vpop.f32.mrb[0].mxu0
  %v807 = vadd.f32 0.0, %v806
  %v808 = vpop.f32.mrb[0].mxu0
  %v809 = vpop.f32.mrb[0].mxu0
  %v810 = vadd.f32 0.0, %v809
  %v811 = vpop.f32.mrb[0].mxu0
  %812 = vmatprep.mubr.bf16.mxu0 0
  %813 = vmatmul.mubr.bf16.gmra.mrb[0].mxu0 %v477
  %v814 = vpop.f32.mrb[0].mxu0
  %v815 = vadd.f32 0.0, %v814
  %v816 = vpop.f32.mrb[0].mxu0
  %v817 = vpop.f32.mrb[0].mxu0
  %v818 = vadd.f32 0.0, %v817
  %v819 = vpop.f32.mrb[0].mxu0
  %820 = vmatprep.mubr.bf16.mxu0 0
  %821 = vmatmul.mubr.bf16.gmra.mrb[0].mxu0 %v480
  %v822 = vpop.f32.mrb[0].mxu0
  %v823 = vadd.f32 0.0, %v822
  %v824 = vpop.f32.mrb[0].mxu0
  %v825 = vpop.f32.mrb[0].mxu0
  %v826 = vadd.f32 0.0, %v825
  %v827 = vpop.f32.mrb[0].mxu0
  %828 = vmatprep.mubr.bf16.mxu0 0
  %829 = vmatmul.mubr.bf16.gmra.mrb[0].mxu0 %v483
  %v830 = vpop.f32.mrb[0].mxu0
  %v831 = vadd.f32 0.0, %v830
  %v832 = vpop.f32.mrb[0].mxu0
  %v833 = vpop.f32.mrb[0].mxu0
  %v834 = vadd.f32 0.0, %v833
  %v835 = vpop.f32.mrb[0].mxu0
  %836 = vmatprep.mubr.bf16.mxu0 0
  %837 = vmatmul.mubr.bf16.gmra.mrb[0].mxu0 %v486
  %v838 = vpop.f32.mrb[0].mxu0
  %v839 = vadd.f32 0.0, %v838
  %v840 = vpop.f32.mrb[0].mxu0
  %v841 = vpop.f32.mrb[0].mxu0
  %v842 = vadd.f32 0.0, %v841
  %v843 = vpop.f32.mrb[0].mxu0
  %844 = vmatprep.mubr.bf16.mxu0 0
  %845 = vmatmul.mubr.bf16.gmra.mrb[0].mxu0 %v489
  %v846 = vpop.f32.mrb[0].mxu0
  %v847 = vadd.f32 0.0, %v846
  %v848 = vpop.f32.mrb[0].mxu0
  %v849 = vpop.f32.mrb[0].mxu0
  %v850 = vadd.f32 0.0, %v849
  %v851 = vpop.f32.mrb[0].mxu0
  %852 = vmatprep.mubr.bf16.mxu0 0
  %853 = vmatmul.mubr.bf16.gmra.mrb[0].mxu0 %v492
  %v854 = vpop.f32.mrb[0].mxu0
  %v855 = vadd.f32 0.0, %v854
  %v856 = vpop.f32.mrb[0].mxu0
  %v857 = vpop.f32.mrb[0].mxu0
  %v858 = vadd.f32 0.0, %v857
  %v859 = vpop.f32.mrb[0].mxu0
  %860 = vmatprep.mubr.bf16.mxu0 0
  %861 = vmatmul.mubr.bf16.gmra.mrb[0].mxu0 %v495
  %v862 = vpop.f32.mrb[0].mxu0
  %v863 = vadd.f32 0.0, %v862
  %v864 = vpop.f32.mrb[0].mxu0
  %v865 = vpop.f32.mrb[0].mxu0
  %v866 = vadd.f32 0.0, %v865
  %v867 = vpop.f32.mrb[0].mxu0
  %868 = vmatprep.mubr.bf16.mxu0 0
  %869 = vmatmul.mubr.bf16.gmra.mrb[0].mxu0 %v498
  %v870 = vpop.f32.mrb[0].mxu0
  %v871 = vadd.f32 0.0, %v870
  %v872 = vpop.f32.mrb[0].mxu0
  %v873 = vpop.f32.mrb[0].mxu0
  %v874 = vadd.f32 0.0, %v873
  %v875 = vpop.f32.mrb[0].mxu0
  %876 = vmatprep.mubr.bf16.mxu0 0
  %877 = vmatmul.mubr.bf16.gmra.mrb[0].mxu0 %v501
  %v878 = vpop.f32.mrb[0].mxu0
  %v879 = vadd.f32 0.0, %v878
  %v880 = vpop.f32.mrb[0].mxu0
  %v881 = vpop.f32.mrb[0].mxu0
  %v882 = vadd.f32 0.0, %v881
  %v883 = vpop.f32.mrb[0].mxu0
  %884 = vmatprep.mubr.bf16.mxu0 0
  %885 = vmatmul.mubr.bf16.gmra.mrb[0].mxu0 %v504
  %v886 = vpop.f32.mrb[0].mxu0
  %v887 = vadd.f32 0.0, %v886
  %v888 = vpop.f32.mrb[0].mxu0
  %v889 = vpop.f32.mrb[0].mxu0
  %v890 = vadd.f32 0.0, %v889
  %v891 = vpop.f32.mrb[0].mxu0
  %892 = vmatprep.mubr.bf16.mxu0 0
  %893 = vmatmul.mubr.bf16.gmra.mrb[0].mxu0 %v507
  %v894 = vpop.f32.mrb[0].mxu0
  %v895 = vadd.f32 0.0, %v894
  %v896 = vpop.f32.mrb[0].mxu0
  %v897 = vpop.f32.mrb[0].mxu0
  %v898 = vadd.f32 0.0, %v897
  %v899 = vpop.f32.mrb[0].mxu0
  %900 = vmatprep.mubr.bf16.mxu0 0
  %901 = vmatmul.mubr.bf16.gmra.mrb[0].mxu0 %v510
  %v902 = vpop.f32.mrb[0].mxu0
  %v903 = vadd.f32 0.0, %v902
  %v904 = vpop.f32.mrb[0].mxu0
  %v905 = vpop.f32.mrb[0].mxu0
  %v906 = vadd.f32 0.0, %v905
  %v907 = vpop.f32.mrb[0].mxu0
  %908 = vmatprep.mubr.bf16.mxu0 0
  %909 = vmatmul.mubr.bf16.gmra.mrb[0].mxu0 %v513
  %v910 = vpop.f32.mrb[0].mxu0
  %v911 = vadd.f32 0.0, %v910
  %v912 = vpop.f32.mrb[0].mxu0
  %v913 = vpop.f32.mrb[0].mxu0
  %v914 = vadd.f32 0.0, %v913
  %v915 = vpop.f32.mrb[0].mxu0
  %916 = vmatprep.mubr.bf16.mxu0 0
  %917 = vmatmul.mubr.bf16.gmra.mrb[0].mxu0 %v516
  %v918 = vpop.f32.mrb[0].mxu0
  %v919 = vadd.f32 0.0, %v918
  %v920 = vpop.f32.mrb[0].mxu0
  %v921 = vpop.f32.mrb[0].mxu0
  %v922 = vadd.f32 0.0, %v921
  %v923 = vpop.f32.mrb[0].mxu0
  %924 = vmatprep.mubr.bf16.mxu0 0
  %925 = vmatmul.mubr.bf16.gmra.mrb[0].mxu0 %v519
  %v926 = vpop.f32.mrb[0].mxu0
  %v927 = vadd.f32 0.0, %v926
  %v928 = vpop.f32.mrb[0].mxu0
  %v929 = vpop.f32.mrb[0].mxu0
  %v930 = vadd.f32 0.0, %v929
  %v931 = vpop.f32.mrb[0].mxu0
  %932 = vmatprep.mubr.bf16.mxu0 0
  %933 = vmatmul.mubr.bf16.gmra.mrb[0].mxu0 %v522
  %v934 = vpop.f32.mrb[0].mxu0
  %v935 = vadd.f32 0.0, %v934
  %v936 = vpop.f32.mrb[0].mxu0
  %v937 = vpop.f32.mrb[0].mxu0
  %v938 = vadd.f32 0.0, %v937
  %v939 = vpop.f32.mrb[0].mxu0
  %940 = vmatprep.mubr.bf16.mxu0 0
  %941 = vmatmul.mubr.bf16.gmra.mrb[0].mxu0 %v525
  %v942 = vpop.f32.mrb[0].mxu0
  %v943 = vadd.f32 0.0, %v942
  %v944 = vpop.f32.mrb[0].mxu0
  %v945 = vpop.f32.mrb[0].mxu0
  %v946 = vadd.f32 0.0, %v945
  %v947 = vpop.f32.mrb[0].mxu0
  %948 = vmatprep.mubr.bf16.mxu0 0
  %949 = vmatmul.mubr.bf16.gmra.mrb[0].mxu0 %v528
  %v950 = vpop.f32.mrb[0].mxu0
  %v951 = vadd.f32 0.0, %v950
  %v952 = vpop.f32.mrb[0].mxu0
  %v953 = vpop.f32.mrb[0].mxu0
  %v954 = vadd.f32 0.0, %v953
  %v955 = vpop.f32.mrb[0].mxu0
  %956 = vmatprep.mubr.bf16.mxu0 0
  %957 = vmatmul.mubr.bf16.gmra.mrb[0].mxu0 %v531
  %v958 = vpop.f32.mrb[0].mxu0
  %v959 = vadd.f32 0.0, %v958
  %v960 = vpop.f32.mrb[0].mxu0
  %v961 = vpop.f32.mrb[0].mxu0
  %v962 = vadd.f32 0.0, %v961
  %v963 = vpop.f32.mrb[0].mxu0
  %964 = vmatprep.mubr.bf16.mxu0 0
  %965 = vmatmul.mubr.bf16.gmra.mrb[0].mxu0 %v534
  %v966 = vpop.f32.mrb[0].mxu0
  %v967 = vadd.f32 0.0, %v966
  %v968 = vpop.f32.mrb[0].mxu0
  %v969 = vpop.f32.mrb[0].mxu0
  %v970 = vadd.f32 0.0, %v969
  %v971 = vpop.f32.mrb[0].mxu0
  %972 = vdwg.mxu0
  %v973 = vmax.f32 %v575, %v674
  %v974 = vmax.f32 %v973, %v775
  %v975 = vmax.f32 %v974, %v874
  %v976 = vmax.f32 %v578, %v679
  %v977 = vmax.f32 %v976, %v778
  %v978 = vmax.f32 %v977, %v879
  %v979 = vmax.f32 %v583, %v682
  %v980 = vmax.f32 %v979, %v783
  %v981 = vmax.f32 %v980, %v882
  %v982 = vmax.f32 %v586, %v687
  %v983 = vmax.f32 %v982, %v786
  %v984 = vmax.f32 %v983, %v887
  %v985 = vmax.f32 %v591, %v690
  %v986 = vmax.f32 %v985, %v791
  %v987 = vmax.f32 %v986, %v890
  %v988 = vmax.f32 %v594, %v695
  %v989 = vmax.f32 %v988, %v794
  %v990 = vmax.f32 %v989, %v895
  %v991 = vmax.f32 %v599, %v698
  %v992 = vmax.f32 %v991, %v799
  %v993 = vmax.f32 %v992, %v898
  %v994 = vmax.f32 %v602, %v703
  %v995 = vmax.f32 %v994, %v802
  %v996 = vmax.f32 %v995, %v903
  %v997 = vmax.f32 %v607, %v706
  %v998 = vmax.f32 %v997, %v807
  %v999 = vmax.f32 %v998, %v906
  %v1000 = vmax.f32 %v610, %v711
  %v1001 = vmax.f32 %v1000, %v810
  %v1002 = vmax.f32 %v1001, %v911
  %v1003 = vmax.f32 %v615, %v714
  %v1004 = vmax.f32 %v1003, %v815
  %v1005 = vmax.f32 %v1004, %v914
  %v1006 = vmax.f32 %v618, %v719
  %v1007 = vmax.f32 %v1006, %v818
  %v1008 = vmax.f32 %v1007, %v919
  %v1009 = vmax.f32 %v623, %v722
  %v1010 = vmax.f32 %v1009, %v823
  %v1011 = vmax.f32 %v1010, %v922
  %v1012 = vmax.f32 %v626, %v727
  %v1013 = vmax.f32 %v1012, %v826
  %v1014 = vmax.f32 %v1013, %v927
  %v1015 = vmax.f32 %v631, %v730
  %v1016 = vmax.f32 %v1015, %v831
  %v1017 = vmax.f32 %v1016, %v930
  %v1018 = vmax.f32 %v634, %v735
  %v1019 = vmax.f32 %v1018, %v834
  %v1020 = vmax.f32 %v1019, %v935
  %v1021 = vmax.f32 %v639, %v738
  %v1022 = vmax.f32 %v1021, %v839
  %v1023 = vmax.f32 %v1022, %v938
  %v1024 = vmax.f32 %v642, %v743
  %v1025 = vmax.f32 %v1024, %v842
  %v1026 = vmax.f32 %v1025, %v943
  %v1027 = vmax.f32 %v647, %v746
  %v1028 = vmax.f32 %v1027, %v847
  %v1029 = vmax.f32 %v1028, %v946
  %v1030 = vmax.f32 %v650, %v751
  %v1031 = vmax.f32 %v1030, %v850
  %v1032 = vmax.f32 %v1031, %v951
  %v1033 = vmax.f32 %v655, %v754
  %v1034 = vmax.f32 %v1033, %v855
  %v1035 = vmax.f32 %v1034, %v954
  %v1036 = vmax.f32 %v658, %v759
  %v1037 = vmax.f32 %v1036, %v858
  %v1038 = vmax.f32 %v1037, %v959
  %v1039 = vmax.f32 %v663, %v762
  %v1040 = vmax.f32 %v1039, %v863
  %v1041 = vmax.f32 %v1040, %v962
  %v1042 = vmax.f32 %v666, %v767
  %v1043 = vmax.f32 %v1042, %v866
  %v1044 = vmax.f32 %v1043, %v967
  %v1045 = vmax.f32 %v671, %v770
  %v1046 = vmax.f32 %v1045, %v871
  %v1047 = vmax.f32 %v1046, %v970
  %v1048 = vld [vmem:[%s2] sm:$0x1]
  %v1050 = vlaneseq
  %v1051 = vshrl.u32 %v1050, 7
  %v1052 = vsub.s32 0, %v1051
  %v1053 = vrot.slane %v1048, %v1052
  %v1055 = vadd.f32 %v975, %v1053
  %v1056 = vadd.f32 %v978, %v1053
  %v1057 = vadd.f32 %v981, %v1053
  %v1058 = vadd.f32 %v984, %v1053
  %v1059 = vadd.f32 %v987, %v1053
  %v1060 = vadd.f32 %v990, %v1053
  %v1061 = vadd.f32 %v993, %v1053
  %v1062 = vadd.f32 %v996, %v1053
  %v1063 = vadd.f32 %v999, %v1053
  %v1064 = vadd.f32 %v1002, %v1053
  %v1065 = vadd.f32 %v1005, %v1053
  %v1066 = vadd.f32 %v1008, %v1053
  %v1067 = vadd.f32 %v1011, %v1053
  %v1068 = vadd.f32 %v1014, %v1053
  %v1069 = vadd.f32 %v1017, %v1053
  %v1070 = vadd.f32 %v1020, %v1053
  %v1071 = vadd.f32 %v1023, %v1053
  %v1072 = vadd.f32 %v1026, %v1053
  %v1073 = vadd.f32 %v1029, %v1053
  %v1074 = vadd.f32 %v1032, %v1053
  %v1075 = vadd.f32 %v1035, %v1053
  %v1076 = vadd.f32 %v1038, %v1053
  %v1077 = vadd.f32 %v1041, %v1053
  %v1078 = vadd.f32 %v1044, %v1053
  %v1079 = vadd.f32 %v1047, %v1053
  %v1080 = vmax.f32 %v1055, 0.0
  %v1081 = vmax.f32 %v1056, 0.0
  %v1082 = vmax.f32 %v1057, 0.0
  %v1083 = vmax.f32 %v1058, 0.0
  %v1084 = vmax.f32 %v1059, 0.0
  %v1085 = vmax.f32 %v1060, 0.0
  %v1086 = vmax.f32 %v1061, 0.0
  %v1087 = vmax.f32 %v1062, 0.0
  %v1088 = vmax.f32 %v1063, 0.0
  %v1089 = vmax.f32 %v1064, 0.0
  %v1090 = vmax.f32 %v1065, 0.0
  %v1091 = vmax.f32 %v1066, 0.0
  %v1092 = vmax.f32 %v1067, 0.0
  %v1093 = vmax.f32 %v1068, 0.0
  %v1094 = vmax.f32 %v1069, 0.0
  %v1095 = vmax.f32 %v1070, 0.0
  %v1096 = vmax.f32 %v1071, 0.0
  %v1097 = vmax.f32 %v1072, 0.0
  %v1098 = vmax.f32 %v1073, 0.0
  %v1099 = vmax.f32 %v1074, 0.0
  %v1100 = vmax.f32 %v1075, 0.0
  %v1101 = vmax.f32 %v1076, 0.0
  %v1102 = vmax.f32 %v1077, 0.0
  %v1103 = vmax.f32 %v1078, 0.0
  %v1104 = vmax.f32 %v1079, 0.0
  %v1105 = vpack.c.bf16 %v1081, %v1080
  %v1106 = vpack.c.bf16 %v1083, %v1082
  %v1107 = vpack.c.bf16 %v1085, %v1084
  %v1108 = vpack.c.bf16 %v1087, %v1086
  %v1109 = vpack.c.bf16 %v1089, %v1088
  %v1110 = vpack.c.bf16 %v1091, %v1090
  %v1111 = vpack.c.bf16 %v1093, %v1092
  %v1112 = vpack.c.bf16 %v1095, %v1094
  %v1113 = vpack.c.bf16 %v1097, %v1096
  %v1114 = vpack.c.bf16 %v1099, %v1098
  %v1115 = vpack.c.bf16 %v1101, %v1100
  %v1116 = vpack.c.bf16 %v1103, %v1102
  %v1117 = vpack.c.bf16 %v1104, %v1104
  %v1131 = vunpack.c.l.b16 %v1105
  %v1132 = vunpack.c.h.b16 %v1105
  %v1133 = vunpack.c.l.b16 %v1106
  %v1134 = vunpack.c.h.b16 %v1106
  %v1135 = vunpack.c.l.b16 %v1107
  %v1136 = vunpack.c.h.b16 %v1107
  %v1137 = vunpack.c.l.b16 %v1108
  %v1138 = vunpack.c.h.b16 %v1108
  %v1139 = vunpack.c.l.b16 %v1109
  %v1140 = vunpack.c.h.b16 %v1109
  %v1141 = vunpack.c.l.b16 %v1110
  %v1142 = vunpack.c.h.b16 %v1110
  %v1143 = vunpack.c.l.b16 %v1111
  %v1144 = vunpack.c.h.b16 %v1111
  %v1145 = vunpack.c.l.b16 %v1112
  %v1146 = vunpack.c.h.b16 %v1112
  %v1147 = vunpack.c.l.b16 %v1113
  %v1148 = vunpack.c.h.b16 %v1113
  %v1149 = vunpack.c.l.b16 %v1114
  %v1150 = vunpack.c.h.b16 %v1114
  %v1151 = vunpack.c.l.b16 %v1115
  %v1152 = vunpack.c.h.b16 %v1115
  %v1153 = vunpack.c.l.b16 %v1116
  %v1154 = vunpack.c.h.b16 %v1116
  %v1155 = vunpack.c.l.b16 %v1117
  %v1156 = vpack.c.b16 %v1131, %v1131
  %v1157 = vpack.c.b16 %v1132, %v1132
  %v1158 = vpack.c.b16 %v1133, %v1133
  %v1159 = vpack.c.b16 %v1134, %v1134
  %v1160 = vpack.c.b16 %v1135, %v1135
  %v1161 = vpack.c.b16 %v1136, %v1136
  %v1162 = vpack.c.b16 %v1137, %v1137
  %v1163 = vpack.c.b16 %v1138, %v1138
  %v1164 = vpack.c.b16 %v1139, %v1139
  %v1165 = vpack.c.b16 %v1140, %v1140
  %v1166 = vpack.c.b16 %v1141, %v1141
  %v1167 = vpack.c.b16 %v1142, %v1142
  %v1168 = vpack.c.b16 %v1143, %v1143
  %v1169 = vpack.c.b16 %v1144, %v1144
  %v1170 = vpack.c.b16 %v1145, %v1145
  %v1171 = vpack.c.b16 %v1146, %v1146
  %v1172 = vpack.c.b16 %v1147, %v1147
  %v1173 = vpack.c.b16 %v1148, %v1148
  %v1174 = vpack.c.b16 %v1149, %v1149
  %v1175 = vpack.c.b16 %v1150, %v1150
  %v1176 = vpack.c.b16 %v1151, %v1151
  %v1177 = vpack.c.b16 %v1152, %v1152
  %v1178 = vpack.c.b16 %v1153, %v1153
  %v1179 = vpack.c.b16 %v1154, %v1154
  %v1180 = vpack.c.b16 %v1155, %v1155
  %1206 = vst [vmem:[%s3] sm:$0xf] %v1156
  %1207 = vst [vmem:[%s3 + $0x4] sm:$0xf] %v1157
  %1208 = vst [vmem:[%s3 + $0x8] sm:$0xf] %v1158
  %1209 = vst [vmem:[%s3 + $0xc] sm:$0xf] %v1159
  %1210 = vst [vmem:[%s3 + $0x10] sm:$0xf] %v1160
  %1211 = vst [vmem:[%s3 + $0x14] sm:$0xf] %v1161
  %1212 = vst [vmem:[%s3 + $0x18] sm:$0xf] %v1162
  %1213 = vst [vmem:[%s3 + $0x1c] sm:$0xf] %v1163
  %1214 = vst [vmem:[%s3 + $0x20] sm:$0xf] %v1164
  %1215 = vst [vmem:[%s3 + $0x24] sm:$0xf] %v1165
  %1216 = vst [vmem:[%s3 + $0x28] sm:$0xf] %v1166
  %1217 = vst [vmem:[%s3 + $0x2c] sm:$0xf] %v1167
  %1218 = vst [vmem:[%s3 + $0x30] sm:$0xf] %v1168
  %1219 = vst [vmem:[%s3 + $0x34] sm:$0xf] %v1169
  %1220 = vst [vmem:[%s3 + $0x38] sm:$0xf] %v1170
  %1221 = vst [vmem:[%s3 + $0x3c] sm:$0xf] %v1171
  %1222 = vst [vmem:[%s3 + $0x40] sm:$0xf] %v1172
  %1223 = vst [vmem:[%s3 + $0x44] sm:$0xf] %v1173
  %1224 = vst [vmem:[%s3 + $0x48] sm:$0xf] %v1174
  %1225 = vst [vmem:[%s3 + $0x4c] sm:$0xf] %v1175
  %1226 = vst [vmem:[%s3 + $0x50] sm:$0xf] %v1176
  %1227 = vst [vmem:[%s3 + $0x54] sm:$0xf] %v1177
  %1228 = vst [vmem:[%s3 + $0x58] sm:$0xf] %v1178
  %1229 = vst [vmem:[%s3 + $0x5c] sm:$0xf] %v1179
  %1230 = vst [vmem:[%s3 + $0x60] sm:$0xf] %v1180
  // Predicated region
  $region14: #{cnn_forward.3} parent=0 // pred_check
    _
  $region15: #{cnn_forward.3} parent=0 // pred_check_branch
    %1232 = sbr.rel (0) target = $region17
  $region16: #{cnn_forward.3} parent=0 // pred_region
    _
  $region17: #{cnn_forward.3} parent=0 // pred_fallthru
    _
  // Predicated region
  $region18: #{cnn_forward.3} parent=0 // pred_check
    _
  $region19: #{cnn_forward.3} parent=0 // pred_check_branch
    %1234 = sbr.rel (0) target = $region21
  $region20: #{cnn_forward.3} parent=0 // pred_region
    _
  $region21: #{cnn_forward.3} parent=0 // pred_fallthru
    _

// kernel: cnn_forward.4
$region0: #{cnn_forward.4}
  #allocation0 [shape = 'u32[]', space=smem, size = 0x4, offset = 0x4, fixed_abs, tag = 'smem constant byte address 0x4 - core index']
  #allocation1 [shape = 'u32[144,128]{1,0:T(1,128)}', space=vmem, size = 0x12000, scoped, tag = 'internal scratch']
  %s0 = inlined_call_operand.vmem [shape: bf16[4,104,576], index: 0, kind: input, shape index: {}]
  %s1 = inlined_call_operand.vmem [shape: bf16[576,128], index: 1, kind: input, shape index: {}]
  %s2 = inlined_call_operand.vmem [shape: f32[1,128], index: 2, kind: input, shape index: {}]
  %s3 = inlined_call_operand.vmem [shape: bf16[104,128], index: 3, kind: output, shape index: {}]
  %s4 = sld [smem:[#allocation0]]
  $region22: #{cnn_forward.4} parent=0
    _
  %s6 = ssub.s32 1, %s4
  %s7 = scalar_select 0, %s6, %s4
  // Predicated region
  $region2: #{cnn_forward.4} parent=0 // pred_check
    _
  $region3: #{cnn_forward.4} parent=0 // pred_check_branch
    %9 = sbr.rel (0) target = $region5
  $region4: #{cnn_forward.4} parent=0 // pred_region
    _
  $region5: #{cnn_forward.4} parent=0 // pred_fallthru
    _
  // Predicated region
  $region6: #{cnn_forward.4} parent=0 // pred_check
    _
  $region7: #{cnn_forward.4} parent=0 // pred_check_branch
    %11 = sbr.rel (0) target = $region9
  $region8: #{cnn_forward.4} parent=0 // pred_region
    _
  $region9: #{cnn_forward.4} parent=0 // pred_fallthru
    _
  // Predicated region
  $region10: #{cnn_forward.4} parent=0 // pred_check
    _
  $region11: #{cnn_forward.4} parent=0 // pred_check_branch
    %13 = sbr.rel (0) target = $region13
  $region12: #{cnn_forward.4} parent=0 // pred_region
    _
  $region13: #{cnn_forward.4} parent=0 // pred_fallthru
    _
  %v15 = vld [vmem:[%s0] sm:$0xff]
  %v16 = vld [vmem:[%s0 + $0x8] sm:$0xff]
  %v17 = vld [vmem:[%s0 + $0x10] sm:$0xf]
  %v18 = vld [vmem:[%s0 + $0x14] sm:$0xff]
  %v19 = vld [vmem:[%s0 + $0x1c] sm:$0xff]
  %v20 = vld [vmem:[%s0 + $0x24] sm:$0xf]
  %v21 = vld [vmem:[%s0 + $0x28] sm:$0xff]
  %v22 = vld [vmem:[%s0 + $0x30] sm:$0xff]
  %v23 = vld [vmem:[%s0 + $0x38] sm:$0xf]
  %v24 = vld [vmem:[%s0 + $0x3c] sm:$0xff]
  %v25 = vld [vmem:[%s0 + $0x44] sm:$0xff]
  %v26 = vld [vmem:[%s0 + $0x4c] sm:$0xf]
  %v27 = vld [vmem:[%s0 + $0x50] sm:$0xff]
  %v28 = vld [vmem:[%s0 + $0x58] sm:$0xff]
  %v29 = vld [vmem:[%s0 + $0x60] sm:$0xf]
  %v30 = vld [vmem:[%s0 + $0x64] sm:$0xff]
  %v31 = vld [vmem:[%s0 + $0x6c] sm:$0xff]
  %v32 = vld [vmem:[%s0 + $0x74] sm:$0xf]
  %v33 = vld [vmem:[%s0 + $0x78] sm:$0xff]
  %v34 = vld [vmem:[%s0 + $0x80] sm:$0xff]
  %v35 = vld [vmem:[%s0 + $0x88] sm:$0xf]
  %v36 = vld [vmem:[%s0 + $0x8c] sm:$0xff]
  %v37 = vld [vmem:[%s0 + $0x94] sm:$0xff]
  %v38 = vld [vmem:[%s0 + $0x9c] sm:$0xf]
  %v39 = vld [vmem:[%s0 + $0xa0] sm:$0xff]
  %v40 = vld [vmem:[%s0 + $0xa8] sm:$0xff]
  %v41 = vld [vmem:[%s0 + $0xb0] sm:$0xf]
  %v42 = vld [vmem:[%s0 + $0xb4] sm:$0xff]
  %v43 = vld [vmem:[%s0 + $0xbc] sm:$0xff]
  %v44 = vld [vmem:[%s0 + $0xc4] sm:$0xf]
  %v45 = vld [vmem:[%s0 + $0xc8] sm:$0xff]
  %v46 = vld [vmem:[%s0 + $0xd0] sm:$0xff]
  %v47 = vld [vmem:[%s0 + $0xd8] sm:$0xf]
  %v48 = vld [vmem:[%s0 + $0xdc] sm:$0xff]
  %v49 = vld [vmem:[%s0 + $0xe4] sm:$0xff]
  %v50 = vld [vmem:[%s0 + $0xec] sm:$0xf]
  %v51 = vld [vmem:[%s0 + $0xf0] sm:$0xff]
  %v52 = vld [vmem:[%s0 + $0xf8] sm:$0xff]
  %v53 = vld [vmem:[%s0 + $0x100] sm:$0xf]
  %v54 = vld [vmem:[%s0 + $0x104] sm:$0xff]
  %v55 = vld [vmem:[%s0 + $0x10c] sm:$0xff]
  %v56 = vld [vmem:[%s0 + $0x114] sm:$0xf]
  %v57 = vld [vmem:[%s0 + $0x118] sm:$0xff]
  %v58 = vld [vmem:[%s0 + $0x120] sm:$0xff]
  %v59 = vld [vmem:[%s0 + $0x128] sm:$0xf]
  %v60 = vld [vmem:[%s0 + $0x12c] sm:$0xff]
  %v61 = vld [vmem:[%s0 + $0x134] sm:$0xff]
  %v62 = vld [vmem:[%s0 + $0x13c] sm:$0xf]
  %v63 = vld [vmem:[%s0 + $0x140] sm:$0xff]
  %v64 = vld [vmem:[%s0 + $0x148] sm:$0xff]
  %v65 = vld [vmem:[%s0 + $0x150] sm:$0xf]
  %v66 = vld [vmem:[%s0 + $0x154] sm:$0xff]
  %v67 = vld [vmem:[%s0 + $0x15c] sm:$0xff]
  %v68 = vld [vmem:[%s0 + $0x164] sm:$0xf]
  %v69 = vld [vmem:[%s0 + $0x168] sm:$0xff]
  %v70 = vld [vmem:[%s0 + $0x170] sm:$0xff]
  %v71 = vld [vmem:[%s0 + $0x178] sm:$0xf]
  %v72 = vld [vmem:[%s0 + $0x17c] sm:$0xff]
  %v73 = vld [vmem:[%s0 + $0x184] sm:$0xff]
  %v74 = vld [vmem:[%s0 + $0x18c] sm:$0xf]
  %v75 = vld [vmem:[%s0 + $0x190] sm:$0xff]
  %v76 = vld [vmem:[%s0 + $0x198] sm:$0xff]
  %v77 = vld [vmem:[%s0 + $0x1a0] sm:$0xf]
  %v78 = vld [vmem:[%s0 + $0x1a4] sm:$0xff]
  %v79 = vld [vmem:[%s0 + $0x1ac] sm:$0xff]
  %v80 = vld [vmem:[%s0 + $0x1b4] sm:$0xf]
  %v81 = vld [vmem:[%s0 + $0x1b8] sm:$0xff]
  %v82 = vld [vmem:[%s0 + $0x1c0] sm:$0xff]
  %v83 = vld [vmem:[%s0 + $0x1c8] sm:$0xf]
  %v84 = vld [vmem:[%s0 + $0x1cc] sm:$0xff]
  %v85 = vld [vmem:[%s0 + $0x1d4] sm:$0xff]
  %v86 = vld [vmem:[%s0 + $0x1dc] sm:$0xf]
  %v87 = vld [vmem:[%s0 + $0x1e0] sm:$0xff]
  %v88 = vld [vmem:[%s0 + $0x1e8] sm:$0xff]
  %v89 = vld [vmem:[%s0 + $0x1f0] sm:$0xf]
  %v90 = vld [vmem:[%s0 + $0x1f4] sm:$0xff]
  %v91 = vld [vmem:[%s0 + $0x1fc] sm:$0xff]
  %v92 = vld [vmem:[%s0 + $0x204] sm:$0xf]
  %v93 = vld [vmem:[%s0 + $0x208] sm:$0xff]
  %v94 = vld [vmem:[%s0 + $0x210] sm:$0xff]
  %v95 = vld [vmem:[%s0 + $0x218] sm:$0xf]
  %v96 = vld [vmem:[%s0 + $0x21c] sm:$0xff]
  %v97 = vld [vmem:[%s0 + $0x224] sm:$0xff]
  %v98 = vld [vmem:[%s0 + $0x22c] sm:$0xf]
  %v99 = vld [vmem:[%s0 + $0x230] sm:$0xff]
  %v100 = vld [vmem:[%s0 + $0x238] sm:$0xff]
  %v101 = vld [vmem:[%s0 + $0x240] sm:$0xf]
  %v102 = vld [vmem:[%s0 + $0x244] sm:$0xff]
  %v103 = vld [vmem:[%s0 + $0x24c] sm:$0xff]
  %v104 = vld [vmem:[%s0 + $0x254] sm:$0xf]
  %v105 = vld [vmem:[%s0 + $0x258] sm:$0xff]
  %v106 = vld [vmem:[%s0 + $0x260] sm:$0xff]
  %v107 = vld [vmem:[%s0 + $0x268] sm:$0xf]
  %v108 = vld [vmem:[%s0 + $0x26c] sm:$0xff]
  %v109 = vld [vmem:[%s0 + $0x274] sm:$0xff]
  %v110 = vld [vmem:[%s0 + $0x27c] sm:$0xf]
  %v111 = vld [vmem:[%s0 + $0x280] sm:$0xff]
  %v112 = vld [vmem:[%s0 + $0x288] sm:$0xff]
  %v113 = vld [vmem:[%s0 + $0x290] sm:$0xf]
  %v114 = vld [vmem:[%s0 + $0x294] sm:$0xff]
  %v115 = vld [vmem:[%s0 + $0x29c] sm:$0xff]
  %v116 = vld [vmem:[%s0 + $0x2a4] sm:$0xf]
  %v117 = vld [vmem:[%s0 + $0x2a8] sm:$0xff]
  %v118 = vld [vmem:[%s0 + $0x2b0] sm:$0xff]
  %v119 = vld [vmem:[%s0 + $0x2b8] sm:$0xf]
  %v120 = vld [vmem:[%s0 + $0x2bc] sm:$0xff]
  %v121 = vld [vmem:[%s0 + $0x2c4] sm:$0xff]
  %v122 = vld [vmem:[%s0 + $0x2cc] sm:$0xf]
  %v123 = vld [vmem:[%s0 + $0x2d0] sm:$0xff]
  %v124 = vld [vmem:[%s0 + $0x2d8] sm:$0xff]
  %v125 = vld [vmem:[%s0 + $0x2e0] sm:$0xf]
  %v126 = vld [vmem:[%s0 + $0x2e4] sm:$0xff]
  %v127 = vld [vmem:[%s0 + $0x2ec] sm:$0xff]
  %v128 = vld [vmem:[%s0 + $0x2f4] sm:$0xf]
  %v129 = vld [vmem:[%s0 + $0x2f8] sm:$0xff]
  %v130 = vld [vmem:[%s0 + $0x300] sm:$0xff]
  %v131 = vld [vmem:[%s0 + $0x308] sm:$0xf]
  %v132 = vld [vmem:[%s0 + $0x30c] sm:$0xff]
  %v133 = vld [vmem:[%s0 + $0x314] sm:$0xff]
  %v134 = vld [vmem:[%s0 + $0x31c] sm:$0xf]
  %v135 = vld [vmem:[%s0 + $0x320] sm:$0xff]
  %v136 = vld [vmem:[%s0 + $0x328] sm:$0xff]
  %v137 = vld [vmem:[%s0 + $0x330] sm:$0xf]
  %v138 = vld [vmem:[%s0 + $0x334] sm:$0xff]
  %v139 = vld [vmem:[%s0 + $0x33c] sm:$0xff]
  %v140 = vld [vmem:[%s0 + $0x344] sm:$0xf]
  %v141 = vld [vmem:[%s0 + $0x348] sm:$0xff]
  %v142 = vld [vmem:[%s0 + $0x350] sm:$0xff]
  %v143 = vld [vmem:[%s0 + $0x358] sm:$0xf]
  %v144 = vld [vmem:[%s0 + $0x35c] sm:$0xff]
  %v145 = vld [vmem:[%s0 + $0x364] sm:$0xff]
  %v146 = vld [vmem:[%s0 + $0x36c] sm:$0xf]
  %v147 = vld [vmem:[%s0 + $0x370] sm:$0xff]
  %v148 = vld [vmem:[%s0 + $0x378] sm:$0xff]
  %v149 = vld [vmem:[%s0 + $0x380] sm:$0xf]
  %v150 = vld [vmem:[%s0 + $0x384] sm:$0xff]
  %v151 = vld [vmem:[%s0 + $0x38c] sm:$0xff]
  %v152 = vld [vmem:[%s0 + $0x394] sm:$0xf]
  %v153 = vld [vmem:[%s0 + $0x398] sm:$0xff]
  %v154 = vld [vmem:[%s0 + $0x3a0] sm:$0xff]
  %v155 = vld [vmem:[%s0 + $0x3a8] sm:$0xf]
  %v156 = vld [vmem:[%s0 + $0x3ac] sm:$0xff]
  %v157 = vld [vmem:[%s0 + $0x3b4] sm:$0xff]
  %v158 = vld [vmem:[%s0 + $0x3bc] sm:$0xf]
  %v159 = vld [vmem:[%s0 + $0x3c0] sm:$0xff]
  %v160 = vld [vmem:[%s0 + $0x3c8] sm:$0xff]
  %v161 = vld [vmem:[%s0 + $0x3d0] sm:$0xf]
  %v162 = vld [vmem:[%s0 + $0x3d4] sm:$0xff]
  %v163 = vld [vmem:[%s0 + $0x3dc] sm:$0xff]
  %v164 = vld [vmem:[%s0 + $0x3e4] sm:$0xf]
  %v165 = vld [vmem:[%s0 + $0x3e8] sm:$0xff]
  %v166 = vld [vmem:[%s0 + $0x3f0] sm:$0xff]
  %v167 = vld [vmem:[%s0 + $0x3f8] sm:$0xf]
  %v168 = vld [vmem:[%s0 + $0x3fc] sm:$0xff]
  %v169 = vld [vmem:[%s0 + $0x404] sm:$0xff]
  %v170 = vld [vmem:[%s0 + $0x40c] sm:$0xf]
  %v171 = vld [vmem:[%s1] sm:$0xf]
  %v172 = vld [vmem:[%s1 + $0x4] sm:$0xf]
  %v173 = vld [vmem:[%s1 + $0x8] sm:$0xf]
  %v174 = vld [vmem:[%s1 + $0xc] sm:$0xf]
  %v175 = vld [vmem:[%s1 + $0x10] sm:$0xf]
  %v176 = vld [vmem:[%s1 + $0x14] sm:$0xf]
  %v177 = vld [vmem:[%s1 + $0x18] sm:$0xf]
  %v178 = vld [vmem:[%s1 + $0x1c] sm:$0xf]
  %v179 = vld [vmem:[%s1 + $0x20] sm:$0xf]
  %v180 = vld [vmem:[%s1 + $0x24] sm:$0xf]
  %v181 = vld [vmem:[%s1 + $0x28] sm:$0xf]
  %v182 = vld [vmem:[%s1 + $0x2c] sm:$0xf]
  %v183 = vld [vmem:[%s1 + $0x30] sm:$0xf]
  %v184 = vld [vmem:[%s1 + $0x34] sm:$0xf]
  %v185 = vld [vmem:[%s1 + $0x38] sm:$0xf]
  %v186 = vld [vmem:[%s1 + $0x3c] sm:$0xf]
  %v187 = vld [vmem:[%s1 + $0x40] sm:$0xf]
  %v188 = vld [vmem:[%s1 + $0x44] sm:$0xf]
  %v189 = vld [vmem:[%s1 + $0x48] sm:$0xf]
  %v190 = vld [vmem:[%s1 + $0x4c] sm:$0xf]
  %v191 = vld [vmem:[%s1 + $0x50] sm:$0xf]
  %v192 = vld [vmem:[%s1 + $0x54] sm:$0xf]
  %v193 = vld [vmem:[%s1 + $0x58] sm:$0xf]
  %v194 = vld [vmem:[%s1 + $0x5c] sm:$0xf]
  %v195 = vld [vmem:[%s1 + $0x60] sm:$0xf]
  %v196 = vld [vmem:[%s1 + $0x64] sm:$0xf]
  %v197 = vld [vmem:[%s1 + $0x68] sm:$0xf]
  %v198 = vld [vmem:[%s1 + $0x6c] sm:$0xf]
  %v199 = vld [vmem:[%s1 + $0x70] sm:$0xf]
  %v200 = vld [vmem:[%s1 + $0x74] sm:$0xf]
  %v201 = vld [vmem:[%s1 + $0x78] sm:$0xf]
  %v202 = vld [vmem:[%s1 + $0x7c] sm:$0xf]
  %v203 = vld [vmem:[%s1 + $0x80] sm:$0xf]
  %v204 = vld [vmem:[%s1 + $0x84] sm:$0xf]
  %v205 = vld [vmem:[%s1 + $0x88] sm:$0xf]
  %v206 = vld [vmem:[%s1 + $0x8c] sm:$0xf]
  %v207 = vld [vmem:[%s1 + $0x90] sm:$0xf]
  %v208 = vld [vmem:[%s1 + $0x94] sm:$0xf]
  %v209 = vld [vmem:[%s1 + $0x98] sm:$0xf]
  %v210 = vld [vmem:[%s1 + $0x9c] sm:$0xf]
  %v211 = vld [vmem:[%s1 + $0xa0] sm:$0xf]
  %v212 = vld [vmem:[%s1 + $0xa4] sm:$0xf]
  %v213 = vld [vmem:[%s1 + $0xa8] sm:$0xf]
  %v214 = vld [vmem:[%s1 + $0xac] sm:$0xf]
  %v215 = vld [vmem:[%s1 + $0xb0] sm:$0xf]
  %v216 = vld [vmem:[%s1 + $0xb4] sm:$0xf]
  %v217 = vld [vmem:[%s1 + $0xb8] sm:$0xf]
  %v218 = vld [vmem:[%s1 + $0xbc] sm:$0xf]
  %v219 = vld [vmem:[%s1 + $0xc0] sm:$0xf]
  %v220 = vld [vmem:[%s1 + $0xc4] sm:$0xf]
  %v221 = vld [vmem:[%s1 + $0xc8] sm:$0xf]
  %v222 = vld [vmem:[%s1 + $0xcc] sm:$0xf]
  %v223 = vld [vmem:[%s1 + $0xd0] sm:$0xf]
  %v224 = vld [vmem:[%s1 + $0xd4] sm:$0xf]
  %v225 = vld [vmem:[%s1 + $0xd8] sm:$0xf]
  %v226 = vld [vmem:[%s1 + $0xdc] sm:$0xf]
  %v227 = vld [vmem:[%s1 + $0xe0] sm:$0xf]
  %v228 = vld [vmem:[%s1 + $0xe4] sm:$0xf]
  %v229 = vld [vmem:[%s1 + $0xe8] sm:$0xf]
  %v230 = vld [vmem:[%s1 + $0xec] sm:$0xf]
  %v231 = vld [vmem:[%s1 + $0xf0] sm:$0xf]
  %v232 = vld [vmem:[%s1 + $0xf4] sm:$0xf]
  %v233 = vld [vmem:[%s1 + $0xf8] sm:$0xf]
  %v234 = vld [vmem:[%s1 + $0xfc] sm:$0xf]
  %v235 = vld [vmem:[%s1 + $0x100] sm:$0xf]
  %v236 = vld [vmem:[%s1 + $0x104] sm:$0xf]
  %v237 = vld [vmem:[%s1 + $0x108] sm:$0xf]
  %v238 = vld [vmem:[%s1 + $0x10c] sm:$0xf]
  %v239 = vld [vmem:[%s1 + $0x110] sm:$0xf]
  %v240 = vld [vmem:[%s1 + $0x114] sm:$0xf]
  %v241 = vld [vmem:[%s1 + $0x118] sm:$0xf]
  %v242 = vld [vmem:[%s1 + $0x11c] sm:$0xf]
  %v399 = vunpack.c.l.b16 %v15
  %v400 = vunpack.c.h.b16 %v15
  %v401 = vunpack.c.l.b16 %v16
  %v402 = vunpack.c.h.b16 %v16
  %v403 = vunpack.c.l.b16 %v17
  %v404 = vunpack.c.l.b16 %v18
  %v405 = vunpack.c.h.b16 %v18
  %v406 = vunpack.c.l.b16 %v19
  %v407 = vunpack.c.h.b16 %v19
  %v408 = vunpack.c.l.b16 %v20
  %v409 = vunpack.c.l.b16 %v21
  %v410 = vunpack.c.h.b16 %v21
  %v411 = vunpack.c.l.b16 %v22
  %v412 = vunpack.c.h.b16 %v22
  %v413 = vunpack.c.l.b16 %v23
  %v414 = vunpack.c.l.b16 %v24
  %v415 = vunpack.c.h.b16 %v24
  %v416 = vunpack.c.l.b16 %v25
  %v417 = vunpack.c.h.b16 %v25
  %v418 = vunpack.c.l.b16 %v26
  %v419 = vunpack.c.l.b16 %v27
  %v420 = vunpack.c.h.b16 %v27
  %v421 = vunpack.c.l.b16 %v28
  %v422 = vunpack.c.h.b16 %v28
  %v423 = vunpack.c.l.b16 %v29
  %v424 = vunpack.c.l.b16 %v30
  %v425 = vunpack.c.h.b16 %v30
  %v426 = vunpack.c.l.b16 %v31
  %v427 = vunpack.c.h.b16 %v31
  %v428 = vunpack.c.l.b16 %v32
  %v429 = vunpack.c.l.b16 %v33
  %v430 = vunpack.c.h.b16 %v33
  %v431 = vunpack.c.l.b16 %v34
  %v432 = vunpack.c.h.b16 %v34
  %v433 = vunpack.c.l.b16 %v35
  %v434 = vunpack.c.l.b16 %v36
  %v435 = vunpack.c.h.b16 %v36
  %v436 = vunpack.c.l.b16 %v37
  %v437 = vunpack.c.h.b16 %v37
  %v438 = vunpack.c.l.b16 %v38
  %v439 = vunpack.c.l.b16 %v39
  %v440 = vunpack.c.h.b16 %v39
  %v441 = vunpack.c.l.b16 %v40
  %v442 = vunpack.c.h.b16 %v40
  %v443 = vunpack.c.l.b16 %v41
  %v444 = vunpack.c.l.b16 %v42
  %v445 = vunpack.c.h.b16 %v42
  %v446 = vunpack.c.l.b16 %v43
  %v447 = vunpack.c.h.b16 %v43
  %v448 = vunpack.c.l.b16 %v44
  %v449 = vunpack.c.l.b16 %v45
  %v450 = vunpack.c.h.b16 %v45
  %v451 = vunpack.c.l.b16 %v46
  %v452 = vunpack.c.h.b16 %v46
  %v453 = vunpack.c.l.b16 %v47
  %v454 = vunpack.c.l.b16 %v48
  %v455 = vunpack.c.h.b16 %v48
  %v456 = vunpack.c.l.b16 %v49
  %v457 = vunpack.c.h.b16 %v49
  %v458 = vunpack.c.l.b16 %v50
  %v459 = vunpack.c.l.b16 %v51
  %v460 = vunpack.c.h.b16 %v51
  %v461 = vunpack.c.l.b16 %v52
  %v462 = vunpack.c.h.b16 %v52
  %v463 = vunpack.c.l.b16 %v53
  %v464 = vunpack.c.l.b16 %v54
  %v465 = vunpack.c.h.b16 %v54
  %v466 = vunpack.c.l.b16 %v55
  %v467 = vunpack.c.h.b16 %v55
  %v468 = vunpack.c.l.b16 %v56
  %v469 = vunpack.c.l.b16 %v57
  %v470 = vunpack.c.h.b16 %v57
  %v471 = vunpack.c.l.b16 %v58
  %v472 = vunpack.c.h.b16 %v58
  %v473 = vunpack.c.l.b16 %v59
  %v474 = vunpack.c.l.b16 %v60
  %v475 = vunpack.c.h.b16 %v60
  %v476 = vunpack.c.l.b16 %v61
  %v477 = vunpack.c.h.b16 %v61
  %v478 = vunpack.c.l.b16 %v62
  %v479 = vunpack.c.l.b16 %v63
  %v480 = vunpack.c.h.b16 %v63
  %v481 = vunpack.c.l.b16 %v64
  %v482 = vunpack.c.h.b16 %v64
  %v483 = vunpack.c.l.b16 %v65
  %v484 = vunpack.c.l.b16 %v66
  %v485 = vunpack.c.h.b16 %v66
  %v486 = vunpack.c.l.b16 %v67
  %v487 = vunpack.c.h.b16 %v67
  %v488 = vunpack.c.l.b16 %v68
  %v489 = vunpack.c.l.b16 %v69
  %v490 = vunpack.c.h.b16 %v69
  %v491 = vunpack.c.l.b16 %v70
  %v492 = vunpack.c.h.b16 %v70
  %v493 = vunpack.c.l.b16 %v71
  %v494 = vunpack.c.l.b16 %v72
  %v495 = vunpack.c.h.b16 %v72
  %v496 = vunpack.c.l.b16 %v73
  %v497 = vunpack.c.h.b16 %v73
  %v498 = vunpack.c.l.b16 %v74
  %v499 = vunpack.c.l.b16 %v75
  %v500 = vunpack.c.h.b16 %v75
  %v501 = vunpack.c.l.b16 %v76
  %v502 = vunpack.c.h.b16 %v76
  %v503 = vunpack.c.l.b16 %v77
  %v504 = vunpack.c.l.b16 %v78
  %v505 = vunpack.c.h.b16 %v78
  %v506 = vunpack.c.l.b16 %v79
  %v507 = vunpack.c.h.b16 %v79
  %v508 = vunpack.c.l.b16 %v80
  %v509 = vunpack.c.l.b16 %v81
  %v510 = vunpack.c.h.b16 %v81
  %v511 = vunpack.c.l.b16 %v82
  %v512 = vunpack.c.h.b16 %v82
  %v513 = vunpack.c.l.b16 %v83
  %v514 = vunpack.c.l.b16 %v84
  %v515 = vunpack.c.h.b16 %v84
  %v516 = vunpack.c.l.b16 %v85
  %v517 = vunpack.c.h.b16 %v85
  %v518 = vunpack.c.l.b16 %v86
  %v519 = vunpack.c.l.b16 %v87
  %v520 = vunpack.c.h.b16 %v87
  %v521 = vunpack.c.l.b16 %v88
  %v522 = vunpack.c.h.b16 %v88
  %v523 = vunpack.c.l.b16 %v89
  %v524 = vunpack.c.l.b16 %v90
  %v525 = vunpack.c.h.b16 %v90
  %v526 = vunpack.c.l.b16 %v91
  %v527 = vunpack.c.h.b16 %v91
  %v528 = vunpack.c.l.b16 %v92
  %v529 = vunpack.c.l.b16 %v93
  %v530 = vunpack.c.h.b16 %v93
  %v531 = vunpack.c.l.b16 %v94
  %v532 = vunpack.c.h.b16 %v94
  %v533 = vunpack.c.l.b16 %v95
  %v534 = vunpack.c.l.b16 %v96
  %v535 = vunpack.c.h.b16 %v96
  %v536 = vunpack.c.l.b16 %v97
  %v537 = vunpack.c.h.b16 %v97
  %v538 = vunpack.c.l.b16 %v98
  %v539 = vunpack.c.l.b16 %v99
  %v540 = vunpack.c.h.b16 %v99
  %v541 = vunpack.c.l.b16 %v100
  %v542 = vunpack.c.h.b16 %v100
  %v543 = vunpack.c.l.b16 %v101
  %v544 = vunpack.c.l.b16 %v102
  %v545 = vunpack.c.h.b16 %v102
  %v546 = vunpack.c.l.b16 %v103
  %v547 = vunpack.c.h.b16 %v103
  %v548 = vunpack.c.l.b16 %v104
  %v549 = vunpack.c.l.b16 %v105
  %v550 = vunpack.c.h.b16 %v105
  %v551 = vunpack.c.l.b16 %v106
  %v552 = vunpack.c.h.b16 %v106
  %v553 = vunpack.c.l.b16 %v107
  %v554 = vunpack.c.l.b16 %v108
  %v555 = vunpack.c.h.b16 %v108
  %v556 = vunpack.c.l.b16 %v109
  %v557 = vunpack.c.h.b16 %v109
  %v558 = vunpack.c.l.b16 %v110
  %v559 = vunpack.c.l.b16 %v111
  %v560 = vunpack.c.h.b16 %v111
  %v561 = vunpack.c.l.b16 %v112
  %v562 = vunpack.c.h.b16 %v112
  %v563 = vunpack.c.l.b16 %v113
  %v564 = vunpack.c.l.b16 %v114
  %v565 = vunpack.c.h.b16 %v114
  %v566 = vunpack.c.l.b16 %v115
  %v567 = vunpack.c.h.b16 %v115
  %v568 = vunpack.c.l.b16 %v116
  %v569 = vunpack.c.l.b16 %v117
  %v570 = vunpack.c.h.b16 %v117
  %v571 = vunpack.c.l.b16 %v118
  %v572 = vunpack.c.h.b16 %v118
  %v573 = vunpack.c.l.b16 %v119
  %v574 = vunpack.c.l.b16 %v120
  %v575 = vunpack.c.h.b16 %v120
  %v576 = vunpack.c.l.b16 %v121
  %v577 = vunpack.c.h.b16 %v121
  %v578 = vunpack.c.l.b16 %v122
  %v579 = vunpack.c.l.b16 %v123
  %v580 = vunpack.c.h.b16 %v123
  %v581 = vunpack.c.l.b16 %v124
  %v582 = vunpack.c.h.b16 %v124
  %v583 = vunpack.c.l.b16 %v125
  %v584 = vunpack.c.l.b16 %v126
  %v585 = vunpack.c.h.b16 %v126
  %v586 = vunpack.c.l.b16 %v127
  %v587 = vunpack.c.h.b16 %v127
  %v588 = vunpack.c.l.b16 %v128
  %v589 = vunpack.c.l.b16 %v129
  %v590 = vunpack.c.h.b16 %v129
  %v591 = vunpack.c.l.b16 %v130
  %v592 = vunpack.c.h.b16 %v130
  %v593 = vunpack.c.l.b16 %v131
  %v594 = vunpack.c.l.b16 %v132
  %v595 = vunpack.c.h.b16 %v132
  %v596 = vunpack.c.l.b16 %v133
  %v597 = vunpack.c.h.b16 %v133
  %v598 = vunpack.c.l.b16 %v134
  %v599 = vunpack.c.l.b16 %v135
  %v600 = vunpack.c.h.b16 %v135
  %v601 = vunpack.c.l.b16 %v136
  %v602 = vunpack.c.h.b16 %v136
  %v603 = vunpack.c.l.b16 %v137
  %v604 = vunpack.c.l.b16 %v138
  %v605 = vunpack.c.h.b16 %v138
  %v606 = vunpack.c.l.b16 %v139
  %v607 = vunpack.c.h.b16 %v139
  %v608 = vunpack.c.l.b16 %v140
  %v609 = vunpack.c.l.b16 %v141
  %v610 = vunpack.c.h.b16 %v141
  %v611 = vunpack.c.l.b16 %v142
  %v612 = vunpack.c.h.b16 %v142
  %v613 = vunpack.c.l.b16 %v143
  %v614 = vunpack.c.l.b16 %v144
  %v615 = vunpack.c.h.b16 %v144
  %v616 = vunpack.c.l.b16 %v145
  %v617 = vunpack.c.h.b16 %v145
  %v618 = vunpack.c.l.b16 %v146
  %v619 = vunpack.c.l.b16 %v147
  %v620 = vunpack.c.h.b16 %v147
  %v621 = vunpack.c.l.b16 %v148
  %v622 = vunpack.c.h.b16 %v148
  %v623 = vunpack.c.l.b16 %v149
  %v624 = vunpack.c.l.b16 %v150
  %v625 = vunpack.c.h.b16 %v150
  %v626 = vunpack.c.l.b16 %v151
  %v627 = vunpack.c.h.b16 %v151
  %v628 = vunpack.c.l.b16 %v152
  %v629 = vunpack.c.l.b16 %v153
  %v630 = vunpack.c.h.b16 %v153
  %v631 = vunpack.c.l.b16 %v154
  %v632 = vunpack.c.h.b16 %v154
  %v633 = vunpack.c.l.b16 %v155
  %v634 = vunpack.c.l.b16 %v156
  %v635 = vunpack.c.h.b16 %v156
  %v636 = vunpack.c.l.b16 %v157
  %v637 = vunpack.c.h.b16 %v157
  %v638 = vunpack.c.l.b16 %v158
  %v639 = vunpack.c.l.b16 %v159
  %v640 = vunpack.c.h.b16 %v159
  %v641 = vunpack.c.l.b16 %v160
  %v642 = vunpack.c.h.b16 %v160
  %v643 = vunpack.c.l.b16 %v161
  %v644 = vunpack.c.l.b16 %v162
  %v645 = vunpack.c.h.b16 %v162
  %v646 = vunpack.c.l.b16 %v163
  %v647 = vunpack.c.h.b16 %v163
  %v648 = vunpack.c.l.b16 %v164
  %v649 = vunpack.c.l.b16 %v165
  %v650 = vunpack.c.h.b16 %v165
  %v651 = vunpack.c.l.b16 %v166
  %v652 = vunpack.c.h.b16 %v166
  %v653 = vunpack.c.l.b16 %v167
  %v654 = vunpack.c.l.b16 %v168
  %v655 = vunpack.c.h.b16 %v168
  %v656 = vunpack.c.l.b16 %v169
  %v657 = vunpack.c.h.b16 %v169
  %v658 = vunpack.c.l.b16 %v170
  %v659 = vpack.c.b16 %v404, %v399
  %v660 = vpack.c.b16 %v405, %v400
  %v661 = vpack.c.b16 %v406, %v401
  %v662 = vpack.c.b16 %v407, %v402
  %v663 = vpack.c.b16 %v408, %v403
  %v664 = vpack.c.b16 %v414, %v409
  %v665 = vpack.c.b16 %v415, %v410
  %v666 = vpack.c.b16 %v416, %v411
  %v667 = vpack.c.b16 %v417, %v412
  %v668 = vpack.c.b16 %v418, %v413
  %v669 = vpack.c.b16 %v424, %v419
  %v670 = vpack.c.b16 %v425, %v420
  %v671 = vpack.c.b16 %v426, %v421
  %v672 = vpack.c.b16 %v427, %v422
  %v673 = vpack.c.b16 %v428, %v423
  %v674 = vpack.c.b16 %v434, %v429
  %v675 = vpack.c.b16 %v435, %v430
  %v676 = vpack.c.b16 %v436, %v431
  %v677 = vpack.c.b16 %v437, %v432
  %v678 = vpack.c.b16 %v438, %v433
  %v679 = vpack.c.b16 %v444, %v439
  %v680 = vpack.c.b16 %v445, %v440
  %v681 = vpack.c.b16 %v446, %v441
  %v682 = vpack.c.b16 %v447, %v442
  %v683 = vpack.c.b16 %v448, %v443
  %v684 = vpack.c.b16 %v454, %v449
  %v685 = vpack.c.b16 %v455, %v450
  %v686 = vpack.c.b16 %v456, %v451
  %v687 = vpack.c.b16 %v457, %v452
  %v688 = vpack.c.b16 %v458, %v453
  %v689 = vpack.c.b16 %v464, %v459
  %v690 = vpack.c.b16 %v465, %v460
  %v691 = vpack.c.b16 %v466, %v461
  %v692 = vpack.c.b16 %v467, %v462
  %v693 = vpack.c.b16 %v468, %v463
  %v694 = vpack.c.b16 %v474, %v469
  %v695 = vpack.c.b16 %v475, %v470
  %v696 = vpack.c.b16 %v476, %v471
  %v697 = vpack.c.b16 %v477, %v472
  %v698 = vpack.c.b16 %v478, %v473
  %v699 = vpack.c.b16 %v484, %v479
  %v700 = vpack.c.b16 %v485, %v480
  %v701 = vpack.c.b16 %v486, %v481
  %v702 = vpack.c.b16 %v487, %v482
  %v703 = vpack.c.b16 %v488, %v483
  %v704 = vpack.c.b16 %v494, %v489
  %v705 = vpack.c.b16 %v495, %v490
  %v706 = vpack.c.b16 %v496, %v491
  %v707 = vpack.c.b16 %v497, %v492
  %v708 = vpack.c.b16 %v498, %v493
  %v709 = vpack.c.b16 %v504, %v499
  %v710 = vpack.c.b16 %v505, %v500
  %v711 = vpack.c.b16 %v506, %v501
  %v712 = vpack.c.b16 %v507, %v502
  %v713 = vpack.c.b16 %v508, %v503
  %v714 = vpack.c.b16 %v514, %v509
  %v715 = vpack.c.b16 %v515, %v510
  %v716 = vpack.c.b16 %v516, %v511
  %v717 = vpack.c.b16 %v517, %v512
  %v718 = vpack.c.b16 %v518, %v513
  %v719 = vpack.c.b16 %v524, %v519
  %v720 = vpack.c.b16 %v525, %v520
  %v721 = vpack.c.b16 %v526, %v521
  %v722 = vpack.c.b16 %v527, %v522
  %v723 = vpack.c.b16 %v528, %v523
  %v724 = vpack.c.b16 %v534, %v529
  %v725 = vpack.c.b16 %v535, %v530
  %v726 = vpack.c.b16 %v536, %v531
  %v727 = vpack.c.b16 %v537, %v532
  %v728 = vpack.c.b16 %v538, %v533
  %v729 = vpack.c.b16 %v544, %v539
  %v730 = vpack.c.b16 %v545, %v540
  %v731 = vpack.c.b16 %v546, %v541
  %v732 = vpack.c.b16 %v547, %v542
  %v733 = vpack.c.b16 %v548, %v543
  %v734 = vpack.c.b16 %v554, %v549
  %v735 = vpack.c.b16 %v555, %v550
  %v736 = vpack.c.b16 %v556, %v551
  %v737 = vpack.c.b16 %v557, %v552
  %v738 = vpack.c.b16 %v558, %v553
  %v739 = vpack.c.b16 %v564, %v559
  %v740 = vpack.c.b16 %v565, %v560
  %v741 = vpack.c.b16 %v566, %v561
  %v742 = vpack.c.b16 %v567, %v562
  %v743 = vpack.c.b16 %v568, %v563
  %v744 = vpack.c.b16 %v574, %v569
  %v745 = vpack.c.b16 %v575, %v570
  %v746 = vpack.c.b16 %v576, %v571
  %v747 = vpack.c.b16 %v577, %v572
  %v748 = vpack.c.b16 %v578, %v573
  %v749 = vpack.c.b16 %v584, %v579
  %v750 = vpack.c.b16 %v585, %v580
  %v751 = vpack.c.b16 %v586, %v581
  %v752 = vpack.c.b16 %v587, %v582
  %v753 = vpack.c.b16 %v588, %v583
  %v754 = vpack.c.b16 %v594, %v589
  %v755 = vpack.c.b16 %v595, %v590
  %v756 = vpack.c.b16 %v596, %v591
  %v757 = vpack.c.b16 %v597, %v592
  %v758 = vpack.c.b16 %v598, %v593
  %v759 = vpack.c.b16 %v604, %v599
  %v760 = vpack.c.b16 %v605, %v600
  %v761 = vpack.c.b16 %v606, %v601
  %v762 = vpack.c.b16 %v607, %v602
  %v763 = vpack.c.b16 %v608, %v603
  %v764 = vpack.c.b16 %v614, %v609
  %v765 = vpack.c.b16 %v615, %v610
  %v766 = vpack.c.b16 %v616, %v611
  %v767 = vpack.c.b16 %v617, %v612
  %v768 = vpack.c.b16 %v618, %v613
  %v769 = vpack.c.b16 %v624, %v619
  %v770 = vpack.c.b16 %v625, %v620
  %v771 = vpack.c.b16 %v626, %v621
  %v772 = vpack.c.b16 %v627, %v622
  %v773 = vpack.c.b16 %v628, %v623
  %v774 = vpack.c.b16 %v634, %v629
  %v775 = vpack.c.b16 %v635, %v630
  %v776 = vpack.c.b16 %v636, %v631
  %v777 = vpack.c.b16 %v637, %v632
  %v778 = vpack.c.b16 %v638, %v633
  %v779 = vpack.c.b16 %v644, %v639
  %v780 = vpack.c.b16 %v645, %v640
  %v781 = vpack.c.b16 %v646, %v641
  %v782 = vpack.c.b16 %v647, %v642
  %v783 = vpack.c.b16 %v648, %v643
  %v784 = vpack.c.b16 %v654, %v649
  %v785 = vpack.c.b16 %v655, %v650
  %v786 = vpack.c.b16 %v656, %v651
  %v787 = vpack.c.b16 %v657, %v652
  %v788 = vpack.c.b16 %v658, %v653
  %v965 = vunpack.c.l.b16 %v171
  %v966 = vunpack.c.l.b16 %v172
  %v967 = vunpack.c.l.b16 %v173
  %v968 = vunpack.c.l.b16 %v174
  %v969 = vunpack.c.l.b16 %v175
  %v970 = vunpack.c.l.b16 %v176
  %v971 = vunpack.c.l.b16 %v177
  %v972 = vunpack.c.l.b16 %v178
  %v973 = vunpack.c.l.b16 %v179
  %v974 = vunpack.c.l.b16 %v180
  %v975 = vunpack.c.l.b16 %v181
  %v976 = vunpack.c.l.b16 %v182
  %v977 = vunpack.c.l.b16 %v183
  %v978 = vunpack.c.l.b16 %v184
  %v979 = vunpack.c.l.b16 %v185
  %v980 = vunpack.c.l.b16 %v186
  %v981 = vunpack.c.l.b16 %v187
  %v982 = vunpack.c.l.b16 %v188
  %v983 = vunpack.c.l.b16 %v189
  %v984 = vunpack.c.l.b16 %v190
  %v985 = vunpack.c.l.b16 %v191
  %v986 = vunpack.c.l.b16 %v192
  %v987 = vunpack.c.l.b16 %v193
  %v988 = vunpack.c.l.b16 %v194
  %v989 = vunpack.c.l.b16 %v195
  %v990 = vunpack.c.l.b16 %v196
  %v991 = vunpack.c.l.b16 %v197
  %v992 = vunpack.c.l.b16 %v198
  %v993 = vunpack.c.l.b16 %v199
  %v994 = vunpack.c.l.b16 %v200
  %v995 = vunpack.c.l.b16 %v201
  %v996 = vunpack.c.l.b16 %v202
  %v997 = vunpack.c.l.b16 %v203
  %v998 = vunpack.c.l.b16 %v204
  %v999 = vunpack.c.l.b16 %v205
  %v1000 = vunpack.c.l.b16 %v206
  %v1001 = vunpack.c.l.b16 %v207
  %v1002 = vunpack.c.l.b16 %v208
  %v1003 = vunpack.c.l.b16 %v209
  %v1004 = vunpack.c.l.b16 %v210
  %v1005 = vunpack.c.l.b16 %v211
  %v1006 = vunpack.c.l.b16 %v212
  %v1007 = vunpack.c.l.b16 %v213
  %v1008 = vunpack.c.l.b16 %v214
  %v1009 = vunpack.c.l.b16 %v215
  %v1010 = vunpack.c.l.b16 %v216
  %v1011 = vunpack.c.l.b16 %v217
  %v1012 = vunpack.c.l.b16 %v218
  %v1013 = vunpack.c.l.b16 %v219
  %v1014 = vunpack.c.l.b16 %v220
  %v1015 = vunpack.c.l.b16 %v221
  %v1016 = vunpack.c.l.b16 %v222
  %v1017 = vunpack.c.l.b16 %v223
  %v1018 = vunpack.c.l.b16 %v224
  %v1019 = vunpack.c.l.b16 %v225
  %v1020 = vunpack.c.l.b16 %v226
  %v1021 = vunpack.c.l.b16 %v227
  %v1022 = vunpack.c.l.b16 %v228
  %v1023 = vunpack.c.l.b16 %v229
  %v1024 = vunpack.c.l.b16 %v230
  %v1025 = vunpack.c.l.b16 %v231
  %v1026 = vunpack.c.l.b16 %v232
  %v1027 = vunpack.c.l.b16 %v233
  %v1028 = vunpack.c.l.b16 %v234
  %v1029 = vunpack.c.l.b16 %v235
  %v1030 = vunpack.c.l.b16 %v236
  %v1031 = vunpack.c.l.b16 %v237
  %v1032 = vunpack.c.l.b16 %v238
  %v1033 = vunpack.c.l.b16 %v239
  %v1034 = vunpack.c.l.b16 %v240
  %v1035 = vunpack.c.l.b16 %v241
  %v1036 = vunpack.c.l.b16 %v242
  %v1037 = vpack.c.b16 %v966, %v965
  %v1038 = vpack.c.b16 %v968, %v967
  %v1039 = vpack.c.b16 %v970, %v969
  %v1040 = vpack.c.b16 %v972, %v971
  %v1041 = vpack.c.b16 %v974, %v973
  %v1042 = vpack.c.b16 %v976, %v975
  %v1043 = vpack.c.b16 %v978, %v977
  %v1044 = vpack.c.b16 %v980, %v979
  %v1045 = vpack.c.b16 %v982, %v981
  %v1046 = vpack.c.b16 %v984, %v983
  %v1047 = vpack.c.b16 %v986, %v985
  %v1048 = vpack.c.b16 %v988, %v987
  %v1049 = vpack.c.b16 %v990, %v989
  %v1050 = vpack.c.b16 %v992, %v991
  %v1051 = vpack.c.b16 %v994, %v993
  %v1052 = vpack.c.b16 %v996, %v995
  %v1053 = vpack.c.b16 %v998, %v997
  %v1054 = vpack.c.b16 %v1000, %v999
  %v1055 = vpack.c.b16 %v1002, %v1001
  %v1056 = vpack.c.b16 %v1004, %v1003
  %v1057 = vpack.c.b16 %v1006, %v1005
  %v1058 = vpack.c.b16 %v1008, %v1007
  %v1059 = vpack.c.b16 %v1010, %v1009
  %v1060 = vpack.c.b16 %v1012, %v1011
  %v1061 = vpack.c.b16 %v1014, %v1013
  %v1062 = vpack.c.b16 %v1016, %v1015
  %v1063 = vpack.c.b16 %v1018, %v1017
  %v1064 = vpack.c.b16 %v1020, %v1019
  %v1065 = vpack.c.b16 %v1022, %v1021
  %v1066 = vpack.c.b16 %v1024, %v1023
  %v1067 = vpack.c.b16 %v1026, %v1025
  %v1068 = vpack.c.b16 %v1028, %v1027
  %v1069 = vpack.c.b16 %v1030, %v1029
  %v1070 = vpack.c.b16 %v1032, %v1031
  %v1071 = vpack.c.b16 %v1034, %v1033
  %v1072 = vpack.c.b16 %v1036, %v1035
  %vm1109 = vcmask 523264
  %v1111 = vsel %vm1109, %v663, 0
  %v1114 = vsel %vm1109, %v668, 0
  %v1117 = vsel %vm1109, %v673, 0
  %v1120 = vsel %vm1109, %v678, 0
  %v1123 = vsel %vm1109, %v683, 0
  %v1126 = vsel %vm1109, %v688, 0
  %v1129 = vsel %vm1109, %v693, 0
  %v1132 = vsel %vm1109, %v698, 0
  %v1135 = vsel %vm1109, %v703, 0
  %v1138 = vsel %vm1109, %v708, 0
  %v1141 = vsel %vm1109, %v713, 0
  %v1144 = vsel %vm1109, %v718, 0
  %v1147 = vsel %vm1109, %v723, 0
  %v1150 = vsel %vm1109, %v728, 0
  %v1153 = vsel %vm1109, %v733, 0
  %v1156 = vsel %vm1109, %v738, 0
  %v1159 = vsel %vm1109, %v743, 0
  %v1162 = vsel %vm1109, %v748, 0
  %v1165 = vsel %vm1109, %v753, 0
  %v1168 = vsel %vm1109, %v758, 0
  %v1171 = vsel %vm1109, %v763, 0
  %v1174 = vsel %vm1109, %v768, 0
  %v1177 = vsel %vm1109, %v773, 0
  %v1180 = vsel %vm1109, %v778, 0
  %v1183 = vsel %vm1109, %v783, 0
  %v1186 = vsel %vm1109, %v788, 0
  %1188 = vmatprep.subr.bf16.mxu0 0
  %1189 = vmatpush1.bf16.msra.mxu0 %v1037
  %1190 = vmatprep.subr.bf16.mxu0 0
  %1191 = vmatpush1.bf16.msra.mxu0 %v1038
  %1192 = vmatprep.subr.bf16.mxu0 0
  %1193 = vmatpush1.bf16.msra.mxu0 %v1039
  %1194 = vmatprep.subr.bf16.mxu0 0
  %1195 = vmatpush1.bf16.msra.mxu0 %v1040
  %1196 = vmatprep.subr.bf16.mxu0 0
  %1197 = vmatpush1.bf16.msra.mxu0 %v1041
  %1198 = vmatprep.subr.bf16.mxu0 0
  %1199 = vmatpush1.bf16.msra.mxu0 %v1042
  %1200 = vmatprep.subr.bf16.mxu0 0
  %1201 = vmatpush1.bf16.msra.mxu0 %v1043
  %1202 = vmatprep.subr.bf16.mxu0 0
  %1203 = vmatpush1.bf16.msra.mxu0 %v1044
  %1204 = vmatprep.subr.bf16.mxu0 0
  %1205 = vmatpush1.bf16.msra.mxu0 %v1045
  %1206 = vmatprep.subr.bf16.mxu0 0
  %1207 = vmatpush1.bf16.msra.mxu0 %v1046
  %1208 = vmatprep.subr.bf16.mxu0 0
  %1209 = vmatpush1.bf16.msra.mxu0 %v1047
  %1210 = vmatprep.subr.bf16.mxu0 0
  %1211 = vmatpush1.bf16.msra.mxu0 %v1048
  %1212 = vmatprep.subr.bf16.mxu0 0
  %1213 = vmatpush1.bf16.msra.mxu0 %v1049
  %1214 = vmatprep.subr.bf16.mxu0 0
  %1215 = vmatpush1.bf16.msra.mxu0 %v1050
  %1216 = vmatprep.subr.bf16.mxu0 0
  %1217 = vmatpush1.bf16.msra.mxu0 %v1051
  %1218 = vmatprep.subr.bf16.mxu0 0
  %1219 = vmatpush1.bf16.msra.mxu0 %v1052
  %1220 = vmatprep.mubr.bf16.mxu0 %v660
  %1221 = vmatmul.mubr.bf16.gmra.mrb[0].mxu0 %v659
  %v1222 = vpop.f32.mrb[0].mxu0
  %v1223 = vadd.f32 0.0, %v1222
  %v1224 = vpop.f32.mrb[0].mxu0
  %v1225 = vpop.f32.mrb[0].mxu0
  %v1226 = vadd.f32 0.0, %v1225
  %v1227 = vpop.f32.mrb[0].mxu0
  %1228 = vmatprep.mubr.bf16.mxu0 %v665
  %1229 = vmatmul.mubr.bf16.gmra.mrb[0].mxu0 %v664
  %v1230 = vpop.f32.mrb[0].mxu0
  %v1231 = vadd.f32 0.0, %v1230
  %v1232 = vpop.f32.mrb[0].mxu0
  %v1233 = vpop.f32.mrb[0].mxu0
  %v1234 = vadd.f32 0.0, %v1233
  %v1235 = vpop.f32.mrb[0].mxu0
  %1236 = vmatprep.mubr.bf16.mxu0 %v670
  %1237 = vmatmul.mubr.bf16.gmra.mrb[0].mxu0 %v669
  %v1238 = vpop.f32.mrb[0].mxu0
  %v1239 = vadd.f32 0.0, %v1238
  %v1240 = vpop.f32.mrb[0].mxu0
  %v1241 = vpop.f32.mrb[0].mxu0
  %v1242 = vadd.f32 0.0, %v1241
  %v1243 = vpop.f32.mrb[0].mxu0
  %1244 = vmatprep.mubr.bf16.mxu0 %v675
  %1245 = vmatmul.mubr.bf16.gmra.mrb[0].mxu0 %v674
  %v1246 = vpop.f32.mrb[0].mxu0
  %v1247 = vadd.f32 0.0, %v1246
  %v1248 = vpop.f32.mrb[0].mxu0
  %v1249 = vpop.f32.mrb[0].mxu0
  %v1250 = vadd.f32 0.0, %v1249
  %v1251 = vpop.f32.mrb[0].mxu0
  %1252 = vmatprep.mubr.bf16.mxu0 %v680
  %1253 = vmatmul.mubr.bf16.gmra.mrb[0].mxu0 %v679
  %v1254 = vpop.f32.mrb[0].mxu0
  %v1255 = vadd.f32 0.0, %v1254
  %v1256 = vpop.f32.mrb[0].mxu0
  %v1257 = vpop.f32.mrb[0].mxu0
  %v1258 = vadd.f32 0.0, %v1257
  %v1259 = vpop.f32.mrb[0].mxu0
  %1260 = vmatprep.mubr.bf16.mxu0 %v685
  %1261 = vmatmul.mubr.bf16.gmra.mrb[0].mxu0 %v684
  %v1262 = vpop.f32.mrb[0].mxu0
  %v1263 = vadd.f32 0.0, %v1262
  %v1264 = vpop.f32.mrb[0].mxu0
  %v1265 = vpop.f32.mrb[0].mxu0
  %v1266 = vadd.f32 0.0, %v1265
  %v1267 = vpop.f32.mrb[0].mxu0
  %1268 = vmatprep.mubr.bf16.mxu0 %v690
  %1269 = vmatmul.mubr.bf16.gmra.mrb[0].mxu0 %v689
  %v1270 = vpop.f32.mrb[0].mxu0
  %v1271 = vadd.f32 0.0, %v1270
  %v1272 = vpop.f32.mrb[0].mxu0
  %v1273 = vpop.f32.mrb[0].mxu0
  %v1274 = vadd.f32 0.0, %v1273
  %v1275 = vpop.f32.mrb[0].mxu0
  %1276 = vmatprep.mubr.bf16.mxu0 %v695
  %1277 = vmatmul.mubr.bf16.gmra.mrb[0].mxu0 %v694
  %v1278 = vpop.f32.mrb[0].mxu0
  %v1279 = vadd.f32 0.0, %v1278
  %v1280 = vpop.f32.mrb[0].mxu0
  %v1281 = vpop.f32.mrb[0].mxu0
  %v1282 = vadd.f32 0.0, %v1281
  %v1283 = vpop.f32.mrb[0].mxu0
  %1284 = vmatprep.mubr.bf16.mxu0 %v700
  %1285 = vmatmul.mubr.bf16.gmra.mrb[0].mxu0 %v699
  %v1286 = vpop.f32.mrb[0].mxu0
  %v1287 = vadd.f32 0.0, %v1286
  %v1288 = vpop.f32.mrb[0].mxu0
  %v1289 = vpop.f32.mrb[0].mxu0
  %v1290 = vadd.f32 0.0, %v1289
  %v1291 = vpop.f32.mrb[0].mxu0
  %1292 = vmatprep.mubr.bf16.mxu0 %v705
  %1293 = vmatmul.mubr.bf16.gmra.mrb[0].mxu0 %v704
  %v1294 = vpop.f32.mrb[0].mxu0
  %v1295 = vadd.f32 0.0, %v1294
  %v1296 = vpop.f32.mrb[0].mxu0
  %v1297 = vpop.f32.mrb[0].mxu0
  %v1298 = vadd.f32 0.0, %v1297
  %v1299 = vpop.f32.mrb[0].mxu0
  %1300 = vmatprep.mubr.bf16.mxu0 %v710
  %1301 = vmatmul.mubr.bf16.gmra.mrb[0].mxu0 %v709
  %v1302 = vpop.f32.mrb[0].mxu0
  %v1303 = vadd.f32 0.0, %v1302
  %v1304 = vpop.f32.mrb[0].mxu0
  %v1305 = vpop.f32.mrb[0].mxu0
  %v1306 = vadd.f32 0.0, %v1305
  %v1307 = vpop.f32.mrb[0].mxu0
  %1308 = vmatprep.mubr.bf16.mxu0 %v715
  %1309 = vmatmul.mubr.bf16.gmra.mrb[0].mxu0 %v714
  %v1310 = vpop.f32.mrb[0].mxu0
  %v1311 = vadd.f32 0.0, %v1310
  %v1312 = vpop.f32.mrb[0].mxu0
  %v1313 = vpop.f32.mrb[0].mxu0
  %v1314 = vadd.f32 0.0, %v1313
  %v1315 = vpop.f32.mrb[0].mxu0
  %1316 = vmatprep.mubr.bf16.mxu0 %v720
  %1317 = vmatmul.mubr.bf16.gmra.mrb[0].mxu0 %v719
  %v1318 = vpop.f32.mrb[0].mxu0
  %v1319 = vadd.f32 0.0, %v1318
  %v1320 = vpop.f32.mrb[0].mxu0
  %v1321 = vpop.f32.mrb[0].mxu0
  %v1322 = vadd.f32 0.0, %v1321
  %v1323 = vpop.f32.mrb[0].mxu0
  %1324 = vmatprep.mubr.bf16.mxu0 %v725
  %1325 = vmatmul.mubr.bf16.gmra.mrb[0].mxu0 %v724
  %v1326 = vpop.f32.mrb[0].mxu0
  %v1327 = vadd.f32 0.0, %v1326
  %v1328 = vpop.f32.mrb[0].mxu0
  %v1329 = vpop.f32.mrb[0].mxu0
  %v1330 = vadd.f32 0.0, %v1329
  %v1331 = vpop.f32.mrb[0].mxu0
  %1332 = vmatprep.mubr.bf16.mxu0 %v730
  %1333 = vmatmul.mubr.bf16.gmra.mrb[0].mxu0 %v729
  %v1334 = vpop.f32.mrb[0].mxu0
  %v1335 = vadd.f32 0.0, %v1334
  %v1336 = vpop.f32.mrb[0].mxu0
  %v1337 = vpop.f32.mrb[0].mxu0
  %v1338 = vadd.f32 0.0, %v1337
  %v1339 = vpop.f32.mrb[0].mxu0
  %1340 = vmatprep.mubr.bf16.mxu0 %v735
  %1341 = vmatmul.mubr.bf16.gmra.mrb[0].mxu0 %v734
  %v1342 = vpop.f32.mrb[0].mxu0
  %v1343 = vadd.f32 0.0, %v1342
  %v1344 = vpop.f32.mrb[0].mxu0
  %v1345 = vpop.f32.mrb[0].mxu0
  %v1346 = vadd.f32 0.0, %v1345
  %v1347 = vpop.f32.mrb[0].mxu0
  %1348 = vmatprep.mubr.bf16.mxu0 %v740
  %1349 = vmatmul.mubr.bf16.gmra.mrb[0].mxu0 %v739
  %v1350 = vpop.f32.mrb[0].mxu0
  %v1351 = vadd.f32 0.0, %v1350
  %v1352 = vpop.f32.mrb[0].mxu0
  %v1353 = vpop.f32.mrb[0].mxu0
  %v1354 = vadd.f32 0.0, %v1353
  %v1355 = vpop.f32.mrb[0].mxu0
  %1356 = vmatprep.mubr.bf16.mxu0 %v745
  %1357 = vmatmul.mubr.bf16.gmra.mrb[0].mxu0 %v744
  %v1358 = vpop.f32.mrb[0].mxu0
  %v1359 = vadd.f32 0.0, %v1358
  %v1360 = vpop.f32.mrb[0].mxu0
  %v1361 = vpop.f32.mrb[0].mxu0
  %v1362 = vadd.f32 0.0, %v1361
  %v1363 = vpop.f32.mrb[0].mxu0
  %1364 = vmatprep.mubr.bf16.mxu0 %v750
  %1365 = vmatmul.mubr.bf16.gmra.mrb[0].mxu0 %v749
  %v1366 = vpop.f32.mrb[0].mxu0
  %v1367 = vadd.f32 0.0, %v1366
  %v1368 = vpop.f32.mrb[0].mxu0
  %v1369 = vpop.f32.mrb[0].mxu0
  %v1370 = vadd.f32 0.0, %v1369
  %v1371 = vpop.f32.mrb[0].mxu0
  %1372 = vmatprep.mubr.bf16.mxu0 %v755
  %1373 = vmatmul.mubr.bf16.gmra.mrb[0].mxu0 %v754
  %v1374 = vpop.f32.mrb[0].mxu0
  %v1375 = vadd.f32 0.0, %v1374
  %v1376 = vpop.f32.mrb[0].mxu0
  %v1377 = vpop.f32.mrb[0].mxu0
  %v1378 = vadd.f32 0.0, %v1377
  %v1379 = vpop.f32.mrb[0].mxu0
  %1380 = vmatprep.mubr.bf16.mxu0 %v760
  %1381 = vmatmul.mubr.bf16.gmra.mrb[0].mxu0 %v759
  %v1382 = vpop.f32.mrb[0].mxu0
  %v1383 = vadd.f32 0.0, %v1382
  %v1384 = vpop.f32.mrb[0].mxu0
  %v1385 = vpop.f32.mrb[0].mxu0
  %v1386 = vadd.f32 0.0, %v1385
  %v1387 = vpop.f32.mrb[0].mxu0
  %1388 = vmatprep.mubr.bf16.mxu0 %v765
  %1389 = vmatmul.mubr.bf16.gmra.mrb[0].mxu0 %v764
  %v1390 = vpop.f32.mrb[0].mxu0
  %v1391 = vadd.f32 0.0, %v1390
  %v1392 = vpop.f32.mrb[0].mxu0
  %v1393 = vpop.f32.mrb[0].mxu0
  %v1394 = vadd.f32 0.0, %v1393
  %v1395 = vpop.f32.mrb[0].mxu0
  %1396 = vmatprep.mubr.bf16.mxu0 %v770
  %1397 = vmatmul.mubr.bf16.gmra.mrb[0].mxu0 %v769
  %v1398 = vpop.f32.mrb[0].mxu0
  %v1399 = vadd.f32 0.0, %v1398
  %v1400 = vpop.f32.mrb[0].mxu0
  %v1401 = vpop.f32.mrb[0].mxu0
  %v1402 = vadd.f32 0.0, %v1401
  %v1403 = vpop.f32.mrb[0].mxu0
  %1404 = vmatprep.mubr.bf16.mxu0 %v775
  %1405 = vmatmul.mubr.bf16.gmra.mrb[0].mxu0 %v774
  %v1406 = vpop.f32.mrb[0].mxu0
  %v1407 = vadd.f32 0.0, %v1406
  %v1408 = vpop.f32.mrb[0].mxu0
  %v1409 = vpop.f32.mrb[0].mxu0
  %v1410 = vadd.f32 0.0, %v1409
  %v1411 = vpop.f32.mrb[0].mxu0
  %1412 = vmatprep.mubr.bf16.mxu0 %v780
  %1413 = vmatmul.mubr.bf16.gmra.mrb[0].mxu0 %v779
  %v1414 = vpop.f32.mrb[0].mxu0
  %v1415 = vadd.f32 0.0, %v1414
  %v1416 = vpop.f32.mrb[0].mxu0
  %v1417 = vpop.f32.mrb[0].mxu0
  %v1418 = vadd.f32 0.0, %v1417
  %v1419 = vpop.f32.mrb[0].mxu0
  %1420 = vmatprep.mubr.bf16.mxu0 %v785
  %1421 = vmatmul.mubr.bf16.gmra.mrb[0].mxu0 %v784
  %v1422 = vpop.f32.mrb[0].mxu0
  %v1423 = vadd.f32 0.0, %v1422
  %v1424 = vpop.f32.mrb[0].mxu0
  %v1425 = vpop.f32.mrb[0].mxu0
  %v1426 = vadd.f32 0.0, %v1425
  %v1427 = vpop.f32.mrb[0].mxu0
  %1428 = vdwg.mxu0
  %1429 = vmatprep.subr.bf16.mxu0 0
  %1430 = vmatpush1.bf16.msra.mxu0 %v1053
  %1431 = vmatprep.subr.bf16.mxu0 0
  %1432 = vmatpush1.bf16.msra.mxu0 %v1054
  %1433 = vmatprep.subr.bf16.mxu0 0
  %1434 = vmatpush1.bf16.msra.mxu0 %v1055
  %1435 = vmatprep.subr.bf16.mxu0 0
  %1436 = vmatpush1.bf16.msra.mxu0 %v1056
  %1437 = vmatprep.subr.bf16.mxu0 0
  %1438 = vmatpush1.bf16.msra.mxu0 %v1057
  %1439 = vmatprep.subr.bf16.mxu0 0
  %1440 = vmatpush1.bf16.msra.mxu0 %v1058
  %1441 = vmatprep.subr.bf16.mxu0 0
  %1442 = vmatpush1.bf16.msra.mxu0 %v1059
  %1443 = vmatprep.subr.bf16.mxu0 0
  %1444 = vmatpush1.bf16.msra.mxu0 %v1060
  %1445 = vmatprep.subr.bf16.mxu0 0
  %1446 = vmatpush1.bf16.msra.mxu0 %v1061
  %1447 = vmatprep.subr.bf16.mxu0 0
  %1448 = vmatpush1.bf16.msra.mxu0 %v1062
  %1449 = vmatprep.subr.bf16.mxu0 0
  %1450 = vmatpush1.bf16.msra.mxu0 %v1063
  %1451 = vmatprep.subr.bf16.mxu0 0
  %1452 = vmatpush1.bf16.msra.mxu0 %v1064
  %1453 = vmatprep.subr.bf16.mxu0 0
  %1454 = vmatpush1.bf16.msra.mxu0 %v1065
  %1455 = vmatprep.subr.bf16.mxu0 0
  %1456 = vmatpush1.bf16.msra.mxu0 %v1066
  %1457 = vmatprep.subr.bf16.mxu0 0
  %1458 = vmatpush1.bf16.msra.mxu0 %v1067
  %1459 = vmatprep.subr.bf16.mxu0 0
  %1460 = vmatpush1.bf16.msra.mxu0 %v1068
  %1461 = vmatprep.mubr.bf16.mxu0 %v662
  %1462 = vmatmul.mubr.bf16.gmra.mrb[0].mxu0 %v661
  %v1463 = vpop.f32.mrb[0].mxu0
  %v1464 = vadd.f32 %v1223, %v1463
  %v1465 = vpop.f32.mrb[0].mxu0
  %v1466 = vpop.f32.mrb[0].mxu0
  %v1467 = vadd.f32 %v1226, %v1466
  %v1468 = vpop.f32.mrb[0].mxu0
  %1469 = vmatprep.mubr.bf16.mxu0 %v667
  %1470 = vmatmul.mubr.bf16.gmra.mrb[0].mxu0 %v666
  %v1471 = vpop.f32.mrb[0].mxu0
  %v1472 = vadd.f32 %v1231, %v1471
  %v1473 = vpop.f32.mrb[0].mxu0
  %v1474 = vpop.f32.mrb[0].mxu0
  %v1475 = vadd.f32 %v1234, %v1474
  %v1476 = vpop.f32.mrb[0].mxu0
  %1477 = vmatprep.mubr.bf16.mxu0 %v672
  %1478 = vmatmul.mubr.bf16.gmra.mrb[0].mxu0 %v671
  %v1479 = vpop.f32.mrb[0].mxu0
  %v1480 = vadd.f32 %v1239, %v1479
  %v1481 = vpop.f32.mrb[0].mxu0
  %v1482 = vpop.f32.mrb[0].mxu0
  %v1483 = vadd.f32 %v1242, %v1482
  %v1484 = vpop.f32.mrb[0].mxu0
  %1485 = vmatprep.mubr.bf16.mxu0 %v677
  %1486 = vmatmul.mubr.bf16.gmra.mrb[0].mxu0 %v676
  %v1487 = vpop.f32.mrb[0].mxu0
  %v1488 = vadd.f32 %v1247, %v1487
  %v1489 = vpop.f32.mrb[0].mxu0
  %v1490 = vpop.f32.mrb[0].mxu0
  %v1491 = vadd.f32 %v1250, %v1490
  %v1492 = vpop.f32.mrb[0].mxu0
  %1493 = vmatprep.mubr.bf16.mxu0 %v682
  %1494 = vmatmul.mubr.bf16.gmra.mrb[0].mxu0 %v681
  %v1495 = vpop.f32.mrb[0].mxu0
  %v1496 = vadd.f32 %v1255, %v1495
  %v1497 = vpop.f32.mrb[0].mxu0
  %v1498 = vpop.f32.mrb[0].mxu0
  %v1499 = vadd.f32 %v1258, %v1498
  %v1500 = vpop.f32.mrb[0].mxu0
  %1501 = vmatprep.mubr.bf16.mxu0 %v687
  %1502 = vmatmul.mubr.bf16.gmra.mrb[0].mxu0 %v686
  %v1503 = vpop.f32.mrb[0].mxu0
  %v1504 = vadd.f32 %v1263, %v1503
  %v1505 = vpop.f32.mrb[0].mxu0
  %v1506 = vpop.f32.mrb[0].mxu0
  %v1507 = vadd.f32 %v1266, %v1506
  %v1508 = vpop.f32.mrb[0].mxu0
  %1509 = vmatprep.mubr.bf16.mxu0 %v692
  %1510 = vmatmul.mubr.bf16.gmra.mrb[0].mxu0 %v691
  %v1511 = vpop.f32.mrb[0].mxu0
  %v1512 = vadd.f32 %v1271, %v1511
  %v1513 = vpop.f32.mrb[0].mxu0
  %v1514 = vpop.f32.mrb[0].mxu0
  %v1515 = vadd.f32 %v1274, %v1514
  %v1516 = vpop.f32.mrb[0].mxu0
  %1517 = vmatprep.mubr.bf16.mxu0 %v697
  %1518 = vmatmul.mubr.bf16.gmra.mrb[0].mxu0 %v696
  %v1519 = vpop.f32.mrb[0].mxu0
  %v1520 = vadd.f32 %v1279, %v1519
  %v1521 = vpop.f32.mrb[0].mxu0
  %v1522 = vpop.f32.mrb[0].mxu0
  %v1523 = vadd.f32 %v1282, %v1522
  %v1524 = vpop.f32.mrb[0].mxu0
  %1525 = vmatprep.mubr.bf16.mxu0 %v702
  %1526 = vmatmul.mubr.bf16.gmra.mrb[0].mxu0 %v701
  %v1527 = vpop.f32.mrb[0].mxu0
  %v1528 = vadd.f32 %v1287, %v1527
  %v1529 = vpop.f32.mrb[0].mxu0
  %v1530 = vpop.f32.mrb[0].mxu0
  %v1531 = vadd.f32 %v1290, %v1530
  %v1532 = vpop.f32.mrb[0].mxu0
  %1533 = vmatprep.mubr.bf16.mxu0 %v707
  %1534 = vmatmul.mubr.bf16.gmra.mrb[0].mxu0 %v706
  %v1535 = vpop.f32.mrb[0].mxu0
  %v1536 = vadd.f32 %v1295, %v1535
  %v1537 = vpop.f32.mrb[0].mxu0
  %v1538 = vpop.f32.mrb[0].mxu0
  %v1539 = vadd.f32 %v1298, %v1538
  %v1540 = vpop.f32.mrb[0].mxu0
  %1541 = vmatprep.mubr.bf16.mxu0 %v712
  %1542 = vmatmul.mubr.bf16.gmra.mrb[0].mxu0 %v711
  %v1543 = vpop.f32.mrb[0].mxu0
  %v1544 = vadd.f32 %v1303, %v1543
  %v1545 = vpop.f32.mrb[0].mxu0
  %v1546 = vpop.f32.mrb[0].mxu0
  %v1547 = vadd.f32 %v1306, %v1546
  %v1548 = vpop.f32.mrb[0].mxu0
  %1549 = vmatprep.mubr.bf16.mxu0 %v717
  %1550 = vmatmul.mubr.bf16.gmra.mrb[0].mxu0 %v716
  %v1551 = vpop.f32.mrb[0].mxu0
  %v1552 = vadd.f32 %v1311, %v1551
  %v1553 = vpop.f32.mrb[0].mxu0
  %v1554 = vpop.f32.mrb[0].mxu0
  %v1555 = vadd.f32 %v1314, %v1554
  %v1556 = vpop.f32.mrb[0].mxu0
  %1557 = vmatprep.mubr.bf16.mxu0 %v722
  %1558 = vmatmul.mubr.bf16.gmra.mrb[0].mxu0 %v721
  %v1559 = vpop.f32.mrb[0].mxu0
  %v1560 = vadd.f32 %v1319, %v1559
  %v1561 = vpop.f32.mrb[0].mxu0
  %v1562 = vpop.f32.mrb[0].mxu0
  %v1563 = vadd.f32 %v1322, %v1562
  %v1564 = vpop.f32.mrb[0].mxu0
  %1565 = vmatprep.mubr.bf16.mxu0 %v727
  %1566 = vmatmul.mubr.bf16.gmra.mrb[0].mxu0 %v726
  %v1567 = vpop.f32.mrb[0].mxu0
  %v1568 = vadd.f32 %v1327, %v1567
  %v1569 = vpop.f32.mrb[0].mxu0
  %v1570 = vpop.f32.mrb[0].mxu0
  %v1571 = vadd.f32 %v1330, %v1570
  %v1572 = vpop.f32.mrb[0].mxu0
  %1573 = vmatprep.mubr.bf16.mxu0 %v732
  %1574 = vmatmul.mubr.bf16.gmra.mrb[0].mxu0 %v731
  %v1575 = vpop.f32.mrb[0].mxu0
  %v1576 = vadd.f32 %v1335, %v1575
  %v1577 = vpop.f32.mrb[0].mxu0
  %v1578 = vpop.f32.mrb[0].mxu0
  %v1579 = vadd.f32 %v1338, %v1578
  %v1580 = vpop.f32.mrb[0].mxu0
  %1581 = vmatprep.mubr.bf16.mxu0 %v737
  %1582 = vmatmul.mubr.bf16.gmra.mrb[0].mxu0 %v736
  %v1583 = vpop.f32.mrb[0].mxu0
  %v1584 = vadd.f32 %v1343, %v1583
  %v1585 = vpop.f32.mrb[0].mxu0
  %v1586 = vpop.f32.mrb[0].mxu0
  %v1587 = vadd.f32 %v1346, %v1586
  %v1588 = vpop.f32.mrb[0].mxu0
  %1589 = vmatprep.mubr.bf16.mxu0 %v742
  %1590 = vmatmul.mubr.bf16.gmra.mrb[0].mxu0 %v741
  %v1591 = vpop.f32.mrb[0].mxu0
  %v1592 = vadd.f32 %v1351, %v1591
  %v1593 = vpop.f32.mrb[0].mxu0
  %v1594 = vpop.f32.mrb[0].mxu0
  %v1595 = vadd.f32 %v1354, %v1594
  %v1596 = vpop.f32.mrb[0].mxu0
  %1597 = vmatprep.mubr.bf16.mxu0 %v747
  %1598 = vmatmul.mubr.bf16.gmra.mrb[0].mxu0 %v746
  %v1599 = vpop.f32.mrb[0].mxu0
  %v1600 = vadd.f32 %v1359, %v1599
  %v1601 = vpop.f32.mrb[0].mxu0
  %v1602 = vpop.f32.mrb[0].mxu0
  %v1603 = vadd.f32 %v1362, %v1602
  %v1604 = vpop.f32.mrb[0].mxu0
  %1605 = vmatprep.mubr.bf16.mxu0 %v752
  %1606 = vmatmul.mubr.bf16.gmra.mrb[0].mxu0 %v751
  %v1607 = vpop.f32.mrb[0].mxu0
  %v1608 = vadd.f32 %v1367, %v1607
  %v1609 = vpop.f32.mrb[0].mxu0
  %v1610 = vpop.f32.mrb[0].mxu0
  %v1611 = vadd.f32 %v1370, %v1610
  %v1612 = vpop.f32.mrb[0].mxu0
  %1613 = vmatprep.mubr.bf16.mxu0 %v757
  %1614 = vmatmul.mubr.bf16.gmra.mrb[0].mxu0 %v756
  %v1615 = vpop.f32.mrb[0].mxu0
  %v1616 = vadd.f32 %v1375, %v1615
  %v1617 = vpop.f32.mrb[0].mxu0
  %v1618 = vpop.f32.mrb[0].mxu0
  %v1619 = vadd.f32 %v1378, %v1618
  %v1620 = vpop.f32.mrb[0].mxu0
  %1621 = vmatprep.mubr.bf16.mxu0 %v762
  %1622 = vmatmul.mubr.bf16.gmra.mrb[0].mxu0 %v761
  %v1623 = vpop.f32.mrb[0].mxu0
  %v1624 = vadd.f32 %v1383, %v1623
  %v1625 = vpop.f32.mrb[0].mxu0
  %v1626 = vpop.f32.mrb[0].mxu0
  %v1627 = vadd.f32 %v1386, %v1626
  %v1628 = vpop.f32.mrb[0].mxu0
  %1629 = vmatprep.mubr.bf16.mxu0 %v767
  %1630 = vmatmul.mubr.bf16.gmra.mrb[0].mxu0 %v766
  %v1631 = vpop.f32.mrb[0].mxu0
  %v1632 = vadd.f32 %v1391, %v1631
  %v1633 = vpop.f32.mrb[0].mxu0
  %v1634 = vpop.f32.mrb[0].mxu0
  %v1635 = vadd.f32 %v1394, %v1634
  %v1636 = vpop.f32.mrb[0].mxu0
  %1637 = vmatprep.mubr.bf16.mxu0 %v772
  %1638 = vmatmul.mubr.bf16.gmra.mrb[0].mxu0 %v771
  %v1639 = vpop.f32.mrb[0].mxu0
  %v1640 = vadd.f32 %v1399, %v1639
  %v1641 = vpop.f32.mrb[0].mxu0
  %v1642 = vpop.f32.mrb[0].mxu0
  %v1643 = vadd.f32 %v1402, %v1642
  %v1644 = vpop.f32.mrb[0].mxu0
  %1645 = vmatprep.mubr.bf16.mxu0 %v777
  %1646 = vmatmul.mubr.bf16.gmra.mrb[0].mxu0 %v776
  %v1647 = vpop.f32.mrb[0].mxu0
  %v1648 = vadd.f32 %v1407, %v1647
  %v1649 = vpop.f32.mrb[0].mxu0
  %v1650 = vpop.f32.mrb[0].mxu0
  %v1651 = vadd.f32 %v1410, %v1650
  %v1652 = vpop.f32.mrb[0].mxu0
  %1653 = vmatprep.mubr.bf16.mxu0 %v782
  %1654 = vmatmul.mubr.bf16.gmra.mrb[0].mxu0 %v781
  %v1655 = vpop.f32.mrb[0].mxu0
  %v1656 = vadd.f32 %v1415, %v1655
  %v1657 = vpop.f32.mrb[0].mxu0
  %v1658 = vpop.f32.mrb[0].mxu0
  %v1659 = vadd.f32 %v1418, %v1658
  %v1660 = vpop.f32.mrb[0].mxu0
  %1661 = vmatprep.mubr.bf16.mxu0 %v787
  %1662 = vmatmul.mubr.bf16.gmra.mrb[0].mxu0 %v786
  %v1663 = vpop.f32.mrb[0].mxu0
  %v1664 = vadd.f32 %v1423, %v1663
  %v1665 = vpop.f32.mrb[0].mxu0
  %v1666 = vpop.f32.mrb[0].mxu0
  %v1667 = vadd.f32 %v1426, %v1666
  %v1668 = vpop.f32.mrb[0].mxu0
  %1669 = vdwg.mxu0
  %1670 = vmatprep.subr.bf16.mxu0 0
  %1671 = vmatpush1.bf16.msra.mxu0 %v1069
  %1672 = vmatprep.subr.bf16.mxu0 0
  %1673 = vmatpush1.bf16.msra.mxu0 %v1070
  %1674 = vmatprep.subr.bf16.mxu0 0
  %1675 = vmatpush1.bf16.msra.mxu0 %v1071
  %1676 = vmatprep.subr.bf16.mxu0 0
  %1677 = vmatpush1.bf16.msra.mxu0 %v1072
  %1678 = vmatprep.subr.bf16.mxu0 0
  %1679 = vmatpush1.bf16.msra.mxu0 0
  %1680 = vmatprep.subr.bf16.mxu0 0
  %1681 = vmatpush1.bf16.msra.mxu0 0
  %1682 = vmatprep.subr.bf16.mxu0 0
  %1683 = vmatpush1.bf16.msra.mxu0 0
  %1684 = vmatprep.subr.bf16.mxu0 0
  %1685 = vmatpush1.bf16.msra.mxu0 0
  %1686 = vmatprep.subr.bf16.mxu0 0
  %1687 = vmatpush1.bf16.msra.mxu0 0
  %1688 = vmatprep.subr.bf16.mxu0 0
  %1689 = vmatpush1.bf16.msra.mxu0 0
  %1690 = vmatprep.subr.bf16.mxu0 0
  %1691 = vmatpush1.bf16.msra.mxu0 0
  %1692 = vmatprep.subr.bf16.mxu0 0
  %1693 = vmatpush1.bf16.msra.mxu0 0
  %1694 = vmatprep.subr.bf16.mxu0 0
  %1695 = vmatpush1.bf16.msra.mxu0 0
  %1696 = vmatprep.subr.bf16.mxu0 0
  %1697 = vmatpush1.bf16.msra.mxu0 0
  %1698 = vmatprep.subr.bf16.mxu0 0
  %1699 = vmatpush1.bf16.msra.mxu0 0
  %1700 = vmatprep.subr.bf16.mxu0 0
  %1701 = vmatpush1.bf16.msra.mxu0 0
  %1702 = vmatprep.mubr.bf16.mxu0 0
  %1703 = vmatmul.mubr.bf16.gmra.mrb[0].mxu0 %v1111
  %v1704 = vpop.f32.mrb[0].mxu0
  %v1705 = vadd.f32 %v1464, %v1704
  %v1706 = vpop.f32.mrb[0].mxu0
  %v1707 = vpop.f32.mrb[0].mxu0
  %v1708 = vadd.f32 %v1467, %v1707
  %v1709 = vpop.f32.mrb[0].mxu0
  %1710 = vmatprep.mubr.bf16.mxu0 0
  %1711 = vmatmul.mubr.bf16.gmra.mrb[0].mxu0 %v1114
  %v1712 = vpop.f32.mrb[0].mxu0
  %v1713 = vadd.f32 %v1472, %v1712
  %v1714 = vpop.f32.mrb[0].mxu0
  %v1715 = vpop.f32.mrb[0].mxu0
  %v1716 = vadd.f32 %v1475, %v1715
  %v1717 = vpop.f32.mrb[0].mxu0
  %1718 = vmatprep.mubr.bf16.mxu0 0
  %1719 = vmatmul.mubr.bf16.gmra.mrb[0].mxu0 %v1117
  %v1720 = vpop.f32.mrb[0].mxu0
  %v1721 = vadd.f32 %v1480, %v1720
  %v1722 = vpop.f32.mrb[0].mxu0
  %v1723 = vpop.f32.mrb[0].mxu0
  %v1724 = vadd.f32 %v1483, %v1723
  %v1725 = vpop.f32.mrb[0].mxu0
  %1726 = vmatprep.mubr.bf16.mxu0 0
  %1727 = vmatmul.mubr.bf16.gmra.mrb[0].mxu0 %v1120
  %v1728 = vpop.f32.mrb[0].mxu0
  %v1729 = vadd.f32 %v1488, %v1728
  %v1730 = vpop.f32.mrb[0].mxu0
  %v1731 = vpop.f32.mrb[0].mxu0
  %v1732 = vadd.f32 %v1491, %v1731
  %v1733 = vpop.f32.mrb[0].mxu0
  %1734 = vmatprep.mubr.bf16.mxu0 0
  %1735 = vmatmul.mubr.bf16.gmra.mrb[0].mxu0 %v1123
  %v1736 = vpop.f32.mrb[0].mxu0
  %v1737 = vadd.f32 %v1496, %v1736
  %v1738 = vpop.f32.mrb[0].mxu0
  %v1739 = vpop.f32.mrb[0].mxu0
  %v1740 = vadd.f32 %v1499, %v1739
  %v1741 = vpop.f32.mrb[0].mxu0
  %1742 = vmatprep.mubr.bf16.mxu0 0
  %1743 = vmatmul.mubr.bf16.gmra.mrb[0].mxu0 %v1126
  %v1744 = vpop.f32.mrb[0].mxu0
  %v1745 = vadd.f32 %v1504, %v1744
  %v1746 = vpop.f32.mrb[0].mxu0
  %v1747 = vpop.f32.mrb[0].mxu0
  %v1748 = vadd.f32 %v1507, %v1747
  %v1749 = vpop.f32.mrb[0].mxu0
  %1750 = vmatprep.mubr.bf16.mxu0 0
  %1751 = vmatmul.mubr.bf16.gmra.mrb[0].mxu0 %v1129
  %v1752 = vpop.f32.mrb[0].mxu0
  %v1753 = vadd.f32 %v1512, %v1752
  %v1754 = vpop.f32.mrb[0].mxu0
  %v1755 = vpop.f32.mrb[0].mxu0
  %v1756 = vadd.f32 %v1515, %v1755
  %v1757 = vpop.f32.mrb[0].mxu0
  %1758 = vmatprep.mubr.bf16.mxu0 0
  %1759 = vmatmul.mubr.bf16.gmra.mrb[0].mxu0 %v1132
  %v1760 = vpop.f32.mrb[0].mxu0
  %v1761 = vadd.f32 %v1520, %v1760
  %v1762 = vpop.f32.mrb[0].mxu0
  %v1763 = vpop.f32.mrb[0].mxu0
  %v1764 = vadd.f32 %v1523, %v1763
  %v1765 = vpop.f32.mrb[0].mxu0
  %1766 = vmatprep.mubr.bf16.mxu0 0
  %1767 = vmatmul.mubr.bf16.gmra.mrb[0].mxu0 %v1135
  %v1768 = vpop.f32.mrb[0].mxu0
  %v1769 = vadd.f32 %v1528, %v1768
  %v1770 = vpop.f32.mrb[0].mxu0
  %v1771 = vpop.f32.mrb[0].mxu0
  %v1772 = vadd.f32 %v1531, %v1771
  %v1773 = vpop.f32.mrb[0].mxu0
  %1774 = vmatprep.mubr.bf16.mxu0 0
  %1775 = vmatmul.mubr.bf16.gmra.mrb[0].mxu0 %v1138
  %v1776 = vpop.f32.mrb[0].mxu0
  %v1777 = vadd.f32 %v1536, %v1776
  %v1778 = vpop.f32.mrb[0].mxu0
  %v1779 = vpop.f32.mrb[0].mxu0
  %v1780 = vadd.f32 %v1539, %v1779
  %v1781 = vpop.f32.mrb[0].mxu0
  %1782 = vmatprep.mubr.bf16.mxu0 0
  %1783 = vmatmul.mubr.bf16.gmra.mrb[0].mxu0 %v1141
  %v1784 = vpop.f32.mrb[0].mxu0
  %v1785 = vadd.f32 %v1544, %v1784
  %v1786 = vpop.f32.mrb[0].mxu0
  %v1787 = vpop.f32.mrb[0].mxu0
  %v1788 = vadd.f32 %v1547, %v1787
  %v1789 = vpop.f32.mrb[0].mxu0
  %1790 = vmatprep.mubr.bf16.mxu0 0
  %1791 = vmatmul.mubr.bf16.gmra.mrb[0].mxu0 %v1144
  %v1792 = vpop.f32.mrb[0].mxu0
  %v1793 = vadd.f32 %v1552, %v1792
  %v1794 = vpop.f32.mrb[0].mxu0
  %v1795 = vpop.f32.mrb[0].mxu0
  %v1796 = vadd.f32 %v1555, %v1795
  %v1797 = vpop.f32.mrb[0].mxu0
  %1798 = vmatprep.mubr.bf16.mxu0 0
  %1799 = vmatmul.mubr.bf16.gmra.mrb[0].mxu0 %v1147
  %v1800 = vpop.f32.mrb[0].mxu0
  %v1801 = vadd.f32 %v1560, %v1800
  %v1802 = vpop.f32.mrb[0].mxu0
  %v1803 = vpop.f32.mrb[0].mxu0
  %v1804 = vadd.f32 %v1563, %v1803
  %v1805 = vpop.f32.mrb[0].mxu0
  %1806 = vmatprep.mubr.bf16.mxu0 0
  %1807 = vmatmul.mubr.bf16.gmra.mrb[0].mxu0 %v1150
  %v1808 = vpop.f32.mrb[0].mxu0
  %v1809 = vadd.f32 %v1568, %v1808
  %v1810 = vpop.f32.mrb[0].mxu0
  %v1811 = vpop.f32.mrb[0].mxu0
  %v1812 = vadd.f32 %v1571, %v1811
  %v1813 = vpop.f32.mrb[0].mxu0
  %1814 = vmatprep.mubr.bf16.mxu0 0
  %1815 = vmatmul.mubr.bf16.gmra.mrb[0].mxu0 %v1153
  %v1816 = vpop.f32.mrb[0].mxu0
  %v1817 = vadd.f32 %v1576, %v1816
  %v1818 = vpop.f32.mrb[0].mxu0
  %v1819 = vpop.f32.mrb[0].mxu0
  %v1820 = vadd.f32 %v1579, %v1819
  %v1821 = vpop.f32.mrb[0].mxu0
  %1822 = vmatprep.mubr.bf16.mxu0 0
  %1823 = vmatmul.mubr.bf16.gmra.mrb[0].mxu0 %v1156
  %v1824 = vpop.f32.mrb[0].mxu0
  %v1825 = vadd.f32 %v1584, %v1824
  %v1826 = vpop.f32.mrb[0].mxu0
  %v1827 = vpop.f32.mrb[0].mxu0
  %v1828 = vadd.f32 %v1587, %v1827
  %v1829 = vpop.f32.mrb[0].mxu0
  %1830 = vmatprep.mubr.bf16.mxu0 0
  %1831 = vmatmul.mubr.bf16.gmra.mrb[0].mxu0 %v1159
  %v1832 = vpop.f32.mrb[0].mxu0
  %v1833 = vadd.f32 %v1592, %v1832
  %v1834 = vpop.f32.mrb[0].mxu0
  %v1835 = vpop.f32.mrb[0].mxu0
  %v1836 = vadd.f32 %v1595, %v1835
  %v1837 = vpop.f32.mrb[0].mxu0
  %1838 = vmatprep.mubr.bf16.mxu0 0
  %1839 = vmatmul.mubr.bf16.gmra.mrb[0].mxu0 %v1162
  %v1840 = vpop.f32.mrb[0].mxu0
  %v1841 = vadd.f32 %v1600, %v1840
  %v1842 = vpop.f32.mrb[0].mxu0
  %v1843 = vpop.f32.mrb[0].mxu0
  %v1844 = vadd.f32 %v1603, %v1843
  %v1845 = vpop.f32.mrb[0].mxu0
  %1846 = vmatprep.mubr.bf16.mxu0 0
  %1847 = vmatmul.mubr.bf16.gmra.mrb[0].mxu0 %v1165
  %v1848 = vpop.f32.mrb[0].mxu0
  %v1849 = vadd.f32 %v1608, %v1848
  %v1850 = vpop.f32.mrb[0].mxu0
  %v1851 = vpop.f32.mrb[0].mxu0
  %v1852 = vadd.f32 %v1611, %v1851
  %v1853 = vpop.f32.mrb[0].mxu0
  %1854 = vmatprep.mubr.bf16.mxu0 0
  %1855 = vmatmul.mubr.bf16.gmra.mrb[0].mxu0 %v1168
  %v1856 = vpop.f32.mrb[0].mxu0
  %v1857 = vadd.f32 %v1616, %v1856
  %v1858 = vpop.f32.mrb[0].mxu0
  %v1859 = vpop.f32.mrb[0].mxu0
  %v1860 = vadd.f32 %v1619, %v1859
  %v1861 = vpop.f32.mrb[0].mxu0
  %1862 = vmatprep.mubr.bf16.mxu0 0
  %1863 = vmatmul.mubr.bf16.gmra.mrb[0].mxu0 %v1171
  %v1864 = vpop.f32.mrb[0].mxu0
  %v1865 = vadd.f32 %v1624, %v1864
  %v1866 = vpop.f32.mrb[0].mxu0
  %v1867 = vpop.f32.mrb[0].mxu0
  %v1868 = vadd.f32 %v1627, %v1867
  %v1869 = vpop.f32.mrb[0].mxu0
  %1870 = vmatprep.mubr.bf16.mxu0 0
  %1871 = vmatmul.mubr.bf16.gmra.mrb[0].mxu0 %v1174
  %v1872 = vpop.f32.mrb[0].mxu0
  %v1873 = vadd.f32 %v1632, %v1872
  %v1874 = vpop.f32.mrb[0].mxu0
  %v1875 = vpop.f32.mrb[0].mxu0
  %v1876 = vadd.f32 %v1635, %v1875
  %v1877 = vpop.f32.mrb[0].mxu0
  %1878 = vmatprep.mubr.bf16.mxu0 0
  %1879 = vmatmul.mubr.bf16.gmra.mrb[0].mxu0 %v1177
  %v1880 = vpop.f32.mrb[0].mxu0
  %v1881 = vadd.f32 %v1640, %v1880
  %v1882 = vpop.f32.mrb[0].mxu0
  %v1883 = vpop.f32.mrb[0].mxu0
  %v1884 = vadd.f32 %v1643, %v1883
  %v1885 = vpop.f32.mrb[0].mxu0
  %1886 = vmatprep.mubr.bf16.mxu0 0
  %1887 = vmatmul.mubr.bf16.gmra.mrb[0].mxu0 %v1180
  %v1888 = vpop.f32.mrb[0].mxu0
  %v1889 = vadd.f32 %v1648, %v1888
  %v1890 = vpop.f32.mrb[0].mxu0
  %v1891 = vpop.f32.mrb[0].mxu0
  %v1892 = vadd.f32 %v1651, %v1891
  %v1893 = vpop.f32.mrb[0].mxu0
  %1894 = vmatprep.mubr.bf16.mxu0 0
  %1895 = vmatmul.mubr.bf16.gmra.mrb[0].mxu0 %v1183
  %v1896 = vpop.f32.mrb[0].mxu0
  %v1897 = vadd.f32 %v1656, %v1896
  %v1898 = vpop.f32.mrb[0].mxu0
  %v1899 = vpop.f32.mrb[0].mxu0
  %v1900 = vadd.f32 %v1659, %v1899
  %v1901 = vpop.f32.mrb[0].mxu0
  %1902 = vmatprep.mubr.bf16.mxu0 0
  %1903 = vmatmul.mubr.bf16.gmra.mrb[0].mxu0 %v1186
  %v1904 = vpop.f32.mrb[0].mxu0
  %v1905 = vadd.f32 %v1664, %v1904
  %v1906 = vpop.f32.mrb[0].mxu0
  %v1907 = vpop.f32.mrb[0].mxu0
  %v1908 = vadd.f32 %v1667, %v1907
  %v1909 = vpop.f32.mrb[0].mxu0
  %1910 = vdwg.mxu0
  %v1911 = vmax.f32 %v1705, %v1756
  %v1912 = vmax.f32 %v1911, %v1809
  %v1913 = vmax.f32 %v1912, %v1860
  %v1914 = vmax.f32 %v1708, %v1761
  %v1915 = vmax.f32 %v1914, %v1812
  %v1916 = vmax.f32 %v1915, %v1865
  %v1917 = vmax.f32 %v1713, %v1764
  %v1918 = vmax.f32 %v1917, %v1817
  %v1919 = vmax.f32 %v1918, %v1868
  %v1920 = vmax.f32 %v1716, %v1769
  %v1921 = vmax.f32 %v1920, %v1820
  %v1922 = vmax.f32 %v1921, %v1873
  %v1923 = vmax.f32 %v1721, %v1772
  %v1924 = vmax.f32 %v1923, %v1825
  %v1925 = vmax.f32 %v1924, %v1876
  %v1926 = vmax.f32 %v1724, %v1777
  %v1927 = vmax.f32 %v1926, %v1828
  %v1928 = vmax.f32 %v1927, %v1881
  %v1929 = vmax.f32 %v1729, %v1780
  %v1930 = vmax.f32 %v1929, %v1833
  %v1931 = vmax.f32 %v1930, %v1884
  %v1932 = vmax.f32 %v1732, %v1785
  %v1933 = vmax.f32 %v1932, %v1836
  %v1934 = vmax.f32 %v1933, %v1889
  %v1935 = vmax.f32 %v1737, %v1788
  %v1936 = vmax.f32 %v1935, %v1841
  %v1937 = vmax.f32 %v1936, %v1892
  %v1938 = vmax.f32 %v1740, %v1793
  %v1939 = vmax.f32 %v1938, %v1844
  %v1940 = vmax.f32 %v1939, %v1897
  %v1941 = vmax.f32 %v1745, %v1796
  %v1942 = vmax.f32 %v1941, %v1849
  %v1943 = vmax.f32 %v1942, %v1900
  %v1944 = vmax.f32 %v1748, %v1801
  %v1945 = vmax.f32 %v1944, %v1852
  %v1946 = vmax.f32 %v1945, %v1905
  %v1947 = vmax.f32 %v1753, %v1804
  %v1948 = vmax.f32 %v1947, %v1857
  %v1949 = vmax.f32 %v1948, %v1908
  %v1950 = vld [vmem:[%s2] sm:$0x1]
  %v1952 = vlaneseq
  %v1953 = vshrl.u32 %v1952, 7
  %v1954 = vsub.s32 0, %v1953
  %v1955 = vrot.slane %v1950, %v1954
  %v1957 = vadd.f32 %v1913, %v1955
  %v1958 = vadd.f32 %v1916, %v1955
  %v1959 = vadd.f32 %v1919, %v1955
  %v1960 = vadd.f32 %v1922, %v1955
  %v1961 = vadd.f32 %v1925, %v1955
  %v1962 = vadd.f32 %v1928, %v1955
  %v1963 = vadd.f32 %v1931, %v1955
  %v1964 = vadd.f32 %v1934, %v1955
  %v1965 = vadd.f32 %v1937, %v1955
  %v1966 = vadd.f32 %v1940, %v1955
  %v1967 = vadd.f32 %v1943, %v1955
  %v1968 = vadd.f32 %v1946, %v1955
  %v1969 = vadd.f32 %v1949, %v1955
  %v1970 = vmax.f32 %v1957, 0.0
  %v1971 = vmax.f32 %v1958, 0.0
  %v1972 = vmax.f32 %v1959, 0.0
  %v1973 = vmax.f32 %v1960, 0.0
  %v1974 = vmax.f32 %v1961, 0.0
  %v1975 = vmax.f32 %v1962, 0.0
  %v1976 = vmax.f32 %v1963, 0.0
  %v1977 = vmax.f32 %v1964, 0.0
  %v1978 = vmax.f32 %v1965, 0.0
  %v1979 = vmax.f32 %v1966, 0.0
  %v1980 = vmax.f32 %v1967, 0.0
  %v1981 = vmax.f32 %v1968, 0.0
  %v1982 = vmax.f32 %v1969, 0.0
  %v1983 = vpack.c.bf16 %v1971, %v1970
  %v1984 = vpack.c.bf16 %v1973, %v1972
  %v1985 = vpack.c.bf16 %v1975, %v1974
  %v1986 = vpack.c.bf16 %v1977, %v1976
  %v1987 = vpack.c.bf16 %v1979, %v1978
  %v1988 = vpack.c.bf16 %v1981, %v1980
  %v1989 = vpack.c.bf16 %v1982, %v1982
  %v1997 = vunpack.c.l.b16 %v1983
  %v1998 = vunpack.c.h.b16 %v1983
  %v1999 = vunpack.c.l.b16 %v1984
  %v2000 = vunpack.c.h.b16 %v1984
  %v2001 = vunpack.c.l.b16 %v1985
  %v2002 = vunpack.c.h.b16 %v1985
  %v2003 = vunpack.c.l.b16 %v1986
  %v2004 = vunpack.c.h.b16 %v1986
  %v2005 = vunpack.c.l.b16 %v1987
  %v2006 = vunpack.c.h.b16 %v1987
  %v2007 = vunpack.c.l.b16 %v1988
  %v2008 = vunpack.c.h.b16 %v1988
  %v2009 = vunpack.c.l.b16 %v1989
  %v2010 = vpack.c.b16 %v1997, %v1997
  %v2011 = vpack.c.b16 %v1998, %v1998
  %v2012 = vpack.c.b16 %v1999, %v1999
  %v2013 = vpack.c.b16 %v2000, %v2000
  %v2014 = vpack.c.b16 %v2001, %v2001
  %v2015 = vpack.c.b16 %v2002, %v2002
  %v2016 = vpack.c.b16 %v2003, %v2003
  %v2017 = vpack.c.b16 %v2004, %v2004
  %v2018 = vpack.c.b16 %v2005, %v2005
  %v2019 = vpack.c.b16 %v2006, %v2006
  %v2020 = vpack.c.b16 %v2007, %v2007
  %v2021 = vpack.c.b16 %v2008, %v2008
  %v2022 = vpack.c.b16 %v2009, %v2009
  %2036 = vst [vmem:[%s3] sm:$0xf] %v2010
  %2037 = vst [vmem:[%s3 + $0x4] sm:$0xf] %v2011
  %2038 = vst [vmem:[%s3 + $0x8] sm:$0xf] %v2012
  %2039 = vst [vmem:[%s3 + $0xc] sm:$0xf] %v2013
  %2040 = vst [vmem:[%s3 + $0x10] sm:$0xf] %v2014
  %2041 = vst [vmem:[%s3 + $0x14] sm:$0xf] %v2015
  %2042 = vst [vmem:[%s3 + $0x18] sm:$0xf] %v2016
  %2043 = vst [vmem:[%s3 + $0x1c] sm:$0xf] %v2017
  %2044 = vst [vmem:[%s3 + $0x20] sm:$0xf] %v2018
  %2045 = vst [vmem:[%s3 + $0x24] sm:$0xf] %v2019
  %2046 = vst [vmem:[%s3 + $0x28] sm:$0xf] %v2020
  %2047 = vst [vmem:[%s3 + $0x2c] sm:$0xf] %v2021
  %2048 = vst [vmem:[%s3 + $0x30] sm:$0xf] %v2022
  // Predicated region
  $region14: #{cnn_forward.4} parent=0 // pred_check
    _
  $region15: #{cnn_forward.4} parent=0 // pred_check_branch
    %2050 = sbr.rel (0) target = $region17
  $region16: #{cnn_forward.4} parent=0 // pred_region
    _
  $region17: #{cnn_forward.4} parent=0 // pred_fallthru
    _
  // Predicated region
  $region18: #{cnn_forward.4} parent=0 // pred_check
    _
  $region19: #{cnn_forward.4} parent=0 // pred_check_branch
    %2052 = sbr.rel (0) target = $region21
  $region20: #{cnn_forward.4} parent=0 // pred_region
    _
  $region21: #{cnn_forward.4} parent=0 // pred_fallthru
    _

// kernel: cnn_forward.5
$region0: #{cnn_forward.5}
  #allocation0 [shape = 'u32[]', space=smem, size = 0x4, offset = 0x4, fixed_abs, tag = 'smem constant byte address 0x4 - core index']
  #allocation1 [shape = 'u32[144,128]{1,0:T(1,128)}', space=vmem, size = 0x12000, scoped, tag = 'internal scratch']
  %s0 = inlined_call_operand.vmem [shape: bf16[8,3136], index: 0, kind: input, shape index: {}]
  %s1 = inlined_call_operand.vmem [shape: bf16[3136,128], index: 1, kind: input, shape index: {}]
  %s2 = inlined_call_operand.vmem [shape: f32[1,128], index: 2, kind: input, shape index: {}]
  %s3 = inlined_call_operand.vmem [shape: bf16[128,10], index: 3, kind: input, shape index: {}]
  %s4 = inlined_call_operand.vmem [shape: f32[1,10], index: 4, kind: input, shape index: {}]
  %s5 = inlined_call_operand.vmem [shape: f32[8,10], index: 5, kind: output, shape index: {}]
  %s6 = sld [smem:[#allocation0]]
  $region30: #{cnn_forward.5} parent=0
    _
  %s8 = ssub.s32 1, %s6
  %s9 = scalar_select 0, %s8, %s6
  // Predicated region
  $region2: #{cnn_forward.5} parent=0 // pred_check
    _
  $region3: #{cnn_forward.5} parent=0 // pred_check_branch
    %11 = sbr.rel (0) target = $region5
  $region4: #{cnn_forward.5} parent=0 // pred_region
    _
  $region5: #{cnn_forward.5} parent=0 // pred_fallthru
    _
  // Predicated region
  $region6: #{cnn_forward.5} parent=0 // pred_check
    _
  $region7: #{cnn_forward.5} parent=0 // pred_check_branch
    %13 = sbr.rel (0) target = $region9
  $region8: #{cnn_forward.5} parent=0 // pred_region
    _
  $region9: #{cnn_forward.5} parent=0 // pred_fallthru
    _
  // Predicated region
  $region10: #{cnn_forward.5} parent=0 // pred_check
    _
  $region11: #{cnn_forward.5} parent=0 // pred_check_branch
    %15 = sbr.rel (0) target = $region13
  $region12: #{cnn_forward.5} parent=0 // pred_region
    _
  $region13: #{cnn_forward.5} parent=0 // pred_fallthru
    _
  // Predicated region
  $region14: #{cnn_forward.5} parent=0 // pred_check
    _
  $region15: #{cnn_forward.5} parent=0 // pred_check_branch
    %17 = sbr.rel (0) target = $region17
  $region16: #{cnn_forward.5} parent=0 // pred_region
    _
  $region17: #{cnn_forward.5} parent=0 // pred_fallthru
    _
  // Predicated region
  $region18: #{cnn_forward.5} parent=0 // pred_check
    _
  $region19: #{cnn_forward.5} parent=0 // pred_check_branch
    %19 = sbr.rel (0) target = $region21
  $region20: #{cnn_forward.5} parent=0 // pred_region
    _
  $region21: #{cnn_forward.5} parent=0 // pred_fallthru
    _
  %v21 = vld [vmem:[%s0] sm:$0xff]
  %v22 = vld [vmem:[%s0 + $0x8] sm:$0xff]
  %v23 = vld [vmem:[%s0 + $0x10] sm:$0xff]
  %v24 = vld [vmem:[%s0 + $0x18] sm:$0xff]
  %v25 = vld [vmem:[%s0 + $0x20] sm:$0xff]
  %v26 = vld [vmem:[%s0 + $0x28] sm:$0xff]
  %v27 = vld [vmem:[%s0 + $0x30] sm:$0xff]
  %v28 = vld [vmem:[%s0 + $0x38] sm:$0xff]
  %v29 = vld [vmem:[%s0 + $0x40] sm:$0xff]
  %v30 = vld [vmem:[%s0 + $0x48] sm:$0xff]
  %v31 = vld [vmem:[%s0 + $0x50] sm:$0xff]
  %v32 = vld [vmem:[%s0 + $0x58] sm:$0xff]
  %v33 = vld [vmem:[%s0 + $0x60] sm:$0xf]
  %v34 = vld [vmem:[%s1] sm:$0xf]
  %v35 = vld [vmem:[%s1 + $0x4] sm:$0xf]
  %v36 = vld [vmem:[%s1 + $0x8] sm:$0xf]
  %v37 = vld [vmem:[%s1 + $0xc] sm:$0xf]
  %v38 = vld [vmem:[%s1 + $0x10] sm:$0xf]
  %v39 = vld [vmem:[%s1 + $0x14] sm:$0xf]
  %v40 = vld [vmem:[%s1 + $0x18] sm:$0xf]
  %v41 = vld [vmem:[%s1 + $0x1c] sm:$0xf]
  %v42 = vld [vmem:[%s1 + $0x20] sm:$0xf]
  %v43 = vld [vmem:[%s1 + $0x24] sm:$0xf]
  %v44 = vld [vmem:[%s1 + $0x28] sm:$0xf]
  %v45 = vld [vmem:[%s1 + $0x2c] sm:$0xf]
  %v46 = vld [vmem:[%s1 + $0x30] sm:$0xf]
  %v47 = vld [vmem:[%s1 + $0x34] sm:$0xf]
  %v48 = vld [vmem:[%s1 + $0x38] sm:$0xf]
  %v49 = vld [vmem:[%s1 + $0x3c] sm:$0xf]
  %v50 = vld [vmem:[%s1 + $0x40] sm:$0xf]
  %v51 = vld [vmem:[%s1 + $0x44] sm:$0xf]
  %v52 = vld [vmem:[%s1 + $0x48] sm:$0xf]
  %v53 = vld [vmem:[%s1 + $0x4c] sm:$0xf]
  %v54 = vld [vmem:[%s1 + $0x50] sm:$0xf]
  %v55 = vld [vmem:[%s1 + $0x54] sm:$0xf]
  %v56 = vld [vmem:[%s1 + $0x58] sm:$0xf]
  %v57 = vld [vmem:[%s1 + $0x5c] sm:$0xf]
  %v58 = vld [vmem:[%s1 + $0x60] sm:$0xf]
  %v59 = vld [vmem:[%s1 + $0x64] sm:$0xf]
  %v60 = vld [vmem:[%s1 + $0x68] sm:$0xf]
  %v61 = vld [vmem:[%s1 + $0x6c] sm:$0xf]
  %v62 = vld [vmem:[%s1 + $0x70] sm:$0xf]
  %v63 = vld [vmem:[%s1 + $0x74] sm:$0xf]
  %v64 = vld [vmem:[%s1 + $0x78] sm:$0xf]
  %v65 = vld [vmem:[%s1 + $0x7c] sm:$0xf]
  %v66 = vld [vmem:[%s1 + $0x80] sm:$0xf]
  %v67 = vld [vmem:[%s1 + $0x84] sm:$0xf]
  %v68 = vld [vmem:[%s1 + $0x88] sm:$0xf]
  %v69 = vld [vmem:[%s1 + $0x8c] sm:$0xf]
  %v70 = vld [vmem:[%s1 + $0x90] sm:$0xf]
  %v71 = vld [vmem:[%s1 + $0x94] sm:$0xf]
  %v72 = vld [vmem:[%s1 + $0x98] sm:$0xf]
  %v73 = vld [vmem:[%s1 + $0x9c] sm:$0xf]
  %v74 = vld [vmem:[%s1 + $0xa0] sm:$0xf]
  %v75 = vld [vmem:[%s1 + $0xa4] sm:$0xf]
  %v76 = vld [vmem:[%s1 + $0xa8] sm:$0xf]
  %v77 = vld [vmem:[%s1 + $0xac] sm:$0xf]
  %v78 = vld [vmem:[%s1 + $0xb0] sm:$0xf]
  %v79 = vld [vmem:[%s1 + $0xb4] sm:$0xf]
  %v80 = vld [vmem:[%s1 + $0xb8] sm:$0xf]
  %v81 = vld [vmem:[%s1 + $0xbc] sm:$0xf]
  %v82 = vld [vmem:[%s1 + $0xc0] sm:$0xf]
  %v83 = vld [vmem:[%s1 + $0xc4] sm:$0xf]
  %v84 = vld [vmem:[%s1 + $0xc8] sm:$0xf]
  %v85 = vld [vmem:[%s1 + $0xcc] sm:$0xf]
  %v86 = vld [vmem:[%s1 + $0xd0] sm:$0xf]
  %v87 = vld [vmem:[%s1 + $0xd4] sm:$0xf]
  %v88 = vld [vmem:[%s1 + $0xd8] sm:$0xf]
  %v89 = vld [vmem:[%s1 + $0xdc] sm:$0xf]
  %v90 = vld [vmem:[%s1 + $0xe0] sm:$0xf]
  %v91 = vld [vmem:[%s1 + $0xe4] sm:$0xf]
  %v92 = vld [vmem:[%s1 + $0xe8] sm:$0xf]
  %v93 = vld [vmem:[%s1 + $0xec] sm:$0xf]
  %v94 = vld [vmem:[%s1 + $0xf0] sm:$0xf]
  %v95 = vld [vmem:[%s1 + $0xf4] sm:$0xf]
  %v96 = vld [vmem:[%s1 + $0xf8] sm:$0xf]
  %v97 = vld [vmem:[%s1 + $0xfc] sm:$0xf]
  %v98 = vld [vmem:[%s1 + $0x100] sm:$0xf]
  %v99 = vld [vmem:[%s1 + $0x104] sm:$0xf]
  %v100 = vld [vmem:[%s1 + $0x108] sm:$0xf]
  %v101 = vld [vmem:[%s1 + $0x10c] sm:$0xf]
  %v102 = vld [vmem:[%s1 + $0x110] sm:$0xf]
  %v103 = vld [vmem:[%s1 + $0x114] sm:$0xf]
  %v104 = vld [vmem:[%s1 + $0x118] sm:$0xf]
  %v105 = vld [vmem:[%s1 + $0x11c] sm:$0xf]
  %v106 = vld [vmem:[%s1 + $0x120] sm:$0xf]
  %v107 = vld [vmem:[%s1 + $0x124] sm:$0xf]
  %v108 = vld [vmem:[%s1 + $0x128] sm:$0xf]
  %v109 = vld [vmem:[%s1 + $0x12c] sm:$0xf]
  %v110 = vld [vmem:[%s1 + $0x130] sm:$0xf]
  %v111 = vld [vmem:[%s1 + $0x134] sm:$0xf]
  %v112 = vld [vmem:[%s1 + $0x138] sm:$0xf]
  %v113 = vld [vmem:[%s1 + $0x13c] sm:$0xf]
  %v114 = vld [vmem:[%s1 + $0x140] sm:$0xf]
  %v115 = vld [vmem:[%s1 + $0x144] sm:$0xf]
  %v116 = vld [vmem:[%s1 + $0x148] sm:$0xf]
  %v117 = vld [vmem:[%s1 + $0x14c] sm:$0xf]
  %v118 = vld [vmem:[%s1 + $0x150] sm:$0xf]
  %v119 = vld [vmem:[%s1 + $0x154] sm:$0xf]
  %v120 = vld [vmem:[%s1 + $0x158] sm:$0xf]
  %v121 = vld [vmem:[%s1 + $0x15c] sm:$0xf]
  %v122 = vld [vmem:[%s1 + $0x160] sm:$0xf]
  %v123 = vld [vmem:[%s1 + $0x164] sm:$0xf]
  %v124 = vld [vmem:[%s1 + $0x168] sm:$0xf]
  %v125 = vld [vmem:[%s1 + $0x16c] sm:$0xf]
  %v126 = vld [vmem:[%s1 + $0x170] sm:$0xf]
  %v127 = vld [vmem:[%s1 + $0x174] sm:$0xf]
  %v128 = vld [vmem:[%s1 + $0x178] sm:$0xf]
  %v129 = vld [vmem:[%s1 + $0x17c] sm:$0xf]
  %v130 = vld [vmem:[%s1 + $0x180] sm:$0xf]
  %v131 = vld [vmem:[%s1 + $0x184] sm:$0xf]
  %v132 = vld [vmem:[%s1 + $0x188] sm:$0xf]
  %v133 = vld [vmem:[%s1 + $0x18c] sm:$0xf]
  %v134 = vld [vmem:[%s1 + $0x190] sm:$0xf]
  %v135 = vld [vmem:[%s1 + $0x194] sm:$0xf]
  %v136 = vld [vmem:[%s1 + $0x198] sm:$0xf]
  %v137 = vld [vmem:[%s1 + $0x19c] sm:$0xf]
  %v138 = vld [vmem:[%s1 + $0x1a0] sm:$0xf]
  %v139 = vld [vmem:[%s1 + $0x1a4] sm:$0xf]
  %v140 = vld [vmem:[%s1 + $0x1a8] sm:$0xf]
  %v141 = vld [vmem:[%s1 + $0x1ac] sm:$0xf]
  %v142 = vld [vmem:[%s1 + $0x1b0] sm:$0xf]
  %v143 = vld [vmem:[%s1 + $0x1b4] sm:$0xf]
  %v144 = vld [vmem:[%s1 + $0x1b8] sm:$0xf]
  %v145 = vld [vmem:[%s1 + $0x1bc] sm:$0xf]
  %v146 = vld [vmem:[%s1 + $0x1c0] sm:$0xf]
  %v147 = vld [vmem:[%s1 + $0x1c4] sm:$0xf]
  %v148 = vld [vmem:[%s1 + $0x1c8] sm:$0xf]
  %v149 = vld [vmem:[%s1 + $0x1cc] sm:$0xf]
  %v150 = vld [vmem:[%s1 + $0x1d0] sm:$0xf]
  %v151 = vld [vmem:[%s1 + $0x1d4] sm:$0xf]
  %v152 = vld [vmem:[%s1 + $0x1d8] sm:$0xf]
  %v153 = vld [vmem:[%s1 + $0x1dc] sm:$0xf]
  %v154 = vld [vmem:[%s1 + $0x1e0] sm:$0xf]
  %v155 = vld [vmem:[%s1 + $0x1e4] sm:$0xf]
  %v156 = vld [vmem:[%s1 + $0x1e8] sm:$0xf]
  %v157 = vld [vmem:[%s1 + $0x1ec] sm:$0xf]
  %v158 = vld [vmem:[%s1 + $0x1f0] sm:$0xf]
  %v159 = vld [vmem:[%s1 + $0x1f4] sm:$0xf]
  %v160 = vld [vmem:[%s1 + $0x1f8] sm:$0xf]
  %v161 = vld [vmem:[%s1 + $0x1fc] sm:$0xf]
  %v162 = vld [vmem:[%s1 + $0x200] sm:$0xf]
  %v163 = vld [vmem:[%s1 + $0x204] sm:$0xf]
  %v164 = vld [vmem:[%s1 + $0x208] sm:$0xf]
  %v165 = vld [vmem:[%s1 + $0x20c] sm:$0xf]
  %v166 = vld [vmem:[%s1 + $0x210] sm:$0xf]
  %v167 = vld [vmem:[%s1 + $0x214] sm:$0xf]
  %v168 = vld [vmem:[%s1 + $0x218] sm:$0xf]
  %v169 = vld [vmem:[%s1 + $0x21c] sm:$0xf]
  %v170 = vld [vmem:[%s1 + $0x220] sm:$0xf]
  %v171 = vld [vmem:[%s1 + $0x224] sm:$0xf]
  %v172 = vld [vmem:[%s1 + $0x228] sm:$0xf]
  %v173 = vld [vmem:[%s1 + $0x22c] sm:$0xf]
  %v174 = vld [vmem:[%s1 + $0x230] sm:$0xf]
  %v175 = vld [vmem:[%s1 + $0x234] sm:$0xf]
  %v176 = vld [vmem:[%s1 + $0x238] sm:$0xf]
  %v177 = vld [vmem:[%s1 + $0x23c] sm:$0xf]
  %v178 = vld [vmem:[%s1 + $0x240] sm:$0xf]
  %v179 = vld [vmem:[%s1 + $0x244] sm:$0xf]
  %v180 = vld [vmem:[%s1 + $0x248] sm:$0xf]
  %v181 = vld [vmem:[%s1 + $0x24c] sm:$0xf]
  %v182 = vld [vmem:[%s1 + $0x250] sm:$0xf]
  %v183 = vld [vmem:[%s1 + $0x254] sm:$0xf]
  %v184 = vld [vmem:[%s1 + $0x258] sm:$0xf]
  %v185 = vld [vmem:[%s1 + $0x25c] sm:$0xf]
  %v186 = vld [vmem:[%s1 + $0x260] sm:$0xf]
  %v187 = vld [vmem:[%s1 + $0x264] sm:$0xf]
  %v188 = vld [vmem:[%s1 + $0x268] sm:$0xf]
  %v189 = vld [vmem:[%s1 + $0x26c] sm:$0xf]
  %v190 = vld [vmem:[%s1 + $0x270] sm:$0xf]
  %v191 = vld [vmem:[%s1 + $0x274] sm:$0xf]
  %v192 = vld [vmem:[%s1 + $0x278] sm:$0xf]
  %v193 = vld [vmem:[%s1 + $0x27c] sm:$0xf]
  %v194 = vld [vmem:[%s1 + $0x280] sm:$0xf]
  %v195 = vld [vmem:[%s1 + $0x284] sm:$0xf]
  %v196 = vld [vmem:[%s1 + $0x288] sm:$0xf]
  %v197 = vld [vmem:[%s1 + $0x28c] sm:$0xf]
  %v198 = vld [vmem:[%s1 + $0x290] sm:$0xf]
  %v199 = vld [vmem:[%s1 + $0x294] sm:$0xf]
  %v200 = vld [vmem:[%s1 + $0x298] sm:$0xf]
  %v201 = vld [vmem:[%s1 + $0x29c] sm:$0xf]
  %v202 = vld [vmem:[%s1 + $0x2a0] sm:$0xf]
  %v203 = vld [vmem:[%s1 + $0x2a4] sm:$0xf]
  %v204 = vld [vmem:[%s1 + $0x2a8] sm:$0xf]
  %v205 = vld [vmem:[%s1 + $0x2ac] sm:$0xf]
  %v206 = vld [vmem:[%s1 + $0x2b0] sm:$0xf]
  %v207 = vld [vmem:[%s1 + $0x2b4] sm:$0xf]
  %v208 = vld [vmem:[%s1 + $0x2b8] sm:$0xf]
  %v209 = vld [vmem:[%s1 + $0x2bc] sm:$0xf]
  %v210 = vld [vmem:[%s1 + $0x2c0] sm:$0xf]
  %v211 = vld [vmem:[%s1 + $0x2c4] sm:$0xf]
  %v212 = vld [vmem:[%s1 + $0x2c8] sm:$0xf]
  %v213 = vld [vmem:[%s1 + $0x2cc] sm:$0xf]
  %v214 = vld [vmem:[%s1 + $0x2d0] sm:$0xf]
  %v215 = vld [vmem:[%s1 + $0x2d4] sm:$0xf]
  %v216 = vld [vmem:[%s1 + $0x2d8] sm:$0xf]
  %v217 = vld [vmem:[%s1 + $0x2dc] sm:$0xf]
  %v218 = vld [vmem:[%s1 + $0x2e0] sm:$0xf]
  %v219 = vld [vmem:[%s1 + $0x2e4] sm:$0xf]
  %v220 = vld [vmem:[%s1 + $0x2e8] sm:$0xf]
  %v221 = vld [vmem:[%s1 + $0x2ec] sm:$0xf]
  %v222 = vld [vmem:[%s1 + $0x2f0] sm:$0xf]
  %v223 = vld [vmem:[%s1 + $0x2f4] sm:$0xf]
  %v224 = vld [vmem:[%s1 + $0x2f8] sm:$0xf]
  %v225 = vld [vmem:[%s1 + $0x2fc] sm:$0xf]
  %v226 = vld [vmem:[%s1 + $0x300] sm:$0xf]
  %v227 = vld [vmem:[%s1 + $0x304] sm:$0xf]
  %v228 = vld [vmem:[%s1 + $0x308] sm:$0xf]
  %v229 = vld [vmem:[%s1 + $0x30c] sm:$0xf]
  %v230 = vld [vmem:[%s1 + $0x310] sm:$0xf]
  %v231 = vld [vmem:[%s1 + $0x314] sm:$0xf]
  %v232 = vld [vmem:[%s1 + $0x318] sm:$0xf]
  %v233 = vld [vmem:[%s1 + $0x31c] sm:$0xf]
  %v234 = vld [vmem:[%s1 + $0x320] sm:$0xf]
  %v235 = vld [vmem:[%s1 + $0x324] sm:$0xf]
  %v236 = vld [vmem:[%s1 + $0x328] sm:$0xf]
  %v237 = vld [vmem:[%s1 + $0x32c] sm:$0xf]
  %v238 = vld [vmem:[%s1 + $0x330] sm:$0xf]
  %v239 = vld [vmem:[%s1 + $0x334] sm:$0xf]
  %v240 = vld [vmem:[%s1 + $0x338] sm:$0xf]
  %v241 = vld [vmem:[%s1 + $0x33c] sm:$0xf]
  %v242 = vld [vmem:[%s1 + $0x340] sm:$0xf]
  %v243 = vld [vmem:[%s1 + $0x344] sm:$0xf]
  %v244 = vld [vmem:[%s1 + $0x348] sm:$0xf]
  %v245 = vld [vmem:[%s1 + $0x34c] sm:$0xf]
  %v246 = vld [vmem:[%s1 + $0x350] sm:$0xf]
  %v247 = vld [vmem:[%s1 + $0x354] sm:$0xf]
  %v248 = vld [vmem:[%s1 + $0x358] sm:$0xf]
  %v249 = vld [vmem:[%s1 + $0x35c] sm:$0xf]
  %v250 = vld [vmem:[%s1 + $0x360] sm:$0xf]
  %v251 = vld [vmem:[%s1 + $0x364] sm:$0xf]
  %v252 = vld [vmem:[%s1 + $0x368] sm:$0xf]
  %v253 = vld [vmem:[%s1 + $0x36c] sm:$0xf]
  %v254 = vld [vmem:[%s1 + $0x370] sm:$0xf]
  %v255 = vld [vmem:[%s1 + $0x374] sm:$0xf]
  %v256 = vld [vmem:[%s1 + $0x378] sm:$0xf]
  %v257 = vld [vmem:[%s1 + $0x37c] sm:$0xf]
  %v258 = vld [vmem:[%s1 + $0x380] sm:$0xf]
  %v259 = vld [vmem:[%s1 + $0x384] sm:$0xf]
  %v260 = vld [vmem:[%s1 + $0x388] sm:$0xf]
  %v261 = vld [vmem:[%s1 + $0x38c] sm:$0xf]
  %v262 = vld [vmem:[%s1 + $0x390] sm:$0xf]
  %v263 = vld [vmem:[%s1 + $0x394] sm:$0xf]
  %v264 = vld [vmem:[%s1 + $0x398] sm:$0xf]
  %v265 = vld [vmem:[%s1 + $0x39c] sm:$0xf]
  %v266 = vld [vmem:[%s1 + $0x3a0] sm:$0xf]
  %v267 = vld [vmem:[%s1 + $0x3a4] sm:$0xf]
  %v268 = vld [vmem:[%s1 + $0x3a8] sm:$0xf]
  %v269 = vld [vmem:[%s1 + $0x3ac] sm:$0xf]
  %v270 = vld [vmem:[%s1 + $0x3b0] sm:$0xf]
  %v271 = vld [vmem:[%s1 + $0x3b4] sm:$0xf]
  %v272 = vld [vmem:[%s1 + $0x3b8] sm:$0xf]
  %v273 = vld [vmem:[%s1 + $0x3bc] sm:$0xf]
  %v274 = vld [vmem:[%s1 + $0x3c0] sm:$0xf]
  %v275 = vld [vmem:[%s1 + $0x3c4] sm:$0xf]
  %v276 = vld [vmem:[%s1 + $0x3c8] sm:$0xf]
  %v277 = vld [vmem:[%s1 + $0x3cc] sm:$0xf]
  %v278 = vld [vmem:[%s1 + $0x3d0] sm:$0xf]
  %v279 = vld [vmem:[%s1 + $0x3d4] sm:$0xf]
  %v280 = vld [vmem:[%s1 + $0x3d8] sm:$0xf]
  %v281 = vld [vmem:[%s1 + $0x3dc] sm:$0xf]
  %v282 = vld [vmem:[%s1 + $0x3e0] sm:$0xf]
  %v283 = vld [vmem:[%s1 + $0x3e4] sm:$0xf]
  %v284 = vld [vmem:[%s1 + $0x3e8] sm:$0xf]
  %v285 = vld [vmem:[%s1 + $0x3ec] sm:$0xf]
  %v286 = vld [vmem:[%s1 + $0x3f0] sm:$0xf]
  %v287 = vld [vmem:[%s1 + $0x3f4] sm:$0xf]
  %v288 = vld [vmem:[%s1 + $0x3f8] sm:$0xf]
  %v289 = vld [vmem:[%s1 + $0x3fc] sm:$0xf]
  %v290 = vld [vmem:[%s1 + $0x400] sm:$0xf]
  %v291 = vld [vmem:[%s1 + $0x404] sm:$0xf]
  %v292 = vld [vmem:[%s1 + $0x408] sm:$0xf]
  %v293 = vld [vmem:[%s1 + $0x40c] sm:$0xf]
  %v294 = vld [vmem:[%s1 + $0x410] sm:$0xf]
  %v295 = vld [vmem:[%s1 + $0x414] sm:$0xf]
  %v296 = vld [vmem:[%s1 + $0x418] sm:$0xf]
  %v297 = vld [vmem:[%s1 + $0x41c] sm:$0xf]
  %v298 = vld [vmem:[%s1 + $0x420] sm:$0xf]
  %v299 = vld [vmem:[%s1 + $0x424] sm:$0xf]
  %v300 = vld [vmem:[%s1 + $0x428] sm:$0xf]
  %v301 = vld [vmem:[%s1 + $0x42c] sm:$0xf]
  %v302 = vld [vmem:[%s1 + $0x430] sm:$0xf]
  %v303 = vld [vmem:[%s1 + $0x434] sm:$0xf]
  %v304 = vld [vmem:[%s1 + $0x438] sm:$0xf]
  %v305 = vld [vmem:[%s1 + $0x43c] sm:$0xf]
  %v306 = vld [vmem:[%s1 + $0x440] sm:$0xf]
  %v307 = vld [vmem:[%s1 + $0x444] sm:$0xf]
  %v308 = vld [vmem:[%s1 + $0x448] sm:$0xf]
  %v309 = vld [vmem:[%s1 + $0x44c] sm:$0xf]
  %v310 = vld [vmem:[%s1 + $0x450] sm:$0xf]
  %v311 = vld [vmem:[%s1 + $0x454] sm:$0xf]
  %v312 = vld [vmem:[%s1 + $0x458] sm:$0xf]
  %v313 = vld [vmem:[%s1 + $0x45c] sm:$0xf]
  %v314 = vld [vmem:[%s1 + $0x460] sm:$0xf]
  %v315 = vld [vmem:[%s1 + $0x464] sm:$0xf]
  %v316 = vld [vmem:[%s1 + $0x468] sm:$0xf]
  %v317 = vld [vmem:[%s1 + $0x46c] sm:$0xf]
  %v318 = vld [vmem:[%s1 + $0x470] sm:$0xf]
  %v319 = vld [vmem:[%s1 + $0x474] sm:$0xf]
  %v320 = vld [vmem:[%s1 + $0x478] sm:$0xf]
  %v321 = vld [vmem:[%s1 + $0x47c] sm:$0xf]
  %v322 = vld [vmem:[%s1 + $0x480] sm:$0xf]
  %v323 = vld [vmem:[%s1 + $0x484] sm:$0xf]
  %v324 = vld [vmem:[%s1 + $0x488] sm:$0xf]
  %v325 = vld [vmem:[%s1 + $0x48c] sm:$0xf]
  %v326 = vld [vmem:[%s1 + $0x490] sm:$0xf]
  %v327 = vld [vmem:[%s1 + $0x494] sm:$0xf]
  %v328 = vld [vmem:[%s1 + $0x498] sm:$0xf]
  %v329 = vld [vmem:[%s1 + $0x49c] sm:$0xf]
  %v330 = vld [vmem:[%s1 + $0x4a0] sm:$0xf]
  %v331 = vld [vmem:[%s1 + $0x4a4] sm:$0xf]
  %v332 = vld [vmem:[%s1 + $0x4a8] sm:$0xf]
  %v333 = vld [vmem:[%s1 + $0x4ac] sm:$0xf]
  %v334 = vld [vmem:[%s1 + $0x4b0] sm:$0xf]
  %v335 = vld [vmem:[%s1 + $0x4b4] sm:$0xf]
  %v336 = vld [vmem:[%s1 + $0x4b8] sm:$0xf]
  %v337 = vld [vmem:[%s1 + $0x4bc] sm:$0xf]
  %v338 = vld [vmem:[%s1 + $0x4c0] sm:$0xf]
  %v339 = vld [vmem:[%s1 + $0x4c4] sm:$0xf]
  %v340 = vld [vmem:[%s1 + $0x4c8] sm:$0xf]
  %v341 = vld [vmem:[%s1 + $0x4cc] sm:$0xf]
  %v342 = vld [vmem:[%s1 + $0x4d0] sm:$0xf]
  %v343 = vld [vmem:[%s1 + $0x4d4] sm:$0xf]
  %v344 = vld [vmem:[%s1 + $0x4d8] sm:$0xf]
  %v345 = vld [vmem:[%s1 + $0x4dc] sm:$0xf]
  %v346 = vld [vmem:[%s1 + $0x4e0] sm:$0xf]
  %v347 = vld [vmem:[%s1 + $0x4e4] sm:$0xf]
  %v348 = vld [vmem:[%s1 + $0x4e8] sm:$0xf]
  %v349 = vld [vmem:[%s1 + $0x4ec] sm:$0xf]
  %v350 = vld [vmem:[%s1 + $0x4f0] sm:$0xf]
  %v351 = vld [vmem:[%s1 + $0x4f4] sm:$0xf]
  %v352 = vld [vmem:[%s1 + $0x4f8] sm:$0xf]
  %v353 = vld [vmem:[%s1 + $0x4fc] sm:$0xf]
  %v354 = vld [vmem:[%s1 + $0x500] sm:$0xf]
  %v355 = vld [vmem:[%s1 + $0x504] sm:$0xf]
  %v356 = vld [vmem:[%s1 + $0x508] sm:$0xf]
  %v357 = vld [vmem:[%s1 + $0x50c] sm:$0xf]
  %v358 = vld [vmem:[%s1 + $0x510] sm:$0xf]
  %v359 = vld [vmem:[%s1 + $0x514] sm:$0xf]
  %v360 = vld [vmem:[%s1 + $0x518] sm:$0xf]
  %v361 = vld [vmem:[%s1 + $0x51c] sm:$0xf]
  %v362 = vld [vmem:[%s1 + $0x520] sm:$0xf]
  %v363 = vld [vmem:[%s1 + $0x524] sm:$0xf]
  %v364 = vld [vmem:[%s1 + $0x528] sm:$0xf]
  %v365 = vld [vmem:[%s1 + $0x52c] sm:$0xf]
  %v366 = vld [vmem:[%s1 + $0x530] sm:$0xf]
  %v367 = vld [vmem:[%s1 + $0x534] sm:$0xf]
  %v368 = vld [vmem:[%s1 + $0x538] sm:$0xf]
  %v369 = vld [vmem:[%s1 + $0x53c] sm:$0xf]
  %v370 = vld [vmem:[%s1 + $0x540] sm:$0xf]
  %v371 = vld [vmem:[%s1 + $0x544] sm:$0xf]
  %v372 = vld [vmem:[%s1 + $0x548] sm:$0xf]
  %v373 = vld [vmem:[%s1 + $0x54c] sm:$0xf]
  %v374 = vld [vmem:[%s1 + $0x550] sm:$0xf]
  %v375 = vld [vmem:[%s1 + $0x554] sm:$0xf]
  %v376 = vld [vmem:[%s1 + $0x558] sm:$0xf]
  %v377 = vld [vmem:[%s1 + $0x55c] sm:$0xf]
  %v378 = vld [vmem:[%s1 + $0x560] sm:$0xf]
  %v379 = vld [vmem:[%s1 + $0x564] sm:$0xf]
  %v380 = vld [vmem:[%s1 + $0x568] sm:$0xf]
  %v381 = vld [vmem:[%s1 + $0x56c] sm:$0xf]
  %v382 = vld [vmem:[%s1 + $0x570] sm:$0xf]
  %v383 = vld [vmem:[%s1 + $0x574] sm:$0xf]
  %v384 = vld [vmem:[%s1 + $0x578] sm:$0xf]
  %v385 = vld [vmem:[%s1 + $0x57c] sm:$0xf]
  %v386 = vld [vmem:[%s1 + $0x580] sm:$0xf]
  %v387 = vld [vmem:[%s1 + $0x584] sm:$0xf]
  %v388 = vld [vmem:[%s1 + $0x588] sm:$0xf]
  %v389 = vld [vmem:[%s1 + $0x58c] sm:$0xf]
  %v390 = vld [vmem:[%s1 + $0x590] sm:$0xf]
  %v391 = vld [vmem:[%s1 + $0x594] sm:$0xf]
  %v392 = vld [vmem:[%s1 + $0x598] sm:$0xf]
  %v393 = vld [vmem:[%s1 + $0x59c] sm:$0xf]
  %v394 = vld [vmem:[%s1 + $0x5a0] sm:$0xf]
  %v395 = vld [vmem:[%s1 + $0x5a4] sm:$0xf]
  %v396 = vld [vmem:[%s1 + $0x5a8] sm:$0xf]
  %v397 = vld [vmem:[%s1 + $0x5ac] sm:$0xf]
  %v398 = vld [vmem:[%s1 + $0x5b0] sm:$0xf]
  %v399 = vld [vmem:[%s1 + $0x5b4] sm:$0xf]
  %v400 = vld [vmem:[%s1 + $0x5b8] sm:$0xf]
  %v401 = vld [vmem:[%s1 + $0x5bc] sm:$0xf]
  %v402 = vld [vmem:[%s1 + $0x5c0] sm:$0xf]
  %v403 = vld [vmem:[%s1 + $0x5c4] sm:$0xf]
  %v404 = vld [vmem:[%s1 + $0x5c8] sm:$0xf]
  %v405 = vld [vmem:[%s1 + $0x5cc] sm:$0xf]
  %v406 = vld [vmem:[%s1 + $0x5d0] sm:$0xf]
  %v407 = vld [vmem:[%s1 + $0x5d4] sm:$0xf]
  %v408 = vld [vmem:[%s1 + $0x5d8] sm:$0xf]
  %v409 = vld [vmem:[%s1 + $0x5dc] sm:$0xf]
  %v410 = vld [vmem:[%s1 + $0x5e0] sm:$0xf]
  %v411 = vld [vmem:[%s1 + $0x5e4] sm:$0xf]
  %v412 = vld [vmem:[%s1 + $0x5e8] sm:$0xf]
  %v413 = vld [vmem:[%s1 + $0x5ec] sm:$0xf]
  %v414 = vld [vmem:[%s1 + $0x5f0] sm:$0xf]
  %v415 = vld [vmem:[%s1 + $0x5f4] sm:$0xf]
  %v416 = vld [vmem:[%s1 + $0x5f8] sm:$0xf]
  %v417 = vld [vmem:[%s1 + $0x5fc] sm:$0xf]
  %v418 = vld [vmem:[%s1 + $0x600] sm:$0xf]
  %v419 = vld [vmem:[%s1 + $0x604] sm:$0xf]
  %v420 = vld [vmem:[%s1 + $0x608] sm:$0xf]
  %v421 = vld [vmem:[%s1 + $0x60c] sm:$0xf]
  %v422 = vld [vmem:[%s1 + $0x610] sm:$0xf]
  %v423 = vld [vmem:[%s1 + $0x614] sm:$0xf]
  %v424 = vld [vmem:[%s1 + $0x618] sm:$0xf]
  %v425 = vld [vmem:[%s1 + $0x61c] sm:$0xf]
  %v426 = vld [vmem:[%s2] sm:$0x1]
  %v428 = vlaneseq
  %v429 = vshrl.u32 %v428, 7
  %v430 = vsub.s32 0, %v429
  %v431 = vrot.slane %v426, %v430
  %v446 = vunpack.c.l.b16 %v21
  %v447 = vunpack.c.h.b16 %v21
  %v448 = vunpack.c.l.b16 %v22
  %v449 = vunpack.c.h.b16 %v22
  %v450 = vunpack.c.l.b16 %v23
  %v451 = vunpack.c.h.b16 %v23
  %v452 = vunpack.c.l.b16 %v24
  %v453 = vunpack.c.h.b16 %v24
  %v454 = vunpack.c.l.b16 %v25
  %v455 = vunpack.c.h.b16 %v25
  %v456 = vunpack.c.l.b16 %v26
  %v457 = vunpack.c.h.b16 %v26
  %v458 = vunpack.c.l.b16 %v27
  %v459 = vunpack.c.h.b16 %v27
  %v460 = vunpack.c.l.b16 %v28
  %v461 = vunpack.c.h.b16 %v28
  %v462 = vunpack.c.l.b16 %v29
  %v463 = vunpack.c.h.b16 %v29
  %v464 = vunpack.c.l.b16 %v30
  %v465 = vunpack.c.h.b16 %v30
  %v466 = vunpack.c.l.b16 %v31
  %v467 = vunpack.c.h.b16 %v31
  %v468 = vunpack.c.l.b16 %v32
  %v469 = vunpack.c.h.b16 %v32
  %v470 = vunpack.c.l.b16 %v33
  %v471 = vpack.c.b16 %v446, %v446
  %v472 = vpack.c.b16 %v447, %v447
  %v473 = vpack.c.b16 %v448, %v448
  %v474 = vpack.c.b16 %v449, %v449
  %v475 = vpack.c.b16 %v450, %v450
  %v476 = vpack.c.b16 %v451, %v451
  %v477 = vpack.c.b16 %v452, %v452
  %v478 = vpack.c.b16 %v453, %v453
  %v479 = vpack.c.b16 %v454, %v454
  %v480 = vpack.c.b16 %v455, %v455
  %v481 = vpack.c.b16 %v456, %v456
  %v482 = vpack.c.b16 %v457, %v457
  %v483 = vpack.c.b16 %v458, %v458
  %v484 = vpack.c.b16 %v459, %v459
  %v485 = vpack.c.b16 %v460, %v460
  %v486 = vpack.c.b16 %v461, %v461
  %v487 = vpack.c.b16 %v462, %v462
  %v488 = vpack.c.b16 %v463, %v463
  %v489 = vpack.c.b16 %v464, %v464
  %v490 = vpack.c.b16 %v465, %v465
  %v491 = vpack.c.b16 %v466, %v466
  %v492 = vpack.c.b16 %v467, %v467
  %v493 = vpack.c.b16 %v468, %v468
  %v494 = vpack.c.b16 %v469, %v469
  %v495 = vpack.c.b16 %v470, %v470
  %v912 = vunpack.c.l.b16 %v34
  %v913 = vunpack.c.l.b16 %v35
  %v914 = vunpack.c.l.b16 %v36
  %v915 = vunpack.c.l.b16 %v37
  %v916 = vunpack.c.l.b16 %v38
  %v917 = vunpack.c.l.b16 %v39
  %v918 = vunpack.c.l.b16 %v40
  %v919 = vunpack.c.l.b16 %v41
  %v920 = vunpack.c.l.b16 %v42
  %v921 = vunpack.c.l.b16 %v43
  %v922 = vunpack.c.l.b16 %v44
  %v923 = vunpack.c.l.b16 %v45
  %v924 = vunpack.c.l.b16 %v46
  %v925 = vunpack.c.l.b16 %v47
  %v926 = vunpack.c.l.b16 %v48
  %v927 = vunpack.c.l.b16 %v49
  %v928 = vunpack.c.l.b16 %v50
  %v929 = vunpack.c.l.b16 %v51
  %v930 = vunpack.c.l.b16 %v52
  %v931 = vunpack.c.l.b16 %v53
  %v932 = vunpack.c.l.b16 %v54
  %v933 = vunpack.c.l.b16 %v55
  %v934 = vunpack.c.l.b16 %v56
  %v935 = vunpack.c.l.b16 %v57
  %v936 = vunpack.c.l.b16 %v58
  %v937 = vunpack.c.l.b16 %v59
  %v938 = vunpack.c.l.b16 %v60
  %v939 = vunpack.c.l.b16 %v61
  %v940 = vunpack.c.l.b16 %v62
  %v941 = vunpack.c.l.b16 %v63
  %v942 = vunpack.c.l.b16 %v64
  %v943 = vunpack.c.l.b16 %v65
  %v944 = vunpack.c.l.b16 %v66
  %v945 = vunpack.c.l.b16 %v67
  %v946 = vunpack.c.l.b16 %v68
  %v947 = vunpack.c.l.b16 %v69
  %v948 = vunpack.c.l.b16 %v70
  %v949 = vunpack.c.l.b16 %v71
  %v950 = vunpack.c.l.b16 %v72
  %v951 = vunpack.c.l.b16 %v73
  %v952 = vunpack.c.l.b16 %v74
  %v953 = vunpack.c.l.b16 %v75
  %v954 = vunpack.c.l.b16 %v76
  %v955 = vunpack.c.l.b16 %v77
  %v956 = vunpack.c.l.b16 %v78
  %v957 = vunpack.c.l.b16 %v79
  %v958 = vunpack.c.l.b16 %v80
  %v959 = vunpack.c.l.b16 %v81
  %v960 = vunpack.c.l.b16 %v82
  %v961 = vunpack.c.l.b16 %v83
  %v962 = vunpack.c.l.b16 %v84
  %v963 = vunpack.c.l.b16 %v85
  %v964 = vunpack.c.l.b16 %v86
  %v965 = vunpack.c.l.b16 %v87
  %v966 = vunpack.c.l.b16 %v88
  %v967 = vunpack.c.l.b16 %v89
  %v968 = vunpack.c.l.b16 %v90
  %v969 = vunpack.c.l.b16 %v91
  %v970 = vunpack.c.l.b16 %v92
  %v971 = vunpack.c.l.b16 %v93
  %v972 = vunpack.c.l.b16 %v94
  %v973 = vunpack.c.l.b16 %v95
  %v974 = vunpack.c.l.b16 %v96
  %v975 = vunpack.c.l.b16 %v97
  %v976 = vunpack.c.l.b16 %v98
  %v977 = vunpack.c.l.b16 %v99
  %v978 = vunpack.c.l.b16 %v100
  %v979 = vunpack.c.l.b16 %v101
  %v980 = vunpack.c.l.b16 %v102
  %v981 = vunpack.c.l.b16 %v103
  %v982 = vunpack.c.l.b16 %v104
  %v983 = vunpack.c.l.b16 %v105
  %v984 = vunpack.c.l.b16 %v106
  %v985 = vunpack.c.l.b16 %v107
  %v986 = vunpack.c.l.b16 %v108
  %v987 = vunpack.c.l.b16 %v109
  %v988 = vunpack.c.l.b16 %v110
  %v989 = vunpack.c.l.b16 %v111
  %v990 = vunpack.c.l.b16 %v112
  %v991 = vunpack.c.l.b16 %v113
  %v992 = vunpack.c.l.b16 %v114
  %v993 = vunpack.c.l.b16 %v115
  %v994 = vunpack.c.l.b16 %v116
  %v995 = vunpack.c.l.b16 %v117
  %v996 = vunpack.c.l.b16 %v118
  %v997 = vunpack.c.l.b16 %v119
  %v998 = vunpack.c.l.b16 %v120
  %v999 = vunpack.c.l.b16 %v121
  %v1000 = vunpack.c.l.b16 %v122
  %v1001 = vunpack.c.l.b16 %v123
  %v1002 = vunpack.c.l.b16 %v124
  %v1003 = vunpack.c.l.b16 %v125
  %v1004 = vunpack.c.l.b16 %v126
  %v1005 = vunpack.c.l.b16 %v127
  %v1006 = vunpack.c.l.b16 %v128
  %v1007 = vunpack.c.l.b16 %v129
  %v1008 = vunpack.c.l.b16 %v130
  %v1009 = vunpack.c.l.b16 %v131
  %v1010 = vunpack.c.l.b16 %v132
  %v1011 = vunpack.c.l.b16 %v133
  %v1012 = vunpack.c.l.b16 %v134
  %v1013 = vunpack.c.l.b16 %v135
  %v1014 = vunpack.c.l.b16 %v136
  %v1015 = vunpack.c.l.b16 %v137
  %v1016 = vunpack.c.l.b16 %v138
  %v1017 = vunpack.c.l.b16 %v139
  %v1018 = vunpack.c.l.b16 %v140
  %v1019 = vunpack.c.l.b16 %v141
  %v1020 = vunpack.c.l.b16 %v142
  %v1021 = vunpack.c.l.b16 %v143
  %v1022 = vunpack.c.l.b16 %v144
  %v1023 = vunpack.c.l.b16 %v145
  %v1024 = vunpack.c.l.b16 %v146
  %v1025 = vunpack.c.l.b16 %v147
  %v1026 = vunpack.c.l.b16 %v148
  %v1027 = vunpack.c.l.b16 %v149
  %v1028 = vunpack.c.l.b16 %v150
  %v1029 = vunpack.c.l.b16 %v151
  %v1030 = vunpack.c.l.b16 %v152
  %v1031 = vunpack.c.l.b16 %v153
  %v1032 = vunpack.c.l.b16 %v154
  %v1033 = vunpack.c.l.b16 %v155
  %v1034 = vunpack.c.l.b16 %v156
  %v1035 = vunpack.c.l.b16 %v157
  %v1036 = vunpack.c.l.b16 %v158
  %v1037 = vunpack.c.l.b16 %v159
  %v1038 = vunpack.c.l.b16 %v160
  %v1039 = vunpack.c.l.b16 %v161
  %v1040 = vunpack.c.l.b16 %v162
  %v1041 = vunpack.c.l.b16 %v163
  %v1042 = vunpack.c.l.b16 %v164
  %v1043 = vunpack.c.l.b16 %v165
  %v1044 = vunpack.c.l.b16 %v166
  %v1045 = vunpack.c.l.b16 %v167
  %v1046 = vunpack.c.l.b16 %v168
  %v1047 = vunpack.c.l.b16 %v169
  %v1048 = vunpack.c.l.b16 %v170
  %v1049 = vunpack.c.l.b16 %v171
  %v1050 = vunpack.c.l.b16 %v172
  %v1051 = vunpack.c.l.b16 %v173
  %v1052 = vunpack.c.l.b16 %v174
  %v1053 = vunpack.c.l.b16 %v175
  %v1054 = vunpack.c.l.b16 %v176
  %v1055 = vunpack.c.l.b16 %v177
  %v1056 = vunpack.c.l.b16 %v178
  %v1057 = vunpack.c.l.b16 %v179
  %v1058 = vunpack.c.l.b16 %v180
  %v1059 = vunpack.c.l.b16 %v181
  %v1060 = vunpack.c.l.b16 %v182
  %v1061 = vunpack.c.l.b16 %v183
  %v1062 = vunpack.c.l.b16 %v184
  %v1063 = vunpack.c.l.b16 %v185
  %v1064 = vunpack.c.l.b16 %v186
  %v1065 = vunpack.c.l.b16 %v187
  %v1066 = vunpack.c.l.b16 %v188
  %v1067 = vunpack.c.l.b16 %v189
  %v1068 = vunpack.c.l.b16 %v190
  %v1069 = vunpack.c.l.b16 %v191
  %v1070 = vunpack.c.l.b16 %v192
  %v1071 = vunpack.c.l.b16 %v193
  %v1072 = vunpack.c.l.b16 %v194
  %v1073 = vunpack.c.l.b16 %v195
  %v1074 = vunpack.c.l.b16 %v196
  %v1075 = vunpack.c.l.b16 %v197
  %v1076 = vunpack.c.l.b16 %v198
  %v1077 = vunpack.c.l.b16 %v199
  %v1078 = vunpack.c.l.b16 %v200
  %v1079 = vunpack.c.l.b16 %v201
  %v1080 = vunpack.c.l.b16 %v202
  %v1081 = vunpack.c.l.b16 %v203
  %v1082 = vunpack.c.l.b16 %v204
  %v1083 = vunpack.c.l.b16 %v205
  %v1084 = vunpack.c.l.b16 %v206
  %v1085 = vunpack.c.l.b16 %v207
  %v1086 = vunpack.c.l.b16 %v208
  %v1087 = vunpack.c.l.b16 %v209
  %v1088 = vunpack.c.l.b16 %v210
  %v1089 = vunpack.c.l.b16 %v211
  %v1090 = vunpack.c.l.b16 %v212
  %v1091 = vunpack.c.l.b16 %v213
  %v1092 = vunpack.c.l.b16 %v214
  %v1093 = vunpack.c.l.b16 %v215
  %v1094 = vunpack.c.l.b16 %v216
  %v1095 = vunpack.c.l.b16 %v217
  %v1096 = vunpack.c.l.b16 %v218
  %v1097 = vunpack.c.l.b16 %v219
  %v1098 = vunpack.c.l.b16 %v220
  %v1099 = vunpack.c.l.b16 %v221
  %v1100 = vunpack.c.l.b16 %v222
  %v1101 = vunpack.c.l.b16 %v223
  %v1102 = vunpack.c.l.b16 %v224
  %v1103 = vunpack.c.l.b16 %v225
  %v1104 = vunpack.c.l.b16 %v226
  %v1105 = vunpack.c.l.b16 %v227
  %v1106 = vunpack.c.l.b16 %v228
  %v1107 = vunpack.c.l.b16 %v229
  %v1108 = vunpack.c.l.b16 %v230
  %v1109 = vunpack.c.l.b16 %v231
  %v1110 = vunpack.c.l.b16 %v232
  %v1111 = vunpack.c.l.b16 %v233
  %v1112 = vunpack.c.l.b16 %v234
  %v1113 = vunpack.c.l.b16 %v235
  %v1114 = vunpack.c.l.b16 %v236
  %v1115 = vunpack.c.l.b16 %v237
  %v1116 = vunpack.c.l.b16 %v238
  %v1117 = vunpack.c.l.b16 %v239
  %v1118 = vunpack.c.l.b16 %v240
  %v1119 = vunpack.c.l.b16 %v241
  %v1120 = vunpack.c.l.b16 %v242
  %v1121 = vunpack.c.l.b16 %v243
  %v1122 = vunpack.c.l.b16 %v244
  %v1123 = vunpack.c.l.b16 %v245
  %v1124 = vunpack.c.l.b16 %v246
  %v1125 = vunpack.c.l.b16 %v247
  %v1126 = vunpack.c.l.b16 %v248
  %v1127 = vunpack.c.l.b16 %v249
  %v1128 = vunpack.c.l.b16 %v250
  %v1129 = vunpack.c.l.b16 %v251
  %v1130 = vunpack.c.l.b16 %v252
  %v1131 = vunpack.c.l.b16 %v253
  %v1132 = vunpack.c.l.b16 %v254
  %v1133 = vunpack.c.l.b16 %v255
  %v1134 = vunpack.c.l.b16 %v256
  %v1135 = vunpack.c.l.b16 %v257
  %v1136 = vunpack.c.l.b16 %v258
  %v1137 = vunpack.c.l.b16 %v259
  %v1138 = vunpack.c.l.b16 %v260
  %v1139 = vunpack.c.l.b16 %v261
  %v1140 = vunpack.c.l.b16 %v262
  %v1141 = vunpack.c.l.b16 %v263
  %v1142 = vunpack.c.l.b16 %v264
  %v1143 = vunpack.c.l.b16 %v265
  %v1144 = vunpack.c.l.b16 %v266
  %v1145 = vunpack.c.l.b16 %v267
  %v1146 = vunpack.c.l.b16 %v268
  %v1147 = vunpack.c.l.b16 %v269
  %v1148 = vunpack.c.l.b16 %v270
  %v1149 = vunpack.c.l.b16 %v271
  %v1150 = vunpack.c.l.b16 %v272
  %v1151 = vunpack.c.l.b16 %v273
  %v1152 = vunpack.c.l.b16 %v274
  %v1153 = vunpack.c.l.b16 %v275
  %v1154 = vunpack.c.l.b16 %v276
  %v1155 = vunpack.c.l.b16 %v277
  %v1156 = vunpack.c.l.b16 %v278
  %v1157 = vunpack.c.l.b16 %v279
  %v1158 = vunpack.c.l.b16 %v280
  %v1159 = vunpack.c.l.b16 %v281
  %v1160 = vunpack.c.l.b16 %v282
  %v1161 = vunpack.c.l.b16 %v283
  %v1162 = vunpack.c.l.b16 %v284
  %v1163 = vunpack.c.l.b16 %v285
  %v1164 = vunpack.c.l.b16 %v286
  %v1165 = vunpack.c.l.b16 %v287
  %v1166 = vunpack.c.l.b16 %v288
  %v1167 = vunpack.c.l.b16 %v289
  %v1168 = vunpack.c.l.b16 %v290
  %v1169 = vunpack.c.l.b16 %v291
  %v1170 = vunpack.c.l.b16 %v292
  %v1171 = vunpack.c.l.b16 %v293
  %v1172 = vunpack.c.l.b16 %v294
  %v1173 = vunpack.c.l.b16 %v295
  %v1174 = vunpack.c.l.b16 %v296
  %v1175 = vunpack.c.l.b16 %v297
  %v1176 = vunpack.c.l.b16 %v298
  %v1177 = vunpack.c.l.b16 %v299
  %v1178 = vunpack.c.l.b16 %v300
  %v1179 = vunpack.c.l.b16 %v301
  %v1180 = vunpack.c.l.b16 %v302
  %v1181 = vunpack.c.l.b16 %v303
  %v1182 = vunpack.c.l.b16 %v304
  %v1183 = vunpack.c.l.b16 %v305
  %v1184 = vunpack.c.l.b16 %v306
  %v1185 = vunpack.c.l.b16 %v307
  %v1186 = vunpack.c.l.b16 %v308
  %v1187 = vunpack.c.l.b16 %v309
  %v1188 = vunpack.c.l.b16 %v310
  %v1189 = vunpack.c.l.b16 %v311
  %v1190 = vunpack.c.l.b16 %v312
  %v1191 = vunpack.c.l.b16 %v313
  %v1192 = vunpack.c.l.b16 %v314
  %v1193 = vunpack.c.l.b16 %v315
  %v1194 = vunpack.c.l.b16 %v316
  %v1195 = vunpack.c.l.b16 %v317
  %v1196 = vunpack.c.l.b16 %v318
  %v1197 = vunpack.c.l.b16 %v319
  %v1198 = vunpack.c.l.b16 %v320
  %v1199 = vunpack.c.l.b16 %v321
  %v1200 = vunpack.c.l.b16 %v322
  %v1201 = vunpack.c.l.b16 %v323
  %v1202 = vunpack.c.l.b16 %v324
  %v1203 = vunpack.c.l.b16 %v325
  %v1204 = vunpack.c.l.b16 %v326
  %v1205 = vunpack.c.l.b16 %v327
  %v1206 = vunpack.c.l.b16 %v328
  %v1207 = vunpack.c.l.b16 %v329
  %v1208 = vunpack.c.l.b16 %v330
  %v1209 = vunpack.c.l.b16 %v331
  %v1210 = vunpack.c.l.b16 %v332
  %v1211 = vunpack.c.l.b16 %v333
  %v1212 = vunpack.c.l.b16 %v334
  %v1213 = vunpack.c.l.b16 %v335
  %v1214 = vunpack.c.l.b16 %v336
  %v1215 = vunpack.c.l.b16 %v337
  %v1216 = vunpack.c.l.b16 %v338
  %v1217 = vunpack.c.l.b16 %v339
  %v1218 = vunpack.c.l.b16 %v340
  %v1219 = vunpack.c.l.b16 %v341
  %v1220 = vunpack.c.l.b16 %v342
  %v1221 = vunpack.c.l.b16 %v343
  %v1222 = vunpack.c.l.b16 %v344
  %v1223 = vunpack.c.l.b16 %v345
  %v1224 = vunpack.c.l.b16 %v346
  %v1225 = vunpack.c.l.b16 %v347
  %v1226 = vunpack.c.l.b16 %v348
  %v1227 = vunpack.c.l.b16 %v349
  %v1228 = vunpack.c.l.b16 %v350
  %v1229 = vunpack.c.l.b16 %v351
  %v1230 = vunpack.c.l.b16 %v352
  %v1231 = vunpack.c.l.b16 %v353
  %v1232 = vunpack.c.l.b16 %v354
  %v1233 = vunpack.c.l.b16 %v355
  %v1234 = vunpack.c.l.b16 %v356
  %v1235 = vunpack.c.l.b16 %v357
  %v1236 = vunpack.c.l.b16 %v358
  %v1237 = vunpack.c.l.b16 %v359
  %v1238 = vunpack.c.l.b16 %v360
  %v1239 = vunpack.c.l.b16 %v361
  %v1240 = vunpack.c.l.b16 %v362
  %v1241 = vunpack.c.l.b16 %v363
  %v1242 = vunpack.c.l.b16 %v364
  %v1243 = vunpack.c.l.b16 %v365
  %v1244 = vunpack.c.l.b16 %v366
  %v1245 = vunpack.c.l.b16 %v367
  %v1246 = vunpack.c.l.b16 %v368
  %v1247 = vunpack.c.l.b16 %v369
  %v1248 = vunpack.c.l.b16 %v370
  %v1249 = vunpack.c.l.b16 %v371
  %v1250 = vunpack.c.l.b16 %v372
  %v1251 = vunpack.c.l.b16 %v373
  %v1252 = vunpack.c.l.b16 %v374
  %v1253 = vunpack.c.l.b16 %v375
  %v1254 = vunpack.c.l.b16 %v376
  %v1255 = vunpack.c.l.b16 %v377
  %v1256 = vunpack.c.l.b16 %v378
  %v1257 = vunpack.c.l.b16 %v379
  %v1258 = vunpack.c.l.b16 %v380
  %v1259 = vunpack.c.l.b16 %v381
  %v1260 = vunpack.c.l.b16 %v382
  %v1261 = vunpack.c.l.b16 %v383
  %v1262 = vunpack.c.l.b16 %v384
  %v1263 = vunpack.c.l.b16 %v385
  %v1264 = vunpack.c.l.b16 %v386
  %v1265 = vunpack.c.l.b16 %v387
  %v1266 = vunpack.c.l.b16 %v388
  %v1267 = vunpack.c.l.b16 %v389
  %v1268 = vunpack.c.l.b16 %v390
  %v1269 = vunpack.c.l.b16 %v391
  %v1270 = vunpack.c.l.b16 %v392
  %v1271 = vunpack.c.l.b16 %v393
  %v1272 = vunpack.c.l.b16 %v394
  %v1273 = vunpack.c.l.b16 %v395
  %v1274 = vunpack.c.l.b16 %v396
  %v1275 = vunpack.c.l.b16 %v397
  %v1276 = vunpack.c.l.b16 %v398
  %v1277 = vunpack.c.l.b16 %v399
  %v1278 = vunpack.c.l.b16 %v400
  %v1279 = vunpack.c.l.b16 %v401
  %v1280 = vunpack.c.l.b16 %v402
  %v1281 = vunpack.c.l.b16 %v403
  %v1282 = vunpack.c.l.b16 %v404
  %v1283 = vunpack.c.l.b16 %v405
  %v1284 = vunpack.c.l.b16 %v406
  %v1285 = vunpack.c.l.b16 %v407
  %v1286 = vunpack.c.l.b16 %v408
  %v1287 = vunpack.c.l.b16 %v409
  %v1288 = vunpack.c.l.b16 %v410
  %v1289 = vunpack.c.l.b16 %v411
  %v1290 = vunpack.c.l.b16 %v412
  %v1291 = vunpack.c.l.b16 %v413
  %v1292 = vunpack.c.l.b16 %v414
  %v1293 = vunpack.c.l.b16 %v415
  %v1294 = vunpack.c.l.b16 %v416
  %v1295 = vunpack.c.l.b16 %v417
  %v1296 = vunpack.c.l.b16 %v418
  %v1297 = vunpack.c.l.b16 %v419
  %v1298 = vunpack.c.l.b16 %v420
  %v1299 = vunpack.c.l.b16 %v421
  %v1300 = vunpack.c.l.b16 %v422
  %v1301 = vunpack.c.l.b16 %v423
  %v1302 = vunpack.c.l.b16 %v424
  %v1303 = vunpack.c.l.b16 %v425
  %v1304 = vpack.c.b16 %v913, %v912
  %v1305 = vpack.c.b16 %v915, %v914
  %v1306 = vpack.c.b16 %v917, %v916
  %v1307 = vpack.c.b16 %v919, %v918
  %v1308 = vpack.c.b16 %v921, %v920
  %v1309 = vpack.c.b16 %v923, %v922
  %v1310 = vpack.c.b16 %v925, %v924
  %v1311 = vpack.c.b16 %v927, %v926
  %v1312 = vpack.c.b16 %v929, %v928
  %v1313 = vpack.c.b16 %v931, %v930
  %v1314 = vpack.c.b16 %v933, %v932
  %v1315 = vpack.c.b16 %v935, %v934
  %v1316 = vpack.c.b16 %v937, %v936
  %v1317 = vpack.c.b16 %v939, %v938
  %v1318 = vpack.c.b16 %v941, %v940
  %v1319 = vpack.c.b16 %v943, %v942
  %v1320 = vpack.c.b16 %v945, %v944
  %v1321 = vpack.c.b16 %v947, %v946
  %v1322 = vpack.c.b16 %v949, %v948
  %v1323 = vpack.c.b16 %v951, %v950
  %v1324 = vpack.c.b16 %v953, %v952
  %v1325 = vpack.c.b16 %v955, %v954
  %v1326 = vpack.c.b16 %v957, %v956
  %v1327 = vpack.c.b16 %v959, %v958
  %v1328 = vpack.c.b16 %v961, %v960
  %v1329 = vpack.c.b16 %v963, %v962
  %v1330 = vpack.c.b16 %v965, %v964
  %v1331 = vpack.c.b16 %v967, %v966
  %v1332 = vpack.c.b16 %v969, %v968
  %v1333 = vpack.c.b16 %v971, %v970
  %v1334 = vpack.c.b16 %v973, %v972
  %v1335 = vpack.c.b16 %v975, %v974
  %v1336 = vpack.c.b16 %v977, %v976
  %v1337 = vpack.c.b16 %v979, %v978
  %v1338 = vpack.c.b16 %v981, %v980
  %v1339 = vpack.c.b16 %v983, %v982
  %v1340 = vpack.c.b16 %v985, %v984
  %v1341 = vpack.c.b16 %v987, %v986
  %v1342 = vpack.c.b16 %v989, %v988
  %v1343 = vpack.c.b16 %v991, %v990
  %v1344 = vpack.c.b16 %v993, %v992
  %v1345 = vpack.c.b16 %v995, %v994
  %v1346 = vpack.c.b16 %v997, %v996
  %v1347 = vpack.c.b16 %v999, %v998
  %v1348 = vpack.c.b16 %v1001, %v1000
  %v1349 = vpack.c.b16 %v1003, %v1002
  %v1350 = vpack.c.b16 %v1005, %v1004
  %v1351 = vpack.c.b16 %v1007, %v1006
  %v1352 = vpack.c.b16 %v1009, %v1008
  %v1353 = vpack.c.b16 %v1011, %v1010
  %v1354 = vpack.c.b16 %v1013, %v1012
  %v1355 = vpack.c.b16 %v1015, %v1014
  %v1356 = vpack.c.b16 %v1017, %v1016
  %v1357 = vpack.c.b16 %v1019, %v1018
  %v1358 = vpack.c.b16 %v1021, %v1020
  %v1359 = vpack.c.b16 %v1023, %v1022
  %v1360 = vpack.c.b16 %v1025, %v1024
  %v1361 = vpack.c.b16 %v1027, %v1026
  %v1362 = vpack.c.b16 %v1029, %v1028
  %v1363 = vpack.c.b16 %v1031, %v1030
  %v1364 = vpack.c.b16 %v1033, %v1032
  %v1365 = vpack.c.b16 %v1035, %v1034
  %v1366 = vpack.c.b16 %v1037, %v1036
  %v1367 = vpack.c.b16 %v1039, %v1038
  %v1368 = vpack.c.b16 %v1041, %v1040
  %v1369 = vpack.c.b16 %v1043, %v1042
  %v1370 = vpack.c.b16 %v1045, %v1044
  %v1371 = vpack.c.b16 %v1047, %v1046
  %v1372 = vpack.c.b16 %v1049, %v1048
  %v1373 = vpack.c.b16 %v1051, %v1050
  %v1374 = vpack.c.b16 %v1053, %v1052
  %v1375 = vpack.c.b16 %v1055, %v1054
  %v1376 = vpack.c.b16 %v1057, %v1056
  %v1377 = vpack.c.b16 %v1059, %v1058
  %v1378 = vpack.c.b16 %v1061, %v1060
  %v1379 = vpack.c.b16 %v1063, %v1062
  %v1380 = vpack.c.b16 %v1065, %v1064
  %v1381 = vpack.c.b16 %v1067, %v1066
  %v1382 = vpack.c.b16 %v1069, %v1068
  %v1383 = vpack.c.b16 %v1071, %v1070
  %v1384 = vpack.c.b16 %v1073, %v1072
  %v1385 = vpack.c.b16 %v1075, %v1074
  %v1386 = vpack.c.b16 %v1077, %v1076
  %v1387 = vpack.c.b16 %v1079, %v1078
  %v1388 = vpack.c.b16 %v1081, %v1080
  %v1389 = vpack.c.b16 %v1083, %v1082
  %v1390 = vpack.c.b16 %v1085, %v1084
  %v1391 = vpack.c.b16 %v1087, %v1086
  %v1392 = vpack.c.b16 %v1089, %v1088
  %v1393 = vpack.c.b16 %v1091, %v1090
  %v1394 = vpack.c.b16 %v1093, %v1092
  %v1395 = vpack.c.b16 %v1095, %v1094
  %v1396 = vpack.c.b16 %v1097, %v1096
  %v1397 = vpack.c.b16 %v1099, %v1098
  %v1398 = vpack.c.b16 %v1101, %v1100
  %v1399 = vpack.c.b16 %v1103, %v1102
  %v1400 = vpack.c.b16 %v1105, %v1104
  %v1401 = vpack.c.b16 %v1107, %v1106
  %v1402 = vpack.c.b16 %v1109, %v1108
  %v1403 = vpack.c.b16 %v1111, %v1110
  %v1404 = vpack.c.b16 %v1113, %v1112
  %v1405 = vpack.c.b16 %v1115, %v1114
  %v1406 = vpack.c.b16 %v1117, %v1116
  %v1407 = vpack.c.b16 %v1119, %v1118
  %v1408 = vpack.c.b16 %v1121, %v1120
  %v1409 = vpack.c.b16 %v1123, %v1122
  %v1410 = vpack.c.b16 %v1125, %v1124
  %v1411 = vpack.c.b16 %v1127, %v1126
  %v1412 = vpack.c.b16 %v1129, %v1128
  %v1413 = vpack.c.b16 %v1131, %v1130
  %v1414 = vpack.c.b16 %v1133, %v1132
  %v1415 = vpack.c.b16 %v1135, %v1134
  %v1416 = vpack.c.b16 %v1137, %v1136
  %v1417 = vpack.c.b16 %v1139, %v1138
  %v1418 = vpack.c.b16 %v1141, %v1140
  %v1419 = vpack.c.b16 %v1143, %v1142
  %v1420 = vpack.c.b16 %v1145, %v1144
  %v1421 = vpack.c.b16 %v1147, %v1146
  %v1422 = vpack.c.b16 %v1149, %v1148
  %v1423 = vpack.c.b16 %v1151, %v1150
  %v1424 = vpack.c.b16 %v1153, %v1152
  %v1425 = vpack.c.b16 %v1155, %v1154
  %v1426 = vpack.c.b16 %v1157, %v1156
  %v1427 = vpack.c.b16 %v1159, %v1158
  %v1428 = vpack.c.b16 %v1161, %v1160
  %v1429 = vpack.c.b16 %v1163, %v1162
  %v1430 = vpack.c.b16 %v1165, %v1164
  %v1431 = vpack.c.b16 %v1167, %v1166
  %v1432 = vpack.c.b16 %v1169, %v1168
  %v1433 = vpack.c.b16 %v1171, %v1170
  %v1434 = vpack.c.b16 %v1173, %v1172
  %v1435 = vpack.c.b16 %v1175, %v1174
  %v1436 = vpack.c.b16 %v1177, %v1176
  %v1437 = vpack.c.b16 %v1179, %v1178
  %v1438 = vpack.c.b16 %v1181, %v1180
  %v1439 = vpack.c.b16 %v1183, %v1182
  %v1440 = vpack.c.b16 %v1185, %v1184
  %v1441 = vpack.c.b16 %v1187, %v1186
  %v1442 = vpack.c.b16 %v1189, %v1188
  %v1443 = vpack.c.b16 %v1191, %v1190
  %v1444 = vpack.c.b16 %v1193, %v1192
  %v1445 = vpack.c.b16 %v1195, %v1194
  %v1446 = vpack.c.b16 %v1197, %v1196
  %v1447 = vpack.c.b16 %v1199, %v1198
  %v1448 = vpack.c.b16 %v1201, %v1200
  %v1449 = vpack.c.b16 %v1203, %v1202
  %v1450 = vpack.c.b16 %v1205, %v1204
  %v1451 = vpack.c.b16 %v1207, %v1206
  %v1452 = vpack.c.b16 %v1209, %v1208
  %v1453 = vpack.c.b16 %v1211, %v1210
  %v1454 = vpack.c.b16 %v1213, %v1212
  %v1455 = vpack.c.b16 %v1215, %v1214
  %v1456 = vpack.c.b16 %v1217, %v1216
  %v1457 = vpack.c.b16 %v1219, %v1218
  %v1458 = vpack.c.b16 %v1221, %v1220
  %v1459 = vpack.c.b16 %v1223, %v1222
  %v1460 = vpack.c.b16 %v1225, %v1224
  %v1461 = vpack.c.b16 %v1227, %v1226
  %v1462 = vpack.c.b16 %v1229, %v1228
  %v1463 = vpack.c.b16 %v1231, %v1230
  %v1464 = vpack.c.b16 %v1233, %v1232
  %v1465 = vpack.c.b16 %v1235, %v1234
  %v1466 = vpack.c.b16 %v1237, %v1236
  %v1467 = vpack.c.b16 %v1239, %v1238
  %v1468 = vpack.c.b16 %v1241, %v1240
  %v1469 = vpack.c.b16 %v1243, %v1242
  %v1470 = vpack.c.b16 %v1245, %v1244
  %v1471 = vpack.c.b16 %v1247, %v1246
  %v1472 = vpack.c.b16 %v1249, %v1248
  %v1473 = vpack.c.b16 %v1251, %v1250
  %v1474 = vpack.c.b16 %v1253, %v1252
  %v1475 = vpack.c.b16 %v1255, %v1254
  %v1476 = vpack.c.b16 %v1257, %v1256
  %v1477 = vpack.c.b16 %v1259, %v1258
  %v1478 = vpack.c.b16 %v1261, %v1260
  %v1479 = vpack.c.b16 %v1263, %v1262
  %v1480 = vpack.c.b16 %v1265, %v1264
  %v1481 = vpack.c.b16 %v1267, %v1266
  %v1482 = vpack.c.b16 %v1269, %v1268
  %v1483 = vpack.c.b16 %v1271, %v1270
  %v1484 = vpack.c.b16 %v1273, %v1272
  %v1485 = vpack.c.b16 %v1275, %v1274
  %v1486 = vpack.c.b16 %v1277, %v1276
  %v1487 = vpack.c.b16 %v1279, %v1278
  %v1488 = vpack.c.b16 %v1281, %v1280
  %v1489 = vpack.c.b16 %v1283, %v1282
  %v1490 = vpack.c.b16 %v1285, %v1284
  %v1491 = vpack.c.b16 %v1287, %v1286
  %v1492 = vpack.c.b16 %v1289, %v1288
  %v1493 = vpack.c.b16 %v1291, %v1290
  %v1494 = vpack.c.b16 %v1293, %v1292
  %v1495 = vpack.c.b16 %v1295, %v1294
  %v1496 = vpack.c.b16 %v1297, %v1296
  %v1497 = vpack.c.b16 %v1299, %v1298
  %v1498 = vpack.c.b16 %v1301, %v1300
  %v1499 = vpack.c.b16 %v1303, %v1302
  %vm1696 = vcmask 523264
  %v1698 = vsel %vm1696, %v495, 0
  %1700 = vmatprep.subr.bf16.mxu0 0
  %1701 = vmatpush1.bf16.msra.mxu0 %v1304
  %1702 = vmatprep.subr.bf16.mxu0 0
  %1703 = vmatpush1.bf16.msra.mxu0 %v1305
  %1704 = vmatprep.subr.bf16.mxu0 0
  %1705 = vmatpush1.bf16.msra.mxu0 %v1306
  %1706 = vmatprep.subr.bf16.mxu0 0
  %1707 = vmatpush1.bf16.msra.mxu0 %v1307
  %1708 = vmatprep.subr.bf16.mxu0 0
  %1709 = vmatpush1.bf16.msra.mxu0 %v1308
  %1710 = vmatprep.subr.bf16.mxu0 0
  %1711 = vmatpush1.bf16.msra.mxu0 %v1309
  %1712 = vmatprep.subr.bf16.mxu0 0
  %1713 = vmatpush1.bf16.msra.mxu0 %v1310
  %1714 = vmatprep.subr.bf16.mxu0 0
  %1715 = vmatpush1.bf16.msra.mxu0 %v1311
  %1716 = vmatprep.subr.bf16.mxu0 0
  %1717 = vmatpush1.bf16.msra.mxu0 %v1312
  %1718 = vmatprep.subr.bf16.mxu0 0
  %1719 = vmatpush1.bf16.msra.mxu0 %v1313
  %1720 = vmatprep.subr.bf16.mxu0 0
  %1721 = vmatpush1.bf16.msra.mxu0 %v1314
  %1722 = vmatprep.subr.bf16.mxu0 0
  %1723 = vmatpush1.bf16.msra.mxu0 %v1315
  %1724 = vmatprep.subr.bf16.mxu0 0
  %1725 = vmatpush1.bf16.msra.mxu0 %v1316
  %1726 = vmatprep.subr.bf16.mxu0 0
  %1727 = vmatpush1.bf16.msra.mxu0 %v1317
  %1728 = vmatprep.subr.bf16.mxu0 0
  %1729 = vmatpush1.bf16.msra.mxu0 %v1318
  %1730 = vmatprep.subr.bf16.mxu0 0
  %1731 = vmatpush1.bf16.msra.mxu0 %v1319
  %1732 = vmatprep.mubr.bf16.mxu0 %v472
  %1733 = vmatmul.mubr.bf16.gmra.mrb[0].mxu0 %v471
  %v1734 = vpop.f32.mrb[0].mxu0
  %v1735 = vadd.f32 %v431, %v1734
  %v1736 = vpop.f32.mrb[0].mxu0
  %v1737 = vpop.f32.mrb[0].mxu0
  %v1738 = vpop.f32.mrb[0].mxu0
  %1739 = vdwg.mxu0
  %1740 = vmatprep.subr.bf16.mxu0 0
  %1741 = vmatpush1.bf16.msra.mxu0 %v1320
  %1742 = vmatprep.subr.bf16.mxu0 0
  %1743 = vmatpush1.bf16.msra.mxu0 %v1321
  %1744 = vmatprep.subr.bf16.mxu0 0
  %1745 = vmatpush1.bf16.msra.mxu0 %v1322
  %1746 = vmatprep.subr.bf16.mxu0 0
  %1747 = vmatpush1.bf16.msra.mxu0 %v1323
  %1748 = vmatprep.subr.bf16.mxu0 0
  %1749 = vmatpush1.bf16.msra.mxu0 %v1324
  %1750 = vmatprep.subr.bf16.mxu0 0
  %1751 = vmatpush1.bf16.msra.mxu0 %v1325
  %1752 = vmatprep.subr.bf16.mxu0 0
  %1753 = vmatpush1.bf16.msra.mxu0 %v1326
  %1754 = vmatprep.subr.bf16.mxu0 0
  %1755 = vmatpush1.bf16.msra.mxu0 %v1327
  %1756 = vmatprep.subr.bf16.mxu0 0
  %1757 = vmatpush1.bf16.msra.mxu0 %v1328
  %1758 = vmatprep.subr.bf16.mxu0 0
  %1759 = vmatpush1.bf16.msra.mxu0 %v1329
  %1760 = vmatprep.subr.bf16.mxu0 0
  %1761 = vmatpush1.bf16.msra.mxu0 %v1330
  %1762 = vmatprep.subr.bf16.mxu0 0
  %1763 = vmatpush1.bf16.msra.mxu0 %v1331
  %1764 = vmatprep.subr.bf16.mxu0 0
  %1765 = vmatpush1.bf16.msra.mxu0 %v1332
  %1766 = vmatprep.subr.bf16.mxu0 0
  %1767 = vmatpush1.bf16.msra.mxu0 %v1333
  %1768 = vmatprep.subr.bf16.mxu0 0
  %1769 = vmatpush1.bf16.msra.mxu0 %v1334
  %1770 = vmatprep.subr.bf16.mxu0 0
  %1771 = vmatpush1.bf16.msra.mxu0 %v1335
  %1772 = vmatprep.mubr.bf16.mxu0 %v474
  %1773 = vmatmul.mubr.bf16.gmra.mrb[0].mxu0 %v473
  %v1774 = vpop.f32.mrb[0].mxu0
  %v1775 = vadd.f32 %v1735, %v1774
  %v1776 = vpop.f32.mrb[0].mxu0
  %v1777 = vpop.f32.mrb[0].mxu0
  %v1778 = vpop.f32.mrb[0].mxu0
  %1779 = vdwg.mxu0
  %1780 = vmatprep.subr.bf16.mxu0 0
  %1781 = vmatpush1.bf16.msra.mxu0 %v1336
  %1782 = vmatprep.subr.bf16.mxu0 0
  %1783 = vmatpush1.bf16.msra.mxu0 %v1337
  %1784 = vmatprep.subr.bf16.mxu0 0
  %1785 = vmatpush1.bf16.msra.mxu0 %v1338
  %1786 = vmatprep.subr.bf16.mxu0 0
  %1787 = vmatpush1.bf16.msra.mxu0 %v1339
  %1788 = vmatprep.subr.bf16.mxu0 0
  %1789 = vmatpush1.bf16.msra.mxu0 %v1340
  %1790 = vmatprep.subr.bf16.mxu0 0
  %1791 = vmatpush1.bf16.msra.mxu0 %v1341
  %1792 = vmatprep.subr.bf16.mxu0 0
  %1793 = vmatpush1.bf16.msra.mxu0 %v1342
  %1794 = vmatprep.subr.bf16.mxu0 0
  %1795 = vmatpush1.bf16.msra.mxu0 %v1343
  %1796 = vmatprep.subr.bf16.mxu0 0
  %1797 = vmatpush1.bf16.msra.mxu0 %v1344
  %1798 = vmatprep.subr.bf16.mxu0 0
  %1799 = vmatpush1.bf16.msra.mxu0 %v1345
  %1800 = vmatprep.subr.bf16.mxu0 0
  %1801 = vmatpush1.bf16.msra.mxu0 %v1346
  %1802 = vmatprep.subr.bf16.mxu0 0
  %1803 = vmatpush1.bf16.msra.mxu0 %v1347
  %1804 = vmatprep.subr.bf16.mxu0 0
  %1805 = vmatpush1.bf16.msra.mxu0 %v1348
  %1806 = vmatprep.subr.bf16.mxu0 0
  %1807 = vmatpush1.bf16.msra.mxu0 %v1349
  %1808 = vmatprep.subr.bf16.mxu0 0
  %1809 = vmatpush1.bf16.msra.mxu0 %v1350
  %1810 = vmatprep.subr.bf16.mxu0 0
  %1811 = vmatpush1.bf16.msra.mxu0 %v1351
  %1812 = vmatprep.mubr.bf16.mxu0 %v476
  %1813 = vmatmul.mubr.bf16.gmra.mrb[0].mxu0 %v475
  %v1814 = vpop.f32.mrb[0].mxu0
  %v1815 = vadd.f32 %v1775, %v1814
  %v1816 = vpop.f32.mrb[0].mxu0
  %v1817 = vpop.f32.mrb[0].mxu0
  %v1818 = vpop.f32.mrb[0].mxu0
  %1819 = vdwg.mxu0
  %1820 = vmatprep.subr.bf16.mxu0 0
  %1821 = vmatpush1.bf16.msra.mxu0 %v1352
  %1822 = vmatprep.subr.bf16.mxu0 0
  %1823 = vmatpush1.bf16.msra.mxu0 %v1353
  %1824 = vmatprep.subr.bf16.mxu0 0
  %1825 = vmatpush1.bf16.msra.mxu0 %v1354
  %1826 = vmatprep.subr.bf16.mxu0 0
  %1827 = vmatpush1.bf16.msra.mxu0 %v1355
  %1828 = vmatprep.subr.bf16.mxu0 0
  %1829 = vmatpush1.bf16.msra.mxu0 %v1356
  %1830 = vmatprep.subr.bf16.mxu0 0
  %1831 = vmatpush1.bf16.msra.mxu0 %v1357
  %1832 = vmatprep.subr.bf16.mxu0 0
  %1833 = vmatpush1.bf16.msra.mxu0 %v1358
  %1834 = vmatprep.subr.bf16.mxu0 0
  %1835 = vmatpush1.bf16.msra.mxu0 %v1359
  %1836 = vmatprep.subr.bf16.mxu0 0
  %1837 = vmatpush1.bf16.msra.mxu0 %v1360
  %1838 = vmatprep.subr.bf16.mxu0 0
  %1839 = vmatpush1.bf16.msra.mxu0 %v1361
  %1840 = vmatprep.subr.bf16.mxu0 0
  %1841 = vmatpush1.bf16.msra.mxu0 %v1362
  %1842 = vmatprep.subr.bf16.mxu0 0
  %1843 = vmatpush1.bf16.msra.mxu0 %v1363
  %1844 = vmatprep.subr.bf16.mxu0 0
  %1845 = vmatpush1.bf16.msra.mxu0 %v1364
  %1846 = vmatprep.subr.bf16.mxu0 0
  %1847 = vmatpush1.bf16.msra.mxu0 %v1365
  %1848 = vmatprep.subr.bf16.mxu0 0
  %1849 = vmatpush1.bf16.msra.mxu0 %v1366
  %1850 = vmatprep.subr.bf16.mxu0 0
  %1851 = vmatpush1.bf16.msra.mxu0 %v1367
  %1852 = vmatprep.mubr.bf16.mxu0 %v478
  %1853 = vmatmul.mubr.bf16.gmra.mrb[0].mxu0 %v477
  %v1854 = vpop.f32.mrb[0].mxu0
  %v1855 = vadd.f32 %v1815, %v1854
  %v1856 = vpop.f32.mrb[0].mxu0
  %v1857 = vpop.f32.mrb[0].mxu0
  %v1858 = vpop.f32.mrb[0].mxu0
  %1859 = vdwg.mxu0
  %1860 = vmatprep.subr.bf16.mxu0 0
  %1861 = vmatpush1.bf16.msra.mxu0 %v1368
  %1862 = vmatprep.subr.bf16.mxu0 0
  %1863 = vmatpush1.bf16.msra.mxu0 %v1369
  %1864 = vmatprep.subr.bf16.mxu0 0
  %1865 = vmatpush1.bf16.msra.mxu0 %v1370
  %1866 = vmatprep.subr.bf16.mxu0 0
  %1867 = vmatpush1.bf16.msra.mxu0 %v1371
  %1868 = vmatprep.subr.bf16.mxu0 0
  %1869 = vmatpush1.bf16.msra.mxu0 %v1372
  %1870 = vmatprep.subr.bf16.mxu0 0
  %1871 = vmatpush1.bf16.msra.mxu0 %v1373
  %1872 = vmatprep.subr.bf16.mxu0 0
  %1873 = vmatpush1.bf16.msra.mxu0 %v1374
  %1874 = vmatprep.subr.bf16.mxu0 0
  %1875 = vmatpush1.bf16.msra.mxu0 %v1375
  %1876 = vmatprep.subr.bf16.mxu0 0
  %1877 = vmatpush1.bf16.msra.mxu0 %v1376
  %1878 = vmatprep.subr.bf16.mxu0 0
  %1879 = vmatpush1.bf16.msra.mxu0 %v1377
  %1880 = vmatprep.subr.bf16.mxu0 0
  %1881 = vmatpush1.bf16.msra.mxu0 %v1378
  %1882 = vmatprep.subr.bf16.mxu0 0
  %1883 = vmatpush1.bf16.msra.mxu0 %v1379
  %1884 = vmatprep.subr.bf16.mxu0 0
  %1885 = vmatpush1.bf16.msra.mxu0 %v1380
  %1886 = vmatprep.subr.bf16.mxu0 0
  %1887 = vmatpush1.bf16.msra.mxu0 %v1381
  %1888 = vmatprep.subr.bf16.mxu0 0
  %1889 = vmatpush1.bf16.msra.mxu0 %v1382
  %1890 = vmatprep.subr.bf16.mxu0 0
  %1891 = vmatpush1.bf16.msra.mxu0 %v1383
  %1892 = vmatprep.mubr.bf16.mxu0 %v480
  %1893 = vmatmul.mubr.bf16.gmra.mrb[0].mxu0 %v479
  %v1894 = vpop.f32.mrb[0].mxu0
  %v1895 = vadd.f32 %v1855, %v1894
  %v1896 = vpop.f32.mrb[0].mxu0
  %v1897 = vpop.f32.mrb[0].mxu0
  %v1898 = vpop.f32.mrb[0].mxu0
  %1899 = vdwg.mxu0
  %1900 = vmatprep.subr.bf16.mxu0 0
  %1901 = vmatpush1.bf16.msra.mxu0 %v1384
  %1902 = vmatprep.subr.bf16.mxu0 0
  %1903 = vmatpush1.bf16.msra.mxu0 %v1385
  %1904 = vmatprep.subr.bf16.mxu0 0
  %1905 = vmatpush1.bf16.msra.mxu0 %v1386
  %1906 = vmatprep.subr.bf16.mxu0 0
  %1907 = vmatpush1.bf16.msra.mxu0 %v1387
  %1908 = vmatprep.subr.bf16.mxu0 0
  %1909 = vmatpush1.bf16.msra.mxu0 %v1388
  %1910 = vmatprep.subr.bf16.mxu0 0
  %1911 = vmatpush1.bf16.msra.mxu0 %v1389
  %1912 = vmatprep.subr.bf16.mxu0 0
  %1913 = vmatpush1.bf16.msra.mxu0 %v1390
  %1914 = vmatprep.subr.bf16.mxu0 0
  %1915 = vmatpush1.bf16.msra.mxu0 %v1391
  %1916 = vmatprep.subr.bf16.mxu0 0
  %1917 = vmatpush1.bf16.msra.mxu0 %v1392
  %1918 = vmatprep.subr.bf16.mxu0 0
  %1919 = vmatpush1.bf16.msra.mxu0 %v1393
  %1920 = vmatprep.subr.bf16.mxu0 0
  %1921 = vmatpush1.bf16.msra.mxu0 %v1394
  %1922 = vmatprep.subr.bf16.mxu0 0
  %1923 = vmatpush1.bf16.msra.mxu0 %v1395
  %1924 = vmatprep.subr.bf16.mxu0 0
  %1925 = vmatpush1.bf16.msra.mxu0 %v1396
  %1926 = vmatprep.subr.bf16.mxu0 0
  %1927 = vmatpush1.bf16.msra.mxu0 %v1397
  %1928 = vmatprep.subr.bf16.mxu0 0
  %1929 = vmatpush1.bf16.msra.mxu0 %v1398
  %1930 = vmatprep.subr.bf16.mxu0 0
  %1931 = vmatpush1.bf16.msra.mxu0 %v1399
  %1932 = vmatprep.mubr.bf16.mxu0 %v482
  %1933 = vmatmul.mubr.bf16.gmra.mrb[0].mxu0 %v481
  %v1934 = vpop.f32.mrb[0].mxu0
  %v1935 = vadd.f32 %v1895, %v1934
  %v1936 = vpop.f32.mrb[0].mxu0
  %v1937 = vpop.f32.mrb[0].mxu0
  %v1938 = vpop.f32.mrb[0].mxu0
  %1939 = vdwg.mxu0
  %1940 = vmatprep.subr.bf16.mxu0 0
  %1941 = vmatpush1.bf16.msra.mxu0 %v1400
  %1942 = vmatprep.subr.bf16.mxu0 0
  %1943 = vmatpush1.bf16.msra.mxu0 %v1401
  %1944 = vmatprep.subr.bf16.mxu0 0
  %1945 = vmatpush1.bf16.msra.mxu0 %v1402
  %1946 = vmatprep.subr.bf16.mxu0 0
  %1947 = vmatpush1.bf16.msra.mxu0 %v1403
  %1948 = vmatprep.subr.bf16.mxu0 0
  %1949 = vmatpush1.bf16.msra.mxu0 %v1404
  %1950 = vmatprep.subr.bf16.mxu0 0
  %1951 = vmatpush1.bf16.msra.mxu0 %v1405
  %1952 = vmatprep.subr.bf16.mxu0 0
  %1953 = vmatpush1.bf16.msra.mxu0 %v1406
  %1954 = vmatprep.subr.bf16.mxu0 0
  %1955 = vmatpush1.bf16.msra.mxu0 %v1407
  %1956 = vmatprep.subr.bf16.mxu0 0
  %1957 = vmatpush1.bf16.msra.mxu0 %v1408
  %1958 = vmatprep.subr.bf16.mxu0 0
  %1959 = vmatpush1.bf16.msra.mxu0 %v1409
  %1960 = vmatprep.subr.bf16.mxu0 0
  %1961 = vmatpush1.bf16.msra.mxu0 %v1410
  %1962 = vmatprep.subr.bf16.mxu0 0
  %1963 = vmatpush1.bf16.msra.mxu0 %v1411
  %1964 = vmatprep.subr.bf16.mxu0 0
  %1965 = vmatpush1.bf16.msra.mxu0 %v1412
  %1966 = vmatprep.subr.bf16.mxu0 0
  %1967 = vmatpush1.bf16.msra.mxu0 %v1413
  %1968 = vmatprep.subr.bf16.mxu0 0
  %1969 = vmatpush1.bf16.msra.mxu0 %v1414
  %1970 = vmatprep.subr.bf16.mxu0 0
  %1971 = vmatpush1.bf16.msra.mxu0 %v1415
  %1972 = vmatprep.mubr.bf16.mxu0 %v484
  %1973 = vmatmul.mubr.bf16.gmra.mrb[0].mxu0 %v483
  %v1974 = vpop.f32.mrb[0].mxu0
  %v1975 = vadd.f32 %v1935, %v1974
  %v1976 = vpop.f32.mrb[0].mxu0
  %v1977 = vpop.f32.mrb[0].mxu0
  %v1978 = vpop.f32.mrb[0].mxu0
  %1979 = vdwg.mxu0
  %1980 = vmatprep.subr.bf16.mxu0 0
  %1981 = vmatpush1.bf16.msra.mxu0 %v1416
  %1982 = vmatprep.subr.bf16.mxu0 0
  %1983 = vmatpush1.bf16.msra.mxu0 %v1417
  %1984 = vmatprep.subr.bf16.mxu0 0
  %1985 = vmatpush1.bf16.msra.mxu0 %v1418
  %1986 = vmatprep.subr.bf16.mxu0 0
  %1987 = vmatpush1.bf16.msra.mxu0 %v1419
  %1988 = vmatprep.subr.bf16.mxu0 0
  %1989 = vmatpush1.bf16.msra.mxu0 %v1420
  %1990 = vmatprep.subr.bf16.mxu0 0
  %1991 = vmatpush1.bf16.msra.mxu0 %v1421
  %1992 = vmatprep.subr.bf16.mxu0 0
  %1993 = vmatpush1.bf16.msra.mxu0 %v1422
  %1994 = vmatprep.subr.bf16.mxu0 0
  %1995 = vmatpush1.bf16.msra.mxu0 %v1423
  %1996 = vmatprep.subr.bf16.mxu0 0
  %1997 = vmatpush1.bf16.msra.mxu0 %v1424
  %1998 = vmatprep.subr.bf16.mxu0 0
  %1999 = vmatpush1.bf16.msra.mxu0 %v1425
  %2000 = vmatprep.subr.bf16.mxu0 0
  %2001 = vmatpush1.bf16.msra.mxu0 %v1426
  %2002 = vmatprep.subr.bf16.mxu0 0
  %2003 = vmatpush1.bf16.msra.mxu0 %v1427
  %2004 = vmatprep.subr.bf16.mxu0 0
  %2005 = vmatpush1.bf16.msra.mxu0 %v1428
  %2006 = vmatprep.subr.bf16.mxu0 0
  %2007 = vmatpush1.bf16.msra.mxu0 %v1429
  %2008 = vmatprep.subr.bf16.mxu0 0
  %2009 = vmatpush1.bf16.msra.mxu0 %v1430
  %2010 = vmatprep.subr.bf16.mxu0 0
  %2011 = vmatpush1.bf16.msra.mxu0 %v1431
  %2012 = vmatprep.mubr.bf16.mxu0 %v486
  %2013 = vmatmul.mubr.bf16.gmra.mrb[0].mxu0 %v485
  %v2014 = vpop.f32.mrb[0].mxu0
  %v2015 = vadd.f32 %v1975, %v2014
  %v2016 = vpop.f32.mrb[0].mxu0
  %v2017 = vpop.f32.mrb[0].mxu0
  %v2018 = vpop.f32.mrb[0].mxu0
  %2019 = vdwg.mxu0
  %2020 = vmatprep.subr.bf16.mxu0 0
  %2021 = vmatpush1.bf16.msra.mxu0 %v1432
  %2022 = vmatprep.subr.bf16.mxu0 0
  %2023 = vmatpush1.bf16.msra.mxu0 %v1433
  %2024 = vmatprep.subr.bf16.mxu0 0
  %2025 = vmatpush1.bf16.msra.mxu0 %v1434
  %2026 = vmatprep.subr.bf16.mxu0 0
  %2027 = vmatpush1.bf16.msra.mxu0 %v1435
  %2028 = vmatprep.subr.bf16.mxu0 0
  %2029 = vmatpush1.bf16.msra.mxu0 %v1436
  %2030 = vmatprep.subr.bf16.mxu0 0
  %2031 = vmatpush1.bf16.msra.mxu0 %v1437
  %2032 = vmatprep.subr.bf16.mxu0 0
  %2033 = vmatpush1.bf16.msra.mxu0 %v1438
  %2034 = vmatprep.subr.bf16.mxu0 0
  %2035 = vmatpush1.bf16.msra.mxu0 %v1439
  %2036 = vmatprep.subr.bf16.mxu0 0
  %2037 = vmatpush1.bf16.msra.mxu0 %v1440
  %2038 = vmatprep.subr.bf16.mxu0 0
  %2039 = vmatpush1.bf16.msra.mxu0 %v1441
  %2040 = vmatprep.subr.bf16.mxu0 0
  %2041 = vmatpush1.bf16.msra.mxu0 %v1442
  %2042 = vmatprep.subr.bf16.mxu0 0
  %2043 = vmatpush1.bf16.msra.mxu0 %v1443
  %2044 = vmatprep.subr.bf16.mxu0 0
  %2045 = vmatpush1.bf16.msra.mxu0 %v1444
  %2046 = vmatprep.subr.bf16.mxu0 0
  %2047 = vmatpush1.bf16.msra.mxu0 %v1445
  %2048 = vmatprep.subr.bf16.mxu0 0
  %2049 = vmatpush1.bf16.msra.mxu0 %v1446
  %2050 = vmatprep.subr.bf16.mxu0 0
  %2051 = vmatpush1.bf16.msra.mxu0 %v1447
  %2052 = vmatprep.mubr.bf16.mxu0 %v488
  %2053 = vmatmul.mubr.bf16.gmra.mrb[0].mxu0 %v487
  %v2054 = vpop.f32.mrb[0].mxu0
  %v2055 = vadd.f32 %v2015, %v2054
  %v2056 = vpop.f32.mrb[0].mxu0
  %v2057 = vpop.f32.mrb[0].mxu0
  %v2058 = vpop.f32.mrb[0].mxu0
  %2059 = vdwg.mxu0
  %2060 = vmatprep.subr.bf16.mxu0 0
  %2061 = vmatpush1.bf16.msra.mxu0 %v1448
  %2062 = vmatprep.subr.bf16.mxu0 0
  %2063 = vmatpush1.bf16.msra.mxu0 %v1449
  %2064 = vmatprep.subr.bf16.mxu0 0
  %2065 = vmatpush1.bf16.msra.mxu0 %v1450
  %2066 = vmatprep.subr.bf16.mxu0 0
  %2067 = vmatpush1.bf16.msra.mxu0 %v1451
  %2068 = vmatprep.subr.bf16.mxu0 0
  %2069 = vmatpush1.bf16.msra.mxu0 %v1452
  %2070 = vmatprep.subr.bf16.mxu0 0
  %2071 = vmatpush1.bf16.msra.mxu0 %v1453
  %2072 = vmatprep.subr.bf16.mxu0 0
  %2073 = vmatpush1.bf16.msra.mxu0 %v1454
  %2074 = vmatprep.subr.bf16.mxu0 0
  %2075 = vmatpush1.bf16.msra.mxu0 %v1455
  %2076 = vmatprep.subr.bf16.mxu0 0
  %2077 = vmatpush1.bf16.msra.mxu0 %v1456
  %2078 = vmatprep.subr.bf16.mxu0 0
  %2079 = vmatpush1.bf16.msra.mxu0 %v1457
  %2080 = vmatprep.subr.bf16.mxu0 0
  %2081 = vmatpush1.bf16.msra.mxu0 %v1458
  %2082 = vmatprep.subr.bf16.mxu0 0
  %2083 = vmatpush1.bf16.msra.mxu0 %v1459
  %2084 = vmatprep.subr.bf16.mxu0 0
  %2085 = vmatpush1.bf16.msra.mxu0 %v1460
  %2086 = vmatprep.subr.bf16.mxu0 0
  %2087 = vmatpush1.bf16.msra.mxu0 %v1461
  %2088 = vmatprep.subr.bf16.mxu0 0
  %2089 = vmatpush1.bf16.msra.mxu0 %v1462
  %2090 = vmatprep.subr.bf16.mxu0 0
  %2091 = vmatpush1.bf16.msra.mxu0 %v1463
  %2092 = vmatprep.mubr.bf16.mxu0 %v490
  %2093 = vmatmul.mubr.bf16.gmra.mrb[0].mxu0 %v489
  %v2094 = vpop.f32.mrb[0].mxu0
  %v2095 = vadd.f32 %v2055, %v2094
  %v2096 = vpop.f32.mrb[0].mxu0
  %v2097 = vpop.f32.mrb[0].mxu0
  %v2098 = vpop.f32.mrb[0].mxu0
  %2099 = vdwg.mxu0
  %2100 = vmatprep.subr.bf16.mxu0 0
  %2101 = vmatpush1.bf16.msra.mxu0 %v1464
  %2102 = vmatprep.subr.bf16.mxu0 0
  %2103 = vmatpush1.bf16.msra.mxu0 %v1465
  %2104 = vmatprep.subr.bf16.mxu0 0
  %2105 = vmatpush1.bf16.msra.mxu0 %v1466
  %2106 = vmatprep.subr.bf16.mxu0 0
  %2107 = vmatpush1.bf16.msra.mxu0 %v1467
  %2108 = vmatprep.subr.bf16.mxu0 0
  %2109 = vmatpush1.bf16.msra.mxu0 %v1468
  %2110 = vmatprep.subr.bf16.mxu0 0
  %2111 = vmatpush1.bf16.msra.mxu0 %v1469
  %2112 = vmatprep.subr.bf16.mxu0 0
  %2113 = vmatpush1.bf16.msra.mxu0 %v1470
  %2114 = vmatprep.subr.bf16.mxu0 0
  %2115 = vmatpush1.bf16.msra.mxu0 %v1471
  %2116 = vmatprep.subr.bf16.mxu0 0
  %2117 = vmatpush1.bf16.msra.mxu0 %v1472
  %2118 = vmatprep.subr.bf16.mxu0 0
  %2119 = vmatpush1.bf16.msra.mxu0 %v1473
  %2120 = vmatprep.subr.bf16.mxu0 0
  %2121 = vmatpush1.bf16.msra.mxu0 %v1474
  %2122 = vmatprep.subr.bf16.mxu0 0
  %2123 = vmatpush1.bf16.msra.mxu0 %v1475
  %2124 = vmatprep.subr.bf16.mxu0 0
  %2125 = vmatpush1.bf16.msra.mxu0 %v1476
  %2126 = vmatprep.subr.bf16.mxu0 0
  %2127 = vmatpush1.bf16.msra.mxu0 %v1477
  %2128 = vmatprep.subr.bf16.mxu0 0
  %2129 = vmatpush1.bf16.msra.mxu0 %v1478
  %2130 = vmatprep.subr.bf16.mxu0 0
  %2131 = vmatpush1.bf16.msra.mxu0 %v1479
  %2132 = vmatprep.mubr.bf16.mxu0 %v492
  %2133 = vmatmul.mubr.bf16.gmra.mrb[0].mxu0 %v491
  %v2134 = vpop.f32.mrb[0].mxu0
  %v2135 = vadd.f32 %v2095, %v2134
  %v2136 = vpop.f32.mrb[0].mxu0
  %v2137 = vpop.f32.mrb[0].mxu0
  %v2138 = vpop.f32.mrb[0].mxu0
  %2139 = vdwg.mxu0
  %2140 = vmatprep.subr.bf16.mxu0 0
  %2141 = vmatpush1.bf16.msra.mxu0 %v1480
  %2142 = vmatprep.subr.bf16.mxu0 0
  %2143 = vmatpush1.bf16.msra.mxu0 %v1481
  %2144 = vmatprep.subr.bf16.mxu0 0
  %2145 = vmatpush1.bf16.msra.mxu0 %v1482
  %2146 = vmatprep.subr.bf16.mxu0 0
  %2147 = vmatpush1.bf16.msra.mxu0 %v1483
  %2148 = vmatprep.subr.bf16.mxu0 0
  %2149 = vmatpush1.bf16.msra.mxu0 %v1484
  %2150 = vmatprep.subr.bf16.mxu0 0
  %2151 = vmatpush1.bf16.msra.mxu0 %v1485
  %2152 = vmatprep.subr.bf16.mxu0 0
  %2153 = vmatpush1.bf16.msra.mxu0 %v1486
  %2154 = vmatprep.subr.bf16.mxu0 0
  %2155 = vmatpush1.bf16.msra.mxu0 %v1487
  %2156 = vmatprep.subr.bf16.mxu0 0
  %2157 = vmatpush1.bf16.msra.mxu0 %v1488
  %2158 = vmatprep.subr.bf16.mxu0 0
  %2159 = vmatpush1.bf16.msra.mxu0 %v1489
  %2160 = vmatprep.subr.bf16.mxu0 0
  %2161 = vmatpush1.bf16.msra.mxu0 %v1490
  %2162 = vmatprep.subr.bf16.mxu0 0
  %2163 = vmatpush1.bf16.msra.mxu0 %v1491
  %2164 = vmatprep.subr.bf16.mxu0 0
  %2165 = vmatpush1.bf16.msra.mxu0 %v1492
  %2166 = vmatprep.subr.bf16.mxu0 0
  %2167 = vmatpush1.bf16.msra.mxu0 %v1493
  %2168 = vmatprep.subr.bf16.mxu0 0
  %2169 = vmatpush1.bf16.msra.mxu0 %v1494
  %2170 = vmatprep.subr.bf16.mxu0 0
  %2171 = vmatpush1.bf16.msra.mxu0 %v1495
  %2172 = vmatprep.mubr.bf16.mxu0 %v494
  %2173 = vmatmul.mubr.bf16.gmra.mrb[0].mxu0 %v493
  %v2174 = vpop.f32.mrb[0].mxu0
  %v2175 = vadd.f32 %v2135, %v2174
  %v2176 = vpop.f32.mrb[0].mxu0
  %v2177 = vpop.f32.mrb[0].mxu0
  %v2178 = vpop.f32.mrb[0].mxu0
  %2179 = vdwg.mxu0
  %2180 = vmatprep.subr.bf16.mxu0 0
  %2181 = vmatpush1.bf16.msra.mxu0 %v1496
  %2182 = vmatprep.subr.bf16.mxu0 0
  %2183 = vmatpush1.bf16.msra.mxu0 %v1497
  %2184 = vmatprep.subr.bf16.mxu0 0
  %2185 = vmatpush1.bf16.msra.mxu0 %v1498
  %2186 = vmatprep.subr.bf16.mxu0 0
  %2187 = vmatpush1.bf16.msra.mxu0 %v1499
  %2188 = vmatprep.subr.bf16.mxu0 0
  %2189 = vmatpush1.bf16.msra.mxu0 0
  %2190 = vmatprep.subr.bf16.mxu0 0
  %2191 = vmatpush1.bf16.msra.mxu0 0
  %2192 = vmatprep.subr.bf16.mxu0 0
  %2193 = vmatpush1.bf16.msra.mxu0 0
  %2194 = vmatprep.subr.bf16.mxu0 0
  %2195 = vmatpush1.bf16.msra.mxu0 0
  %2196 = vmatprep.subr.bf16.mxu0 0
  %2197 = vmatpush1.bf16.msra.mxu0 0
  %2198 = vmatprep.subr.bf16.mxu0 0
  %2199 = vmatpush1.bf16.msra.mxu0 0
  %2200 = vmatprep.subr.bf16.mxu0 0
  %2201 = vmatpush1.bf16.msra.mxu0 0
  %2202 = vmatprep.subr.bf16.mxu0 0
  %2203 = vmatpush1.bf16.msra.mxu0 0
  %2204 = vmatprep.subr.bf16.mxu0 0
  %2205 = vmatpush1.bf16.msra.mxu0 0
  %2206 = vmatprep.subr.bf16.mxu0 0
  %2207 = vmatpush1.bf16.msra.mxu0 0
  %2208 = vmatprep.subr.bf16.mxu0 0
  %2209 = vmatpush1.bf16.msra.mxu0 0
  %2210 = vmatprep.subr.bf16.mxu0 0
  %2211 = vmatpush1.bf16.msra.mxu0 0
  %2212 = vmatprep.mubr.bf16.mxu0 0
  %2213 = vmatmul.mubr.bf16.gmra.mrb[0].mxu0 %v1698
  %v2214 = vpop.f32.mrb[0].mxu0
  %v2215 = vadd.f32 %v2175, %v2214
  %v2216 = vpop.f32.mrb[0].mxu0
  %v2217 = vpop.f32.mrb[0].mxu0
  %v2218 = vpop.f32.mrb[0].mxu0
  %2219 = vdwg.mxu0
  %v2220 = vmax.f32 %v2215, 0.0
  %v2221 = vpack.c.bf16 %v2220, %v2220
  %v2222 = vld [vmem:[%s3] sm:$0xf]
  %v2223 = vld [vmem:[%s3 + $0x4] sm:$0xf]
  %v2224 = vld [vmem:[%s3 + $0x8] sm:$0xf]
  %v2225 = vld [vmem:[%s3 + $0xc] sm:$0xf]
  %v2226 = vld [vmem:[%s3 + $0x10] sm:$0xf]
  %v2227 = vld [vmem:[%s3 + $0x14] sm:$0xf]
  %v2228 = vld [vmem:[%s3 + $0x18] sm:$0xf]
  %v2229 = vld [vmem:[%s3 + $0x1c] sm:$0xf]
  %v2230 = vld [vmem:[%s3 + $0x20] sm:$0xf]
  %v2231 = vld [vmem:[%s3 + $0x24] sm:$0xf]
  %v2232 = vld [vmem:[%s3 + $0x28] sm:$0xf]
  %v2233 = vld [vmem:[%s3 + $0x2c] sm:$0xf]
  %v2234 = vld [vmem:[%s3 + $0x30] sm:$0xf]
  %v2235 = vld [vmem:[%s3 + $0x34] sm:$0xf]
  %v2236 = vld [vmem:[%s3 + $0x38] sm:$0xf]
  %v2237 = vld [vmem:[%s3 + $0x3c] sm:$0xf]
  %v2238 = vld [vmem:[%s4] sm:$0x1]
  %v2240 = vlaneseq
  %v2241 = vshrl.u32 %v2240, 7
  %v2242 = vsub.s32 0, %v2241
  %v2243 = vrot.slane %v2238, %v2242
  %v2261 = vunpack.c.l.b16 %v2222
  %v2262 = vunpack.c.l.b16 %v2223
  %v2263 = vunpack.c.l.b16 %v2224
  %v2264 = vunpack.c.l.b16 %v2225
  %v2265 = vunpack.c.l.b16 %v2226
  %v2266 = vunpack.c.l.b16 %v2227
  %v2267 = vunpack.c.l.b16 %v2228
  %v2268 = vunpack.c.l.b16 %v2229
  %v2269 = vunpack.c.l.b16 %v2230
  %v2270 = vunpack.c.l.b16 %v2231
  %v2271 = vunpack.c.l.b16 %v2232
  %v2272 = vunpack.c.l.b16 %v2233
  %v2273 = vunpack.c.l.b16 %v2234
  %v2274 = vunpack.c.l.b16 %v2235
  %v2275 = vunpack.c.l.b16 %v2236
  %v2276 = vunpack.c.l.b16 %v2237
  %v2277 = vpack.c.b16 %v2262, %v2261
  %v2278 = vpack.c.b16 %v2264, %v2263
  %v2279 = vpack.c.b16 %v2266, %v2265
  %v2280 = vpack.c.b16 %v2268, %v2267
  %v2281 = vpack.c.b16 %v2270, %v2269
  %v2282 = vpack.c.b16 %v2272, %v2271
  %v2283 = vpack.c.b16 %v2274, %v2273
  %v2284 = vpack.c.b16 %v2276, %v2275
  %2293 = vmatprep.subr.bf16.mxu0 0
  %2294 = vmatpush1.bf16.msra.mxu0 %v2277
  %2295 = vmatprep.subr.bf16.mxu0 0
  %2296 = vmatpush1.bf16.msra.mxu0 %v2278
  %2297 = vmatprep.subr.bf16.mxu0 0
  %2298 = vmatpush1.bf16.msra.mxu0 %v2279
  %2299 = vmatprep.subr.bf16.mxu0 0
  %2300 = vmatpush1.bf16.msra.mxu0 %v2280
  %2301 = vmatprep.subr.bf16.mxu0 0
  %2302 = vmatpush1.bf16.msra.mxu0 %v2281
  %2303 = vmatprep.subr.bf16.mxu0 0
  %2304 = vmatpush1.bf16.msra.mxu0 %v2282
  %2305 = vmatprep.subr.bf16.mxu0 0
  %2306 = vmatpush1.bf16.msra.mxu0 %v2283
  %2307 = vmatprep.subr.bf16.mxu0 0
  %2308 = vmatpush1.bf16.msra.mxu0 %v2284
  %2309 = vmatprep.subr.bf16.mxu0 0
  %2310 = vmatpush1.bf16.msra.mxu0 0
  %2311 = vmatprep.subr.bf16.mxu0 0
  %2312 = vmatpush1.bf16.msra.mxu0 0
  %2313 = vmatprep.subr.bf16.mxu0 0
  %2314 = vmatpush1.bf16.msra.mxu0 0
  %2315 = vmatprep.subr.bf16.mxu0 0
  %2316 = vmatpush1.bf16.msra.mxu0 0
  %2317 = vmatprep.subr.bf16.mxu0 0
  %2318 = vmatpush1.bf16.msra.mxu0 0
  %2319 = vmatprep.subr.bf16.mxu0 0
  %2320 = vmatpush1.bf16.msra.mxu0 0
  %2321 = vmatprep.subr.bf16.mxu0 0
  %2322 = vmatpush1.bf16.msra.mxu0 0
  %2323 = vmatprep.subr.bf16.mxu0 0
  %2324 = vmatpush1.bf16.msra.mxu0 0
  %2325 = vmatprep.mubr.bf16.mxu0 0
  %2326 = vmatmul.mubr.bf16.gmra.mrb[0].mxu0 %v2221
  %v2327 = vpop.f32.mrb[0].mxu0
  %v2328 = vadd.f32 %v2243, %v2327
  %v2329 = vpop.f32.mrb[0].mxu0
  %v2330 = vpop.f32.mrb[0].mxu0
  %v2331 = vpop.f32.mrb[0].mxu0
  %2332 = vdwg.mxu0
  %vm2333 = vcmask 80896
  %2334 = vst.msk [vmem:[%s5] sm:$0xff] %vm2333, %v2328
  // Predicated region
  $region22: #{cnn_forward.5} parent=0 // pred_check
    _
  $region23: #{cnn_forward.5} parent=0 // pred_check_branch
    %2336 = sbr.rel (0) target = $region25
  $region24: #{cnn_forward.5} parent=0 // pred_region
    _
  $region25: #{cnn_forward.5} parent=0 // pred_fallthru
    _
  // Predicated region
  $region26: #{cnn_forward.5} parent=0 // pred_check
    _
  $region27: #{cnn_forward.5} parent=0 // pred_check_branch
    %2338 = sbr.rel (0) target = $region29
  $region28: #{cnn_forward.5} parent=0 // pred_region
    _
  $region29: #{cnn_forward.5} parent=0 // pred_fallthru
    _

</llo_original>
